<compile_context>
chip_gen: v7x
topology: tpu7x:2x2x1
jax: 0.10.0
libtpu: 0.0.40
codegen_flags: <defaults>
</compile_context>

<pallas_src>
import functools
import math

import jax
import jax.numpy as jnp
from jax import lax
from jax.experimental import pallas as pl
from jax.experimental.pallas import tpu as pltpu


# --------------------------------------------------------------------------
# Kernel
# --------------------------------------------------------------------------
def _layer_norm(x, g, b, eps=1e-5):
    mu = jnp.mean(x, axis=-1, keepdims=True)
    var = jnp.mean((x - mu) ** 2, axis=-1, keepdims=True)
    return (x - mu) * lax.rsqrt(var + eps) * g + b


def make_fused_kernel(nhead, num_layers, batch_tile):
    """One encoder layer (+ PE at l==0, + decoder at l==L-1) for one batch tile."""
    Bt = batch_tile

    def kernel(x_ref, pe_ref, wqkv_ref, bqkv_ref, wo_ref, vecs_ref,
               w1_ref, b1_ref, w2_ref, dec_wt_ref, dec_b_ref,
               o_ref, x_scr):
        layer = pl.program_id(1)
        S = x_ref.shape[1]
        D = x_ref.shape[2]
        dh = D // nhead
        N = Bt * S

        # ---- first layer only: load this batch tile and add positional encoding
        @pl.when(layer == 0)
        def _():
            x_scr[...] = x_ref[...] + pe_ref[...]          # (Bt, S, D) f32

        # All big matmuls operate on the flattened (Bt*S, D) row block.
        xf = x_scr[...].reshape(N, D)                       # f32
        xf_b = xf.astype(jnp.bfloat16)
        vecs = vecs_ref[0]                                  # (6, D): bo, g1, b1, b2, g2, b2ln

        # ---- multi-head self-attention (per-head weights: no lane slicing,
        #      no concat; score scale already folded into the Q weights)
        attn = jnp.zeros((N, D), jnp.float32)
        for h in range(nhead):
            qh = jnp.dot(xf_b, wqkv_ref[0, h],
                         preferred_element_type=jnp.float32) + bqkv_ref[0, h]
            kh = jnp.dot(xf_b, wqkv_ref[0, nhead + h],
                         preferred_element_type=jnp.float32) + bqkv_ref[0, nhead + h]
            vh = jnp.dot(xf_b, wqkv_ref[0, 2 * nhead + h],
                         preferred_element_type=jnp.float32) + bqkv_ref[0, 2 * nhead + h]
            qh = qh.reshape(Bt, S, dh).astype(jnp.bfloat16)
            kh = kh.reshape(Bt, S, dh).astype(jnp.bfloat16)
            vh = vh.reshape(Bt, S, dh).astype(jnp.bfloat16)

            s = jnp.einsum('bqe,bke->bqk', qh, kh,
                           preferred_element_type=jnp.float32)          # (Bt,S,S)
            s = s - jnp.max(s, axis=-1, keepdims=True)
            p = jnp.exp(s)
            p = p / jnp.sum(p, axis=-1, keepdims=True)                  # exact
            ctx = jnp.einsum('bqk,bke->bqe', p.astype(jnp.bfloat16), vh,
                             preferred_element_type=jnp.float32)        # (Bt,S,dh)
            # Per-head slice of the output projection, summed over heads
            # (== concat(ctx_h) @ Wo).
            attn = attn + jnp.dot(ctx.reshape(N, dh).astype(jnp.bfloat16),
                                  wo_ref[0, h],
                                  preferred_element_type=jnp.float32)
        attn = attn + vecs[0:1, :]

        # ---- residual + post-norm 1 (eps=1e-5 matches PyTorch)
        h1 = _layer_norm(xf + attn, vecs[1:2, :], vecs[2:3, :])

        # ---- ReLU feed-forward over all Bt*S rows
        ff = jnp.dot(h1.astype(jnp.bfloat16), w1_ref[0],
                     preferred_element_type=jnp.float32) + b1_ref[0]
        ff = jnp.maximum(ff, 0.0)
        ff = jnp.dot(ff.astype(jnp.bfloat16), w2_ref[0],
                     preferred_element_type=jnp.float32) + vecs[3:4, :]

        # ---- residual + post-norm 2; carry activation to next layer
        xo = _layer_norm(h1 + ff, vecs[4:5, :], vecs[5:6, :])           # (N, D)
        x_scr[...] = xo.reshape(Bt, S, D)

        # ---- last layer only: decoder Linear, written transposed (O, S) per row,
        #      so the module's final permute(1, 2, 0) happens for free.
        @pl.when(layer == num_layers - 1)
        def _():
            xo3 = xo.reshape(Bt, S, D).astype(jnp.bfloat16)
            for b in range(Bt):
                ot = lax.dot_general(dec_wt_ref[...], xo3[b],
                                     (((1,), (1,)), ((), ())),
                                     preferred_element_type=jnp.float32)
                o_ref[b] = ot + dec_b_ref[...]

    return kernel


# --------------------------------------------------------------------------
# Wrapper (single pallas_call; grid = (batch_tiles, num_layers))
# --------------------------------------------------------------------------
def pretrained_transformerxl_block_forward(src, params, steps_concat, nhead,
                                           batch_tile=None):
    """src: (B, n_feature, seq_len) -> (B, output_size, seq_len // steps_concat)."""
    B, NF, Lseq = src.shape
    S = Lseq // steps_concat
    D = NF * steps_concat
    assert D % nhead == 0
    num_layers = params['wqkv'].shape[0]
    O = params['dec_wt'].shape[0]

    # TODO(synk): the (B, NF, L) -> (B, S, D) concat-reshape stays a tiny XLA op
    # in the wrapper; fusing it in-kernel needs an in-VMEM minor-dim transpose
    # whose Mosaic lowering is shape-restricted at these (12, 16) sizes.
    x = jnp.transpose(src, (0, 2, 1)).reshape(B, S, D)
    pe = params['pe'][:S]                                   # (S, D)

    if batch_tile is None:
        # Fold batch rows into each grid step (MXU row occupancy, fewer grid
        # overheads) but keep >= 2 parallel steps so both v7x TCs get work.
        batch_tile = B // 2 if (B % 2 == 0 and B >= 2) else 1
    assert B % batch_tile == 0
    Bt = batch_tile
    G = B // Bt

    def full(shape):
        nd = len(shape)
        return pl.BlockSpec(tuple(shape), lambda g, l, nd=nd: (0,) * nd)

    def per_layer(shape):
        nd = len(shape)
        return pl.BlockSpec((1,) + tuple(shape[1:]),
                            lambda g, l, nd=nd: (l,) + (0,) * (nd - 1))

    in_specs = [
        pl.BlockSpec((Bt, S, D), lambda g, l: (g, 0, 0)),   # x (per batch tile)
        full(pe.shape),                                     # positional encoding
        per_layer(params['wqkv'].shape),                    # (L, 3*nhead, D, dh)
        per_layer(params['bqkv'].shape),                    # (L, 3*nhead, 1, dh)
        per_layer(params['wo'].shape),                      # (L, nhead, dh, D)
        per_layer(params['vecs'].shape),                    # (L, 6, D)
        per_layer(params['w1'].shape),                      # (L, D, F)
        per_layer(params['b1'].shape),                      # (L, 1, F)
        per_layer(params['w2'].shape),                      # (L, F, D)
        full(params['dec_wt'].shape),                       # (O, D)
        full(params['dec_b'].shape),                        # (O, 1)
    ]
    args = [x, pe, params['wqkv'], params['bqkv'], params['wo'], params['vecs'],
            params['w1'], params['b1'], params['w2'],
            params['dec_wt'], params['dec_b']]

    out = pl.pallas_call(
        make_fused_kernel(nhead, num_layers, Bt),
        out_shape=jax.ShapeDtypeStruct((B, O, S), jnp.float32),
        grid=(G, num_layers),
        in_specs=in_specs,
        out_specs=pl.BlockSpec((Bt, O, S), lambda g, l: (g, 0, 0)),
        scratch_shapes=[pltpu.VMEM((Bt, S, D), jnp.float32)],   # layer-carried x
        compiler_params=pltpu.CompilerParams(
            dimension_semantics=("parallel", "arbitrary"),
            vmem_limit_bytes=32 * 1024 * 1024),
    )(*args)
    return out                                              # (B, output_size, S)


# --------------------------------------------------------------------------
# Deterministic parameter construction (synthetic "pretrained" weights)
# --------------------------------------------------------------------------
def sinusoidal_pe(max_len, d_model):
    pos = jnp.arange(max_len, dtype=jnp.float32)[:, None]
    div = jnp.exp(jnp.arange(0, d_model, 2, dtype=jnp.float32)
                  * (-math.log(10000.0) / d_model))
    pe = jnp.zeros((max_len, d_model), dtype=jnp.float32)
    pe = pe.at[:, 0::2].set(jnp.sin(pos * div))
    pe = pe.at[:, 1::2].set(jnp.cos(pos * div))
    return pe


def init_params(key, d_model, nhead, dim_ff, num_layers, output_size, max_len):
    # TODO(synk): real torch nn.MultiheadAttention in_proj_weight is (3D, D)
    # row-major; loading it requires transposing + per-head repacking into the
    # (L, 3*nhead, D, dh) layout used here (synthetic init hides this).
    w_scale, b_scale = 0.1, 0.01
    L, D, F = num_layers, d_model, dim_ff
    dh = D // nhead
    sm_scale = 1.0 / math.sqrt(dh)
    ks = jax.random.split(key, 10)

    wqkv = jax.random.normal(ks[0], (L, 3 * nhead, D, dh), jnp.float32) * w_scale
    bqkv = jax.random.normal(ks[1], (L, 3 * nhead, 1, dh), jnp.float32) * b_scale
    # Fold the 1/sqrt(dh) attention scale into the Q projection (weights + bias).
    qscale = jnp.concatenate([jnp.full((nhead,), sm_scale, jnp.float32),
                              jnp.ones((2 * nhead,), jnp.float32)])
    wqkv = wqkv * qscale[None, :, None, None]
    bqkv = bqkv * qscale[None, :, None, None]

    wo = jax.random.normal(ks[2], (L, nhead, dh, D), jnp.float32) * w_scale
    w1 = jax.random.normal(ks[3], (L, D, F), jnp.float32) * w_scale
    b1 = jax.random.normal(ks[4], (L, 1, F), jnp.float32) * b_scale
    w2 = jax.random.normal(ks[5], (L, F, D), jnp.float32) * w_scale
    bo = jax.random.normal(ks[6], (L, 1, D), jnp.float32) * b_scale
    b2 = jax.random.normal(ks[7], (L, 1, D), jnp.float32) * b_scale
    ones = jnp.ones((L, 1, D), jnp.float32)
    zeros = jnp.zeros((L, 1, D), jnp.float32)
    # Packed per-layer D-sized vectors: [bo, ln1_g, ln1_b, b2, ln2_g, ln2_b].
    vecs = jnp.concatenate([bo, ones, zeros, b2, ones, zeros], axis=1)   # (L,6,D)
    dec_wt = jax.random.normal(ks[8], (output_size, D), jnp.float32) * w_scale
    dec_b = jax.random.normal(ks[9], (output_size, 1), jnp.float32) * b_scale
    return {
        'pe': sinusoidal_pe(max_len, D),
        # MXU matmul operands stored in bf16 (f32 accumulation in-kernel).
        'wqkv': wqkv.astype(jnp.bfloat16),
        'bqkv': bqkv,
        'wo': wo.astype(jnp.bfloat16),
        'vecs': vecs,
        'w1': w1.astype(jnp.bfloat16),
        'b1': b1,
        'w2': w2.astype(jnp.bfloat16),
        'dec_wt': dec_wt.astype(jnp.bfloat16),
        'dec_b': dec_b,
    }


# --------------------------------------------------------------------------
# Pure-JAX reference (f32) for a loose correctness check
# --------------------------------------------------------------------------
def reference_forward(src, params, steps_concat, nhead):
    B, NF, Lseq = src.shape
    S = Lseq // steps_concat
    D = NF * steps_concat
    x = jnp.transpose(src, (0, 2, 1)).reshape(B, S, D)
    x = x + params['pe'][:S][None]
    L = params['wqkv'].shape[0]
    wqkv = params['wqkv'].astype(jnp.float32)
    wo = params['wo'].astype(jnp.float32)
    w1 = params['w1'].astype(jnp.float32)
    w2 = params['w2'].astype(jnp.float32)
    for l in range(L):
        vecs = params['vecs'][l]
        attn = jnp.zeros_like(x)
        for h in range(nhead):
            q = x @ wqkv[l, h] + params['bqkv'][l, h]
            k = x @ wqkv[l, nhead + h] + params['bqkv'][l, nhead + h]
            v = x @ wqkv[l, 2 * nhead + h] + params['bqkv'][l, 2 * nhead + h]
            s = jnp.einsum('bqe,bke->bqk', q, k)            # scale folded already
            p = jax.nn.softmax(s, axis=-1)
            attn = attn + jnp.einsum('bqk,bke->bqe', p, v) @ wo[l, h]
        attn = attn + vecs[0]
        h1 = _layer_norm(x + attn, vecs[1], vecs[2])
        ff = jnp.maximum(h1 @ w1[l] + params['b1'][l], 0.0)
        ff = ff @ w2[l] + vecs[3]
        x = _layer_norm(h1 + ff, vecs[4], vecs[5])
    dec = jnp.einsum('od,bsd->bos', params['dec_wt'].astype(jnp.float32), x)
    return dec + params['dec_b'][None]


# --------------------------------------------------------------------------
if __name__ == "__main__":
    # Small shapes consistent with the module (N_LEADS = 12 is fixed by it).
    B, N_LEADS, seq_len = 4, 12, 16
    steps_concat = 2
    nhead = 4
    dim_ff = 48
    num_layers = 2
    output_size = 5
    d_model = N_LEADS * steps_concat        # emb_size = 24
    S = seq_len // steps_concat             # 8

    key = jax.random.PRNGKey(0)
    k_src, k_par = jax.random.split(key)
    src = jax.random.normal(k_src, (B, N_LEADS, seq_len), dtype=jnp.float32)
    params = init_params(k_par, d_model, nhead, dim_ff, num_layers,
                         output_size, max_len=4 * S)

    fwd = jax.jit(functools.partial(pretrained_transformerxl_block_forward,
                                    steps_concat=steps_concat, nhead=nhead))
    out = jax.block_until_ready(fwd(src, params))
    assert out.shape == (B, output_size, S), out.shape
    assert bool(jnp.all(jnp.isfinite(out)))

    # Loose parity check vs f32 reference (kernel feeds bf16 into the MXU).
    ref = reference_forward(src, params, steps_concat, nhead)
    assert bool(jnp.allclose(out, ref, atol=2e-1, rtol=2e-1)), \
        float(jnp.max(jnp.abs(out - ref)))
    print("KERNEL_OK")
</pallas_src>

<mosaic_0001>
module attributes {stable_mosaic.version = 11 : i64} {
  func.func @kernel(%arg0: i32, %arg1: i32, %arg2: memref<2x8x24xf32, #tpu.memory_space<vmem>>, %arg3: memref<8x24xf32, #tpu.memory_space<vmem>>, %arg4: memref<1x12x24x6xbf16, #tpu.memory_space<vmem>>, %arg5: memref<1x12x1x6xf32, #tpu.memory_space<vmem>>, %arg6: memref<1x4x6x24xbf16, #tpu.memory_space<vmem>>, %arg7: memref<1x6x24xf32, #tpu.memory_space<vmem>>, %arg8: memref<1x24x48xbf16, #tpu.memory_space<vmem>>, %arg9: memref<1x1x48xf32, #tpu.memory_space<vmem>>, %arg10: memref<1x48x24xbf16, #tpu.memory_space<vmem>>, %arg11: memref<5x24xbf16, #tpu.memory_space<vmem>>, %arg12: memref<5x1xf32, #tpu.memory_space<vmem>>, %arg13: memref<2x5x8xf32, #tpu.memory_space<vmem>>, %arg14: memref<2x8x24xf32, #tpu.memory_space<vmem>>) attributes {dimension_semantics = [#tpu.dimension_semantics<parallel>, #tpu.dimension_semantics<arbitrary>], iteration_bounds = array<i64: 2, 2>, scalar_prefetch = 0 : i64, scratch_operands = 1 : i64, tpu.core_type = #tpu.core_type<tc>, window_params = [{transform_indices = @transform_0, window_bounds = array<i64: 2, 8, 24>}, {pipeline_mode = #tpu.pipeline_mode<synchronous>, transform_indices = @transform_1, window_bounds = array<i64: 8, 24>}, {transform_indices = @transform_2, window_bounds = array<i64: 1, 12, 24, 6>}, {transform_indices = @transform_3, window_bounds = array<i64: 1, 12, 1, 6>}, {transform_indices = @transform_4, window_bounds = array<i64: 1, 4, 6, 24>}, {transform_indices = @transform_5, window_bounds = array<i64: 1, 6, 24>}, {transform_indices = @transform_6, window_bounds = array<i64: 1, 24, 48>}, {transform_indices = @transform_7, window_bounds = array<i64: 1, 1, 48>}, {transform_indices = @transform_8, window_bounds = array<i64: 1, 48, 24>}, {pipeline_mode = #tpu.pipeline_mode<synchronous>, transform_indices = @transform_9, window_bounds = array<i64: 5, 24>}, {pipeline_mode = #tpu.pipeline_mode<synchronous>, transform_indices = @transform_10, window_bounds = array<i64: 5, 1>}, {transform_indices = @transform_11, window_bounds = array<i64: 2, 5, 8>}]} {
    %c0_i32 = arith.constant 0 : i32
    %0 = arith.cmpi eq, %arg1, %c0_i32 : i32
    %1 = arith.extui %0 : i1 to i32
    %c0_i32_0 = arith.constant 0 : i32
    %2 = arith.cmpi ne, %1, %c0_i32_0 : i32
    scf.if %2 {
      %c0_165 = arith.constant 0 : index
      %c0_166 = arith.constant 0 : index
      %c0_167 = arith.constant 0 : index
      %264 = vector.load %arg2[%c0_165, %c0_166, %c0_167] : memref<2x8x24xf32, #tpu.memory_space<vmem>>, vector<2x8x24xf32>
      %c0_168 = arith.constant 0 : index
      %c0_169 = arith.constant 0 : index
      %265 = vector.load %arg3[%c0_168, %c0_169] : memref<8x24xf32, #tpu.memory_space<vmem>>, vector<8x24xf32>
      %266 = vector.shape_cast %265 : vector<8x24xf32> to vector<1x8x24xf32>
      %267 = vector.broadcast %266 : vector<1x8x24xf32> to vector<2x8x24xf32>
      %268 = arith.addf %264, %267 : vector<2x8x24xf32>
      %c0_170 = arith.constant 0 : index
      %c0_171 = arith.constant 0 : index
      %c0_172 = arith.constant 0 : index
      %269 = vector.load %arg14[%c0_170, %c0_171, %c0_172] : memref<2x8x24xf32, #tpu.memory_space<vmem>>, vector<2x8x24xf32>
      tpu.vector_store %arg14[%c0_170, %c0_171, %c0_172], %268 {strides = array<i32>} : memref<2x8x24xf32, #tpu.memory_space<vmem>>, vector<2x8x24xf32>,
    } else {
    }
    %c0 = arith.constant 0 : index
    %c0_1 = arith.constant 0 : index
    %c0_2 = arith.constant 0 : index
    %3 = vector.load %arg14[%c0, %c0_1, %c0_2] : memref<2x8x24xf32, #tpu.memory_space<vmem>>, vector<2x8x24xf32>
    %4 = vector.shape_cast %3 : vector<2x8x24xf32> to vector<16x24xf32>
    %5 = arith.truncf %4 : vector<16x24xf32> to vector<16x24xbf16>
    %c0_3 = arith.constant 0 : index
    %c0_4 = arith.constant 0 : index
    %c0_5 = arith.constant 0 : index
    %6 = vector.load %arg7[%c0_3, %c0_4, %c0_5] : memref<1x6x24xf32, #tpu.memory_space<vmem>>, vector<1x6x24xf32>
    %7 = vector.shape_cast %6 : vector<1x6x24xf32> to vector<6x24xf32>
    %cst = arith.constant 0.000000e+00 : f32
    %8 = vector.broadcast %cst : f32 to vector<16x24xf32>
    %c0_6 = arith.constant 0 : index
    %c0_7 = arith.constant 0 : index
    %c0_8 = arith.constant 0 : index
    %c0_9 = arith.constant 0 : index
    %9 = vector.load %arg4[%c0_6, %c0_7, %c0_8, %c0_9] : memref<1x12x24x6xbf16, #tpu.memory_space<vmem>>, vector<1x1x24x6xbf16>
    %10 = vector.shape_cast %9 : vector<1x1x24x6xbf16> to vector<24x6xbf16>
    %cst_10 = arith.constant dense<0.000000e+00> : vector<16x6xf32>
    %11 = tpu.matmul %5, %10, %cst_10 {dimension_numbers = #tpu.dot_dimension_numbers<[1], [0], [0], [1], [0, 0, 1, 1], [], []>} : vector<16x24xbf16>, vector<24x6xbf16>, vector<16x6xf32> -> vector<16x6xf32>
    %c0_11 = arith.constant 0 : index
    %c0_12 = arith.constant 0 : index
    %c0_13 = arith.constant 0 : index
    %c0_14 = arith.constant 0 : index
    %12 = vector.load %arg5[%c0_11, %c0_12, %c0_13, %c0_14] : memref<1x12x1x6xf32, #tpu.memory_space<vmem>>, vector<1x1x1x6xf32>
    %13 = vector.shape_cast %12 : vector<1x1x1x6xf32> to vector<1x6xf32>
    %14 = vector.broadcast %13 : vector<1x6xf32> to vector<16x6xf32>
    %15 = arith.addf %11, %14 : vector<16x6xf32>
    %c0_15 = arith.constant 0 : index
    %c4 = arith.constant 4 : index
    %c0_16 = arith.constant 0 : index
    %c0_17 = arith.constant 0 : index
    %16 = vector.load %arg4[%c0_15, %c4, %c0_16, %c0_17] : memref<1x12x24x6xbf16, #tpu.memory_space<vmem>>, vector<1x1x24x6xbf16>
    %17 = vector.shape_cast %16 : vector<1x1x24x6xbf16> to vector<24x6xbf16>
    %cst_18 = arith.constant dense<0.000000e+00> : vector<16x6xf32>
    %18 = tpu.matmul %5, %17, %cst_18 {dimension_numbers = #tpu.dot_dimension_numbers<[1], [0], [0], [1], [0, 0, 1, 1], [], []>} : vector<16x24xbf16>, vector<24x6xbf16>, vector<16x6xf32> -> vector<16x6xf32>
    %c0_19 = arith.constant 0 : index
    %c4_20 = arith.constant 4 : index
    %c0_21 = arith.constant 0 : index
    %c0_22 = arith.constant 0 : index
    %19 = vector.load %arg5[%c0_19, %c4_20, %c0_21, %c0_22] : memref<1x12x1x6xf32, #tpu.memory_space<vmem>>, vector<1x1x1x6xf32>
    %20 = vector.shape_cast %19 : vector<1x1x1x6xf32> to vector<1x6xf32>
    %21 = vector.broadcast %20 : vector<1x6xf32> to vector<16x6xf32>
    %22 = arith.addf %18, %21 : vector<16x6xf32>
    %c0_23 = arith.constant 0 : index
    %c8 = arith.constant 8 : index
    %c0_24 = arith.constant 0 : index
    %c0_25 = arith.constant 0 : index
    %23 = vector.load %arg4[%c0_23, %c8, %c0_24, %c0_25] : memref<1x12x24x6xbf16, #tpu.memory_space<vmem>>, vector<1x1x24x6xbf16>
    %24 = vector.shape_cast %23 : vector<1x1x24x6xbf16> to vector<24x6xbf16>
    %cst_26 = arith.constant dense<0.000000e+00> : vector<16x6xf32>
    %25 = tpu.matmul %5, %24, %cst_26 {dimension_numbers = #tpu.dot_dimension_numbers<[1], [0], [0], [1], [0, 0, 1, 1], [], []>} : vector<16x24xbf16>, vector<24x6xbf16>, vector<16x6xf32> -> vector<16x6xf32>
    %c0_27 = arith.constant 0 : index
    %c8_28 = arith.constant 8 : index
    %c0_29 = arith.constant 0 : index
    %c0_30 = arith.constant 0 : index
    %26 = vector.load %arg5[%c0_27, %c8_28, %c0_29, %c0_30] : memref<1x12x1x6xf32, #tpu.memory_space<vmem>>, vector<1x1x1x6xf32>
    %27 = vector.shape_cast %26 : vector<1x1x1x6xf32> to vector<1x6xf32>
    %28 = vector.broadcast %27 : vector<1x6xf32> to vector<16x6xf32>
    %29 = arith.addf %25, %28 : vector<16x6xf32>
    %30 = vector.shape_cast %15 : vector<16x6xf32> to vector<2x8x6xf32>
    %31 = arith.truncf %30 : vector<2x8x6xf32> to vector<2x8x6xbf16>
    %32 = vector.shape_cast %22 : vector<16x6xf32> to vector<2x8x6xf32>
    %33 = arith.truncf %32 : vector<2x8x6xf32> to vector<2x8x6xbf16>
    %34 = vector.shape_cast %29 : vector<16x6xf32> to vector<2x8x6xf32>
    %35 = arith.truncf %34 : vector<2x8x6xf32> to vector<2x8x6xbf16>
    "tpu.trace_start"() <{level = 10 : i32, message = "bqe,bke->bqk"}> : () -> ()
    %cst_31 = arith.constant dense<0.000000e+00> : vector<2x8x8xf32>
    %36 = tpu.matmul %31, %33, %cst_31 {dimension_numbers = #tpu.dot_dimension_numbers<[2], [2], [1], [1], [0, 0, 0, 1, 1, 1], [0], [0]>} : vector<2x8x6xbf16>, vector<2x8x6xbf16>, vector<2x8x8xf32> -> vector<2x8x8xf32>
    "tpu.trace_stop"() : () -> ()
    %cst_32 = arith.constant dense<0xFF800000> : vector<2x8xf32>
    %37 = vector.multi_reduction <maximumf>, %36, %cst_32 [2] : vector<2x8x8xf32> to vector<2x8xf32>
    %38 = vector.shape_cast %37 : vector<2x8xf32> to vector<2x8x1xf32>
    %39 = vector.broadcast %38 : vector<2x8x1xf32> to vector<2x8x8xf32>
    %40 = arith.subf %36, %39 : vector<2x8x8xf32>
    %41 = math.exp %40 : vector<2x8x8xf32>
    %cst_33 = arith.constant dense<0.000000e+00> : vector<2x8xf32>
    %42 = vector.multi_reduction <add>, %41, %cst_33 [2] : vector<2x8x8xf32> to vector<2x8xf32>
    %43 = vector.shape_cast %42 : vector<2x8xf32> to vector<2x8x1xf32>
    %44 = vector.broadcast %43 : vector<2x8x1xf32> to vector<2x8x8xf32>
    %45 = arith.divf %41, %44 : vector<2x8x8xf32>
    %46 = arith.truncf %45 : vector<2x8x8xf32> to vector<2x8x8xbf16>
    "tpu.trace_start"() <{level = 10 : i32, message = "bqk,bke->bqe"}> : () -> ()
    %cst_34 = arith.constant dense<0.000000e+00> : vector<2x8x6xf32>
    %47 = tpu.matmul %46, %35, %cst_34 {dimension_numbers = #tpu.dot_dimension_numbers<[2], [1], [1], [2], [0, 0, 0, 1, 1, 2], [0], [0]>} : vector<2x8x8xbf16>, vector<2x8x6xbf16>, vector<2x8x6xf32> -> vector<2x8x6xf32>
    "tpu.trace_stop"() : () -> ()
    %48 = vector.shape_cast %47 : vector<2x8x6xf32> to vector<16x6xf32>
    %49 = arith.truncf %48 : vector<16x6xf32> to vector<16x6xbf16>
    %c0_35 = arith.constant 0 : index
    %c0_36 = arith.constant 0 : index
    %c0_37 = arith.constant 0 : index
    %c0_38 = arith.constant 0 : index
    %50 = vector.load %arg6[%c0_35, %c0_36, %c0_37, %c0_38] : memref<1x4x6x24xbf16, #tpu.memory_space<vmem>>, vector<1x1x6x24xbf16>
    %51 = vector.shape_cast %50 : vector<1x1x6x24xbf16> to vector<6x24xbf16>
    %cst_39 = arith.constant dense<0.000000e+00> : vector<16x24xf32>
    %52 = tpu.matmul %49, %51, %cst_39 {dimension_numbers = #tpu.dot_dimension_numbers<[1], [0], [0], [1], [0, 0, 1, 1], [], []>} : vector<16x6xbf16>, vector<6x24xbf16>, vector<16x24xf32> -> vector<16x24xf32>
    %53 = arith.addf %8, %52 : vector<16x24xf32>
    %c0_40 = arith.constant 0 : index
    %c1 = arith.constant 1 : index
    %c0_41 = arith.constant 0 : index
    %c0_42 = arith.constant 0 : index
    %54 = vector.load %arg4[%c0_40, %c1, %c0_41, %c0_42] : memref<1x12x24x6xbf16, #tpu.memory_space<vmem>>, vector<1x1x24x6xbf16>
    %55 = vector.shape_cast %54 : vector<1x1x24x6xbf16> to vector<24x6xbf16>
    %cst_43 = arith.constant dense<0.000000e+00> : vector<16x6xf32>
    %56 = tpu.matmul %5, %55, %cst_43 {dimension_numbers = #tpu.dot_dimension_numbers<[1], [0], [0], [1], [0, 0, 1, 1], [], []>} : vector<16x24xbf16>, vector<24x6xbf16>, vector<16x6xf32> -> vector<16x6xf32>
    %c0_44 = arith.constant 0 : index
    %c1_45 = arith.constant 1 : index
    %c0_46 = arith.constant 0 : index
    %c0_47 = arith.constant 0 : index
    %57 = vector.load %arg5[%c0_44, %c1_45, %c0_46, %c0_47] : memref<1x12x1x6xf32, #tpu.memory_space<vmem>>, vector<1x1x1x6xf32>
    %58 = vector.shape_cast %57 : vector<1x1x1x6xf32> to vector<1x6xf32>
    %59 = vector.broadcast %58 : vector<1x6xf32> to vector<16x6xf32>
    %60 = arith.addf %56, %59 : vector<16x6xf32>
    %c0_48 = arith.constant 0 : index
    %c5 = arith.constant 5 : index
    %c0_49 = arith.constant 0 : index
    %c0_50 = arith.constant 0 : index
    %61 = vector.load %arg4[%c0_48, %c5, %c0_49, %c0_50] : memref<1x12x24x6xbf16, #tpu.memory_space<vmem>>, vector<1x1x24x6xbf16>
    %62 = vector.shape_cast %61 : vector<1x1x24x6xbf16> to vector<24x6xbf16>
    %cst_51 = arith.constant dense<0.000000e+00> : vector<16x6xf32>
    %63 = tpu.matmul %5, %62, %cst_51 {dimension_numbers = #tpu.dot_dimension_numbers<[1], [0], [0], [1], [0, 0, 1, 1], [], []>} : vector<16x24xbf16>, vector<24x6xbf16>, vector<16x6xf32> -> vector<16x6xf32>
    %c0_52 = arith.constant 0 : index
    %c5_53 = arith.constant 5 : index
    %c0_54 = arith.constant 0 : index
    %c0_55 = arith.constant 0 : index
    %64 = vector.load %arg5[%c0_52, %c5_53, %c0_54, %c0_55] : memref<1x12x1x6xf32, #tpu.memory_space<vmem>>, vector<1x1x1x6xf32>
    %65 = vector.shape_cast %64 : vector<1x1x1x6xf32> to vector<1x6xf32>
    %66 = vector.broadcast %65 : vector<1x6xf32> to vector<16x6xf32>
    %67 = arith.addf %63, %66 : vector<16x6xf32>
    %c0_56 = arith.constant 0 : index
    %c9 = arith.constant 9 : index
    %c0_57 = arith.constant 0 : index
    %c0_58 = arith.constant 0 : index
    %68 = vector.load %arg4[%c0_56, %c9, %c0_57, %c0_58] : memref<1x12x24x6xbf16, #tpu.memory_space<vmem>>, vector<1x1x24x6xbf16>
    %69 = vector.shape_cast %68 : vector<1x1x24x6xbf16> to vector<24x6xbf16>
    %cst_59 = arith.constant dense<0.000000e+00> : vector<16x6xf32>
    %70 = tpu.matmul %5, %69, %cst_59 {dimension_numbers = #tpu.dot_dimension_numbers<[1], [0], [0], [1], [0, 0, 1, 1], [], []>} : vector<16x24xbf16>, vector<24x6xbf16>, vector<16x6xf32> -> vector<16x6xf32>
    %c0_60 = arith.constant 0 : index
    %c9_61 = arith.constant 9 : index
    %c0_62 = arith.constant 0 : index
    %c0_63 = arith.constant 0 : index
    %71 = vector.load %arg5[%c0_60, %c9_61, %c0_62, %c0_63] : memref<1x12x1x6xf32, #tpu.memory_space<vmem>>, vector<1x1x1x6xf32>
    %72 = vector.shape_cast %71 : vector<1x1x1x6xf32> to vector<1x6xf32>
    %73 = vector.broadcast %72 : vector<1x6xf32> to vector<16x6xf32>
    %74 = arith.addf %70, %73 : vector<16x6xf32>
    %75 = vector.shape_cast %60 : vector<16x6xf32> to vector<2x8x6xf32>
    %76 = arith.truncf %75 : vector<2x8x6xf32> to vector<2x8x6xbf16>
    %77 = vector.shape_cast %67 : vector<16x6xf32> to vector<2x8x6xf32>
    %78 = arith.truncf %77 : vector<2x8x6xf32> to vector<2x8x6xbf16>
    %79 = vector.shape_cast %74 : vector<16x6xf32> to vector<2x8x6xf32>
    %80 = arith.truncf %79 : vector<2x8x6xf32> to vector<2x8x6xbf16>
    "tpu.trace_start"() <{level = 10 : i32, message = "bqe,bke->bqk"}> : () -> ()
    %cst_64 = arith.constant dense<0.000000e+00> : vector<2x8x8xf32>
    %81 = tpu.matmul %76, %78, %cst_64 {dimension_numbers = #tpu.dot_dimension_numbers<[2], [2], [1], [1], [0, 0, 0, 1, 1, 1], [0], [0]>} : vector<2x8x6xbf16>, vector<2x8x6xbf16>, vector<2x8x8xf32> -> vector<2x8x8xf32>
    "tpu.trace_stop"() : () -> ()
    %cst_65 = arith.constant dense<0xFF800000> : vector<2x8xf32>
    %82 = vector.multi_reduction <maximumf>, %81, %cst_65 [2] : vector<2x8x8xf32> to vector<2x8xf32>
    %83 = vector.shape_cast %82 : vector<2x8xf32> to vector<2x8x1xf32>
    %84 = vector.broadcast %83 : vector<2x8x1xf32> to vector<2x8x8xf32>
    %85 = arith.subf %81, %84 : vector<2x8x8xf32>
    %86 = math.exp %85 : vector<2x8x8xf32>
    %cst_66 = arith.constant dense<0.000000e+00> : vector<2x8xf32>
    %87 = vector.multi_reduction <add>, %86, %cst_66 [2] : vector<2x8x8xf32> to vector<2x8xf32>
    %88 = vector.shape_cast %87 : vector<2x8xf32> to vector<2x8x1xf32>
    %89 = vector.broadcast %88 : vector<2x8x1xf32> to vector<2x8x8xf32>
    %90 = arith.divf %86, %89 : vector<2x8x8xf32>
    %91 = arith.truncf %90 : vector<2x8x8xf32> to vector<2x8x8xbf16>
    "tpu.trace_start"() <{level = 10 : i32, message = "bqk,bke->bqe"}> : () -> ()
    %cst_67 = arith.constant dense<0.000000e+00> : vector<2x8x6xf32>
    %92 = tpu.matmul %91, %80, %cst_67 {dimension_numbers = #tpu.dot_dimension_numbers<[2], [1], [1], [2], [0, 0, 0, 1, 1, 2], [0], [0]>} : vector<2x8x8xbf16>, vector<2x8x6xbf16>, vector<2x8x6xf32> -> vector<2x8x6xf32>
    "tpu.trace_stop"() : () -> ()
    %93 = vector.shape_cast %92 : vector<2x8x6xf32> to vector<16x6xf32>
    %94 = arith.truncf %93 : vector<16x6xf32> to vector<16x6xbf16>
    %c0_68 = arith.constant 0 : index
    %c1_69 = arith.constant 1 : index
    %c0_70 = arith.constant 0 : index
    %c0_71 = arith.constant 0 : index
    %95 = vector.load %arg6[%c0_68, %c1_69, %c0_70, %c0_71] : memref<1x4x6x24xbf16, #tpu.memory_space<vmem>>, vector<1x1x6x24xbf16>
    %96 = vector.shape_cast %95 : vector<1x1x6x24xbf16> to vector<6x24xbf16>
    %cst_72 = arith.constant dense<0.000000e+00> : vector<16x24xf32>
    %97 = tpu.matmul %94, %96, %cst_72 {dimension_numbers = #tpu.dot_dimension_numbers<[1], [0], [0], [1], [0, 0, 1, 1], [], []>} : vector<16x6xbf16>, vector<6x24xbf16>, vector<16x24xf32> -> vector<16x24xf32>
    %98 = arith.addf %53, %97 : vector<16x24xf32>
    %c0_73 = arith.constant 0 : index
    %c2 = arith.constant 2 : index
    %c0_74 = arith.constant 0 : index
    %c0_75 = arith.constant 0 : index
    %99 = vector.load %arg4[%c0_73, %c2, %c0_74, %c0_75] : memref<1x12x24x6xbf16, #tpu.memory_space<vmem>>, vector<1x1x24x6xbf16>
    %100 = vector.shape_cast %99 : vector<1x1x24x6xbf16> to vector<24x6xbf16>
    %cst_76 = arith.constant dense<0.000000e+00> : vector<16x6xf32>
    %101 = tpu.matmul %5, %100, %cst_76 {dimension_numbers = #tpu.dot_dimension_numbers<[1], [0], [0], [1], [0, 0, 1, 1], [], []>} : vector<16x24xbf16>, vector<24x6xbf16>, vector<16x6xf32> -> vector<16x6xf32>
    %c0_77 = arith.constant 0 : index
    %c2_78 = arith.constant 2 : index
    %c0_79 = arith.constant 0 : index
    %c0_80 = arith.constant 0 : index
    %102 = vector.load %arg5[%c0_77, %c2_78, %c0_79, %c0_80] : memref<1x12x1x6xf32, #tpu.memory_space<vmem>>, vector<1x1x1x6xf32>
    %103 = vector.shape_cast %102 : vector<1x1x1x6xf32> to vector<1x6xf32>
    %104 = vector.broadcast %103 : vector<1x6xf32> to vector<16x6xf32>
    %105 = arith.addf %101, %104 : vector<16x6xf32>
    %c0_81 = arith.constant 0 : index
    %c6 = arith.constant 6 : index
    %c0_82 = arith.constant 0 : index
    %c0_83 = arith.constant 0 : index
    %106 = vector.load %arg4[%c0_81, %c6, %c0_82, %c0_83] : memref<1x12x24x6xbf16, #tpu.memory_space<vmem>>, vector<1x1x24x6xbf16>
    %107 = vector.shape_cast %106 : vector<1x1x24x6xbf16> to vector<24x6xbf16>
    %cst_84 = arith.constant dense<0.000000e+00> : vector<16x6xf32>
    %108 = tpu.matmul %5, %107, %cst_84 {dimension_numbers = #tpu.dot_dimension_numbers<[1], [0], [0], [1], [0, 0, 1, 1], [], []>} : vector<16x24xbf16>, vector<24x6xbf16>, vector<16x6xf32> -> vector<16x6xf32>
    %c0_85 = arith.constant 0 : index
    %c6_86 = arith.constant 6 : index
    %c0_87 = arith.constant 0 : index
    %c0_88 = arith.constant 0 : index
    %109 = vector.load %arg5[%c0_85, %c6_86, %c0_87, %c0_88] : memref<1x12x1x6xf32, #tpu.memory_space<vmem>>, vector<1x1x1x6xf32>
    %110 = vector.shape_cast %109 : vector<1x1x1x6xf32> to vector<1x6xf32>
    %111 = vector.broadcast %110 : vector<1x6xf32> to vector<16x6xf32>
    %112 = arith.addf %108, %111 : vector<16x6xf32>
    %c0_89 = arith.constant 0 : index
    %c10 = arith.constant 10 : index
    %c0_90 = arith.constant 0 : index
    %c0_91 = arith.constant 0 : index
    %113 = vector.load %arg4[%c0_89, %c10, %c0_90, %c0_91] : memref<1x12x24x6xbf16, #tpu.memory_space<vmem>>, vector<1x1x24x6xbf16>
    %114 = vector.shape_cast %113 : vector<1x1x24x6xbf16> to vector<24x6xbf16>
    %cst_92 = arith.constant dense<0.000000e+00> : vector<16x6xf32>
    %115 = tpu.matmul %5, %114, %cst_92 {dimension_numbers = #tpu.dot_dimension_numbers<[1], [0], [0], [1], [0, 0, 1, 1], [], []>} : vector<16x24xbf16>, vector<24x6xbf16>, vector<16x6xf32> -> vector<16x6xf32>
    %c0_93 = arith.constant 0 : index
    %c10_94 = arith.constant 10 : index
    %c0_95 = arith.constant 0 : index
    %c0_96 = arith.constant 0 : index
    %116 = vector.load %arg5[%c0_93, %c10_94, %c0_95, %c0_96] : memref<1x12x1x6xf32, #tpu.memory_space<vmem>>, vector<1x1x1x6xf32>
    %117 = vector.shape_cast %116 : vector<1x1x1x6xf32> to vector<1x6xf32>
    %118 = vector.broadcast %117 : vector<1x6xf32> to vector<16x6xf32>
    %119 = arith.addf %115, %118 : vector<16x6xf32>
    %120 = vector.shape_cast %105 : vector<16x6xf32> to vector<2x8x6xf32>
    %121 = arith.truncf %120 : vector<2x8x6xf32> to vector<2x8x6xbf16>
    %122 = vector.shape_cast %112 : vector<16x6xf32> to vector<2x8x6xf32>
    %123 = arith.truncf %122 : vector<2x8x6xf32> to vector<2x8x6xbf16>
    %124 = vector.shape_cast %119 : vector<16x6xf32> to vector<2x8x6xf32>
    %125 = arith.truncf %124 : vector<2x8x6xf32> to vector<2x8x6xbf16>
    "tpu.trace_start"() <{level = 10 : i32, message = "bqe,bke->bqk"}> : () -> ()
    %cst_97 = arith.constant dense<0.000000e+00> : vector<2x8x8xf32>
    %126 = tpu.matmul %121, %123, %cst_97 {dimension_numbers = #tpu.dot_dimension_numbers<[2], [2], [1], [1], [0, 0, 0, 1, 1, 1], [0], [0]>} : vector<2x8x6xbf16>, vector<2x8x6xbf16>, vector<2x8x8xf32> -> vector<2x8x8xf32>
    "tpu.trace_stop"() : () -> ()
    %cst_98 = arith.constant dense<0xFF800000> : vector<2x8xf32>
    %127 = vector.multi_reduction <maximumf>, %126, %cst_98 [2] : vector<2x8x8xf32> to vector<2x8xf32>
    %128 = vector.shape_cast %127 : vector<2x8xf32> to vector<2x8x1xf32>
    %129 = vector.broadcast %128 : vector<2x8x1xf32> to vector<2x8x8xf32>
    %130 = arith.subf %126, %129 : vector<2x8x8xf32>
    %131 = math.exp %130 : vector<2x8x8xf32>
    %cst_99 = arith.constant dense<0.000000e+00> : vector<2x8xf32>
    %132 = vector.multi_reduction <add>, %131, %cst_99 [2] : vector<2x8x8xf32> to vector<2x8xf32>
    %133 = vector.shape_cast %132 : vector<2x8xf32> to vector<2x8x1xf32>
    %134 = vector.broadcast %133 : vector<2x8x1xf32> to vector<2x8x8xf32>
    %135 = arith.divf %131, %134 : vector<2x8x8xf32>
    %136 = arith.truncf %135 : vector<2x8x8xf32> to vector<2x8x8xbf16>
    "tpu.trace_start"() <{level = 10 : i32, message = "bqk,bke->bqe"}> : () -> ()
    %cst_100 = arith.constant dense<0.000000e+00> : vector<2x8x6xf32>
    %137 = tpu.matmul %136, %125, %cst_100 {dimension_numbers = #tpu.dot_dimension_numbers<[2], [1], [1], [2], [0, 0, 0, 1, 1, 2], [0], [0]>} : vector<2x8x8xbf16>, vector<2x8x6xbf16>, vector<2x8x6xf32> -> vector<2x8x6xf32>
    "tpu.trace_stop"() : () -> ()
    %138 = vector.shape_cast %137 : vector<2x8x6xf32> to vector<16x6xf32>
    %139 = arith.truncf %138 : vector<16x6xf32> to vector<16x6xbf16>
    %c0_101 = arith.constant 0 : index
    %c2_102 = arith.constant 2 : index
    %c0_103 = arith.constant 0 : index
    %c0_104 = arith.constant 0 : index
    %140 = vector.load %arg6[%c0_101, %c2_102, %c0_103, %c0_104] : memref<1x4x6x24xbf16, #tpu.memory_space<vmem>>, vector<1x1x6x24xbf16>
    %141 = vector.shape_cast %140 : vector<1x1x6x24xbf16> to vector<6x24xbf16>
    %cst_105 = arith.constant dense<0.000000e+00> : vector<16x24xf32>
    %142 = tpu.matmul %139, %141, %cst_105 {dimension_numbers = #tpu.dot_dimension_numbers<[1], [0], [0], [1], [0, 0, 1, 1], [], []>} : vector<16x6xbf16>, vector<6x24xbf16>, vector<16x24xf32> -> vector<16x24xf32>
    %143 = arith.addf %98, %142 : vector<16x24xf32>
    %c0_106 = arith.constant 0 : index
    %c3 = arith.constant 3 : index
    %c0_107 = arith.constant 0 : index
    %c0_108 = arith.constant 0 : index
    %144 = vector.load %arg4[%c0_106, %c3, %c0_107, %c0_108] : memref<1x12x24x6xbf16, #tpu.memory_space<vmem>>, vector<1x1x24x6xbf16>
    %145 = vector.shape_cast %144 : vector<1x1x24x6xbf16> to vector<24x6xbf16>
    %cst_109 = arith.constant dense<0.000000e+00> : vector<16x6xf32>
    %146 = tpu.matmul %5, %145, %cst_109 {dimension_numbers = #tpu.dot_dimension_numbers<[1], [0], [0], [1], [0, 0, 1, 1], [], []>} : vector<16x24xbf16>, vector<24x6xbf16>, vector<16x6xf32> -> vector<16x6xf32>
    %c0_110 = arith.constant 0 : index
    %c3_111 = arith.constant 3 : index
    %c0_112 = arith.constant 0 : index
    %c0_113 = arith.constant 0 : index
    %147 = vector.load %arg5[%c0_110, %c3_111, %c0_112, %c0_113] : memref<1x12x1x6xf32, #tpu.memory_space<vmem>>, vector<1x1x1x6xf32>
    %148 = vector.shape_cast %147 : vector<1x1x1x6xf32> to vector<1x6xf32>
    %149 = vector.broadcast %148 : vector<1x6xf32> to vector<16x6xf32>
    %150 = arith.addf %146, %149 : vector<16x6xf32>
    %c0_114 = arith.constant 0 : index
    %c7 = arith.constant 7 : index
    %c0_115 = arith.constant 0 : index
    %c0_116 = arith.constant 0 : index
    %151 = vector.load %arg4[%c0_114, %c7, %c0_115, %c0_116] : memref<1x12x24x6xbf16, #tpu.memory_space<vmem>>, vector<1x1x24x6xbf16>
    %152 = vector.shape_cast %151 : vector<1x1x24x6xbf16> to vector<24x6xbf16>
    %cst_117 = arith.constant dense<0.000000e+00> : vector<16x6xf32>
    %153 = tpu.matmul %5, %152, %cst_117 {dimension_numbers = #tpu.dot_dimension_numbers<[1], [0], [0], [1], [0, 0, 1, 1], [], []>} : vector<16x24xbf16>, vector<24x6xbf16>, vector<16x6xf32> -> vector<16x6xf32>
    %c0_118 = arith.constant 0 : index
    %c7_119 = arith.constant 7 : index
    %c0_120 = arith.constant 0 : index
    %c0_121 = arith.constant 0 : index
    %154 = vector.load %arg5[%c0_118, %c7_119, %c0_120, %c0_121] : memref<1x12x1x6xf32, #tpu.memory_space<vmem>>, vector<1x1x1x6xf32>
    %155 = vector.shape_cast %154 : vector<1x1x1x6xf32> to vector<1x6xf32>
    %156 = vector.broadcast %155 : vector<1x6xf32> to vector<16x6xf32>
    %157 = arith.addf %153, %156 : vector<16x6xf32>
    %c0_122 = arith.constant 0 : index
    %c11 = arith.constant 11 : index
    %c0_123 = arith.constant 0 : index
    %c0_124 = arith.constant 0 : index
    %158 = vector.load %arg4[%c0_122, %c11, %c0_123, %c0_124] : memref<1x12x24x6xbf16, #tpu.memory_space<vmem>>, vector<1x1x24x6xbf16>
    %159 = vector.shape_cast %158 : vector<1x1x24x6xbf16> to vector<24x6xbf16>
    %cst_125 = arith.constant dense<0.000000e+00> : vector<16x6xf32>
    %160 = tpu.matmul %5, %159, %cst_125 {dimension_numbers = #tpu.dot_dimension_numbers<[1], [0], [0], [1], [0, 0, 1, 1], [], []>} : vector<16x24xbf16>, vector<24x6xbf16>, vector<16x6xf32> -> vector<16x6xf32>
    %c0_126 = arith.constant 0 : index
    %c11_127 = arith.constant 11 : index
    %c0_128 = arith.constant 0 : index
    %c0_129 = arith.constant 0 : index
    %161 = vector.load %arg5[%c0_126, %c11_127, %c0_128, %c0_129] : memref<1x12x1x6xf32, #tpu.memory_space<vmem>>, vector<1x1x1x6xf32>
    %162 = vector.shape_cast %161 : vector<1x1x1x6xf32> to vector<1x6xf32>
    %163 = vector.broadcast %162 : vector<1x6xf32> to vector<16x6xf32>
    %164 = arith.addf %160, %163 : vector<16x6xf32>
    %165 = vector.shape_cast %150 : vector<16x6xf32> to vector<2x8x6xf32>
    %166 = arith.truncf %165 : vector<2x8x6xf32> to vector<2x8x6xbf16>
    %167 = vector.shape_cast %157 : vector<16x6xf32> to vector<2x8x6xf32>
    %168 = arith.truncf %167 : vector<2x8x6xf32> to vector<2x8x6xbf16>
    %169 = vector.shape_cast %164 : vector<16x6xf32> to vector<2x8x6xf32>
    %170 = arith.truncf %169 : vector<2x8x6xf32> to vector<2x8x6xbf16>
    "tpu.trace_start"() <{level = 10 : i32, message = "bqe,bke->bqk"}> : () -> ()
    %cst_130 = arith.constant dense<0.000000e+00> : vector<2x8x8xf32>
    %171 = tpu.matmul %166, %168, %cst_130 {dimension_numbers = #tpu.dot_dimension_numbers<[2], [2], [1], [1], [0, 0, 0, 1, 1, 1], [0], [0]>} : vector<2x8x6xbf16>, vector<2x8x6xbf16>, vector<2x8x8xf32> -> vector<2x8x8xf32>
    "tpu.trace_stop"() : () -> ()
    %cst_131 = arith.constant dense<0xFF800000> : vector<2x8xf32>
    %172 = vector.multi_reduction <maximumf>, %171, %cst_131 [2] : vector<2x8x8xf32> to vector<2x8xf32>
    %173 = vector.shape_cast %172 : vector<2x8xf32> to vector<2x8x1xf32>
    %174 = vector.broadcast %173 : vector<2x8x1xf32> to vector<2x8x8xf32>
    %175 = arith.subf %171, %174 : vector<2x8x8xf32>
    %176 = math.exp %175 : vector<2x8x8xf32>
    %cst_132 = arith.constant dense<0.000000e+00> : vector<2x8xf32>
    %177 = vector.multi_reduction <add>, %176, %cst_132 [2] : vector<2x8x8xf32> to vector<2x8xf32>
    %178 = vector.shape_cast %177 : vector<2x8xf32> to vector<2x8x1xf32>
    %179 = vector.broadcast %178 : vector<2x8x1xf32> to vector<2x8x8xf32>
    %180 = arith.divf %176, %179 : vector<2x8x8xf32>
    %181 = arith.truncf %180 : vector<2x8x8xf32> to vector<2x8x8xbf16>
    "tpu.trace_start"() <{level = 10 : i32, message = "bqk,bke->bqe"}> : () -> ()
    %cst_133 = arith.constant dense<0.000000e+00> : vector<2x8x6xf32>
    %182 = tpu.matmul %181, %170, %cst_133 {dimension_numbers = #tpu.dot_dimension_numbers<[2], [1], [1], [2], [0, 0, 0, 1, 1, 2], [0], [0]>} : vector<2x8x8xbf16>, vector<2x8x6xbf16>, vector<2x8x6xf32> -> vector<2x8x6xf32>
    "tpu.trace_stop"() : () -> ()
    %183 = vector.shape_cast %182 : vector<2x8x6xf32> to vector<16x6xf32>
    %184 = arith.truncf %183 : vector<16x6xf32> to vector<16x6xbf16>
    %c0_134 = arith.constant 0 : index
    %c3_135 = arith.constant 3 : index
    %c0_136 = arith.constant 0 : index
    %c0_137 = arith.constant 0 : index
    %185 = vector.load %arg6[%c0_134, %c3_135, %c0_136, %c0_137] : memref<1x4x6x24xbf16, #tpu.memory_space<vmem>>, vector<1x1x6x24xbf16>
    %186 = vector.shape_cast %185 : vector<1x1x6x24xbf16> to vector<6x24xbf16>
    %cst_138 = arith.constant dense<0.000000e+00> : vector<16x24xf32>
    %187 = tpu.matmul %184, %186, %cst_138 {dimension_numbers = #tpu.dot_dimension_numbers<[1], [0], [0], [1], [0, 0, 1, 1], [], []>} : vector<16x6xbf16>, vector<6x24xbf16>, vector<16x24xf32> -> vector<16x24xf32>
    %188 = arith.addf %143, %187 : vector<16x24xf32>
    %189 = vector.extract_strided_slice %7 {offsets = [0, 0], sizes = [1, 24], strides = [1, 1]} : vector<6x24xf32> to vector<1x24xf32>
    %190 = vector.broadcast %189 : vector<1x24xf32> to vector<16x24xf32>
    %191 = arith.addf %188, %190 : vector<16x24xf32>
    %192 = arith.addf %4, %191 : vector<16x24xf32>
    %193 = vector.extract_strided_slice %7 {offsets = [1, 0], sizes = [1, 24], strides = [1, 1]} : vector<6x24xf32> to vector<1x24xf32>
    %194 = vector.extract_strided_slice %7 {offsets = [2, 0], sizes = [1, 24], strides = [1, 1]} : vector<6x24xf32> to vector<1x24xf32>
    %cst_139 = arith.constant dense<0.000000e+00> : vector<16xf32>
    %195 = vector.multi_reduction <add>, %192, %cst_139 [1] : vector<16x24xf32> to vector<16xf32>
    %196 = vector.shape_cast %195 : vector<16xf32> to vector<16x1xf32>
    %cst_140 = arith.constant 2.400000e+01 : f32
    %197 = vector.broadcast %cst_140 : f32 to vector<16x1xf32>
    %198 = arith.divf %196, %197 : vector<16x1xf32>
    %199 = vector.broadcast %198 : vector<16x1xf32> to vector<16x24xf32>
    %200 = arith.subf %192, %199 : vector<16x24xf32>
    %201 = arith.mulf %200, %200 : vector<16x24xf32>
    %cst_141 = arith.constant dense<0.000000e+00> : vector<16xf32>
    %202 = vector.multi_reduction <add>, %201, %cst_141 [1] : vector<16x24xf32> to vector<16xf32>
    %203 = vector.shape_cast %202 : vector<16xf32> to vector<16x1xf32>
    %cst_142 = arith.constant 2.400000e+01 : f32
    %204 = vector.broadcast %cst_142 : f32 to vector<16x1xf32>
    %205 = arith.divf %203, %204 : vector<16x1xf32>
    %206 = vector.broadcast %198 : vector<16x1xf32> to vector<16x24xf32>
    %207 = arith.subf %192, %206 : vector<16x24xf32>
    %cst_143 = arith.constant 9.99999974E-6 : f32
    %208 = vector.broadcast %cst_143 : f32 to vector<16x1xf32>
    %209 = arith.addf %205, %208 : vector<16x1xf32>
    %210 = math.rsqrt %209 : vector<16x1xf32>
    %211 = vector.broadcast %210 : vector<16x1xf32> to vector<16x24xf32>
    %212 = arith.mulf %207, %211 : vector<16x24xf32>
    %213 = vector.broadcast %193 : vector<1x24xf32> to vector<16x24xf32>
    %214 = arith.mulf %212, %213 : vector<16x24xf32>
    %215 = vector.broadcast %194 : vector<1x24xf32> to vector<16x24xf32>
    %216 = arith.addf %214, %215 : vector<16x24xf32>
    %217 = arith.truncf %216 : vector<16x24xf32> to vector<16x24xbf16>
    %c0_144 = arith.constant 0 : index
    %c0_145 = arith.constant 0 : index
    %c0_146 = arith.constant 0 : index
    %218 = vector.load %arg8[%c0_144, %c0_145, %c0_146] : memref<1x24x48xbf16, #tpu.memory_space<vmem>>, vector<1x24x48xbf16>
    %219 = vector.shape_cast %218 : vector<1x24x48xbf16> to vector<24x48xbf16>
    %cst_147 = arith.constant dense<0.000000e+00> : vector<16x48xf32>
    %220 = tpu.matmul %217, %219, %cst_147 {dimension_numbers = #tpu.dot_dimension_numbers<[1], [0], [0], [1], [0, 0, 1, 1], [], []>} : vector<16x24xbf16>, vector<24x48xbf16>, vector<16x48xf32> -> vector<16x48xf32>
    %c0_148 = arith.constant 0 : index
    %c0_149 = arith.constant 0 : index
    %c0_150 = arith.constant 0 : index
    %221 = vector.load %arg9[%c0_148, %c0_149, %c0_150] : memref<1x1x48xf32, #tpu.memory_space<vmem>>, vector<1x1x48xf32>
    %222 = vector.shape_cast %221 : vector<1x1x48xf32> to vector<1x48xf32>
    %223 = vector.broadcast %222 : vector<1x48xf32> to vector<16x48xf32>
    %224 = arith.addf %220, %223 : vector<16x48xf32>
    %cst_151 = arith.constant 0.000000e+00 : f32
    %225 = vector.broadcast %cst_151 : f32 to vector<16x48xf32>
    %226 = arith.maximumf %224, %225 : vector<16x48xf32>
    %227 = arith.truncf %226 : vector<16x48xf32> to vector<16x48xbf16>
    %c0_152 = arith.constant 0 : index
    %c0_153 = arith.constant 0 : index
    %c0_154 = arith.constant 0 : index
    %228 = vector.load %arg10[%c0_152, %c0_153, %c0_154] : memref<1x48x24xbf16, #tpu.memory_space<vmem>>, vector<1x48x24xbf16>
    %229 = vector.shape_cast %228 : vector<1x48x24xbf16> to vector<48x24xbf16>
    %cst_155 = arith.constant dense<0.000000e+00> : vector<16x24xf32>
    %230 = tpu.matmul %227, %229, %cst_155 {dimension_numbers = #tpu.dot_dimension_numbers<[1], [0], [0], [1], [0, 0, 1, 1], [], []>} : vector<16x48xbf16>, vector<48x24xbf16>, vector<16x24xf32> -> vector<16x24xf32>
    %231 = vector.extract_strided_slice %7 {offsets = [3, 0], sizes = [1, 24], strides = [1, 1]} : vector<6x24xf32> to vector<1x24xf32>
    %232 = vector.broadcast %231 : vector<1x24xf32> to vector<16x24xf32>
    %233 = arith.addf %230, %232 : vector<16x24xf32>
    %234 = arith.addf %216, %233 : vector<16x24xf32>
    %235 = vector.extract_strided_slice %7 {offsets = [4, 0], sizes = [1, 24], strides = [1, 1]} : vector<6x24xf32> to vector<1x24xf32>
    %236 = vector.extract_strided_slice %7 {offsets = [5, 0], sizes = [1, 24], strides = [1, 1]} : vector<6x24xf32> to vector<1x24xf32>
    %cst_156 = arith.constant dense<0.000000e+00> : vector<16xf32>
    %237 = vector.multi_reduction <add>, %234, %cst_156 [1] : vector<16x24xf32> to vector<16xf32>
    %238 = vector.shape_cast %237 : vector<16xf32> to vector<16x1xf32>
    %cst_157 = arith.constant 2.400000e+01 : f32
    %239 = vector.broadcast %cst_157 : f32 to vector<16x1xf32>
    %240 = arith.divf %238, %239 : vector<16x1xf32>
    %241 = vector.broadcast %240 : vector<16x1xf32> to vector<16x24xf32>
    %242 = arith.subf %234, %241 : vector<16x24xf32>
    %243 = arith.mulf %242, %242 : vector<16x24xf32>
    %cst_158 = arith.constant dense<0.000000e+00> : vector<16xf32>
    %244 = vector.multi_reduction <add>, %243, %cst_158 [1] : vector<16x24xf32> to vector<16xf32>
    %245 = vector.shape_cast %244 : vector<16xf32> to vector<16x1xf32>
    %cst_159 = arith.constant 2.400000e+01 : f32
    %246 = vector.broadcast %cst_159 : f32 to vector<16x1xf32>
    %247 = arith.divf %245, %246 : vector<16x1xf32>
    %248 = vector.broadcast %240 : vector<16x1xf32> to vector<16x24xf32>
    %249 = arith.subf %234, %248 : vector<16x24xf32>
    %cst_160 = arith.constant 9.99999974E-6 : f32
    %250 = vector.broadcast %cst_160 : f32 to vector<16x1xf32>
    %251 = arith.addf %247, %250 : vector<16x1xf32>
    %252 = math.rsqrt %251 : vector<16x1xf32>
    %253 = vector.broadcast %252 : vector<16x1xf32> to vector<16x24xf32>
    %254 = arith.mulf %249, %253 : vector<16x24xf32>
    %255 = vector.broadcast %235 : vector<1x24xf32> to vector<16x24xf32>
    %256 = arith.mulf %254, %255 : vector<16x24xf32>
    %257 = vector.broadcast %236 : vector<1x24xf32> to vector<16x24xf32>
    %258 = arith.addf %256, %257 : vector<16x24xf32>
    %259 = vector.shape_cast %258 : vector<16x24xf32> to vector<2x8x24xf32>
    %c0_161 = arith.constant 0 : index
    %c0_162 = arith.constant 0 : index
    %c0_163 = arith.constant 0 : index
    %260 = vector.load %arg14[%c0_161, %c0_162, %c0_163] : memref<2x8x24xf32, #tpu.memory_space<vmem>>, vector<2x8x24xf32>
    tpu.vector_store %arg14[%c0_161, %c0_162, %c0_163], %259 {strides = array<i32>} : memref<2x8x24xf32, #tpu.memory_space<vmem>>, vector<2x8x24xf32>,
    %c1_i32 = arith.constant 1 : i32
    %261 = arith.cmpi eq, %arg1, %c1_i32 : i32
    %262 = arith.extui %261 : i1 to i32
    %c0_i32_164 = arith.constant 0 : i32
    %263 = arith.cmpi ne, %262, %c0_i32_164 : i32
    scf.if %263 {
      %264 = vector.shape_cast %258 : vector<16x24xf32> to vector<2x8x24xf32>
      %265 = arith.truncf %264 : vector<2x8x24xf32> to vector<2x8x24xbf16>
      %c0_165 = arith.constant 0 : index
      %c0_166 = arith.constant 0 : index
      %266 = vector.load %arg11[%c0_165, %c0_166] : memref<5x24xbf16, #tpu.memory_space<vmem>>, vector<5x24xbf16>
      %267 = vector.extract_strided_slice %265 {offsets = [0, 0, 0], sizes = [1, 8, 24], strides = [1, 1, 1]} : vector<2x8x24xbf16> to vector<1x8x24xbf16>
      %268 = vector.shape_cast %267 : vector<1x8x24xbf16> to vector<8x24xbf16>
      %cst_167 = arith.constant dense<0.000000e+00> : vector<5x8xf32>
      %269 = tpu.matmul %266, %268, %cst_167 {dimension_numbers = #tpu.dot_dimension_numbers<[1], [1], [0], [0], [0, 0, 1, 0], [], []>} : vector<5x24xbf16>, vector<8x24xbf16>, vector<5x8xf32> -> vector<5x8xf32>
      %c0_168 = arith.constant 0 : index
      %c0_169 = arith.constant 0 : index
      %270 = vector.load %arg12[%c0_168, %c0_169] : memref<5x1xf32, #tpu.memory_space<vmem>>, vector<5x1xf32>
      %271 = vector.broadcast %270 : vector<5x1xf32> to vector<5x8xf32>
      %272 = arith.addf %269, %271 : vector<5x8xf32>
      %c0_170 = arith.constant 0 : index
      %c0_171 = arith.constant 0 : index
      %c0_172 = arith.constant 0 : index
      %273 = vector.load %arg13[%c0_170, %c0_171, %c0_172] : memref<2x5x8xf32, #tpu.memory_space<vmem>>, vector<1x5x8xf32>
      %274 = vector.shape_cast %273 : vector<1x5x8xf32> to vector<5x8xf32>
      %275 = vector.shape_cast %272 : vector<5x8xf32> to vector<1x5x8xf32>
      tpu.vector_store %arg13[%c0_170, %c0_171, %c0_172], %275 {strides = array<i32>} : memref<2x5x8xf32, #tpu.memory_space<vmem>>, vector<1x5x8xf32>,
      %c0_173 = arith.constant 0 : index
      %c0_174 = arith.constant 0 : index
      %276 = vector.load %arg11[%c0_173, %c0_174] : memref<5x24xbf16, #tpu.memory_space<vmem>>, vector<5x24xbf16>
      %277 = vector.extract_strided_slice %265 {offsets = [1, 0, 0], sizes = [1, 8, 24], strides = [1, 1, 1]} : vector<2x8x24xbf16> to vector<1x8x24xbf16>
      %278 = vector.shape_cast %277 : vector<1x8x24xbf16> to vector<8x24xbf16>
      %cst_175 = arith.constant dense<0.000000e+00> : vector<5x8xf32>
      %279 = tpu.matmul %276, %278, %cst_175 {dimension_numbers = #tpu.dot_dimension_numbers<[1], [1], [0], [0], [0, 0, 1, 0], [], []>} : vector<5x24xbf16>, vector<8x24xbf16>, vector<5x8xf32> -> vector<5x8xf32>
      %c0_176 = arith.constant 0 : index
      %c0_177 = arith.constant 0 : index
      %280 = vector.load %arg12[%c0_176, %c0_177] : memref<5x1xf32, #tpu.memory_space<vmem>>, vector<5x1xf32>
      %281 = vector.broadcast %280 : vector<5x1xf32> to vector<5x8xf32>
      %282 = arith.addf %279, %281 : vector<5x8xf32>
      %c1_178 = arith.constant 1 : index
      %c0_179 = arith.constant 0 : index
      %c0_180 = arith.constant 0 : index
      %283 = vector.load %arg13[%c1_178, %c0_179, %c0_180] : memref<2x5x8xf32, #tpu.memory_space<vmem>>, vector<1x5x8xf32>
      %284 = vector.shape_cast %283 : vector<1x5x8xf32> to vector<5x8xf32>
      %285 = vector.shape_cast %282 : vector<5x8xf32> to vector<1x5x8xf32>
      tpu.vector_store %arg13[%c1_178, %c0_179, %c0_180], %285 {strides = array<i32>} : memref<2x5x8xf32, #tpu.memory_space<vmem>>, vector<1x5x8xf32>,
    } else {
    }
    return
  }
  func.func @transform_0(%arg0: i32, %arg1: i32) -> (i32, i32, i32) {
    %c0_i32 = arith.constant 0 : i32
    %c0_i32_0 = arith.constant 0 : i32
    %c0_i32_1 = arith.constant 0 : i32
    return %arg0, %c0_i32, %c0_i32_0 : i32, i32, i32
  }
  func.func @transform_1(%arg0: i32, %arg1: i32) -> (i32, i32) {
    %c0_i32 = arith.constant 0 : i32
    %c0_i32_0 = arith.constant 0 : i32
    %c0_i32_1 = arith.constant 0 : i32
    return %c0_i32, %c0_i32_0 : i32, i32
  }
  func.func @transform_2(%arg0: i32, %arg1: i32) -> (i32, i32, i32, i32) {
    %c0_i32 = arith.constant 0 : i32
    %c0_i32_0 = arith.constant 0 : i32
    %c0_i32_1 = arith.constant 0 : i32
    %c0_i32_2 = arith.constant 0 : i32
    return %arg1, %c0_i32, %c0_i32_0, %c0_i32_1 : i32, i32, i32, i32
  }
  func.func @transform_3(%arg0: i32, %arg1: i32) -> (i32, i32, i32, i32) {
    %c0_i32 = arith.constant 0 : i32
    %c0_i32_0 = arith.constant 0 : i32
    %c0_i32_1 = arith.constant 0 : i32
    %c0_i32_2 = arith.constant 0 : i32
    return %arg1, %c0_i32, %c0_i32_0, %c0_i32_1 : i32, i32, i32, i32
  }
  func.func @transform_4(%arg0: i32, %arg1: i32) -> (i32, i32, i32, i32) {
    %c0_i32 = arith.constant 0 : i32
    %c0_i32_0 = arith.constant 0 : i32
    %c0_i32_1 = arith.constant 0 : i32
    %c0_i32_2 = arith.constant 0 : i32
    return %arg1, %c0_i32, %c0_i32_0, %c0_i32_1 : i32, i32, i32, i32
  }
  func.func @transform_5(%arg0: i32, %arg1: i32) -> (i32, i32, i32) {
    %c0_i32 = arith.constant 0 : i32
    %c0_i32_0 = arith.constant 0 : i32
    %c0_i32_1 = arith.constant 0 : i32
    return %arg1, %c0_i32, %c0_i32_0 : i32, i32, i32
  }
  func.func @transform_6(%arg0: i32, %arg1: i32) -> (i32, i32, i32) {
    %c0_i32 = arith.constant 0 : i32
    %c0_i32_0 = arith.constant 0 : i32
    %c0_i32_1 = arith.constant 0 : i32
    return %arg1, %c0_i32, %c0_i32_0 : i32, i32, i32
  }
  func.func @transform_7(%arg0: i32, %arg1: i32) -> (i32, i32, i32) {
    %c0_i32 = arith.constant 0 : i32
    %c0_i32_0 = arith.constant 0 : i32
    %c0_i32_1 = arith.constant 0 : i32
    return %arg1, %c0_i32, %c0_i32_0 : i32, i32, i32
  }
  func.func @transform_8(%arg0: i32, %arg1: i32) -> (i32, i32, i32) {
    %c0_i32 = arith.constant 0 : i32
    %c0_i32_0 = arith.constant 0 : i32
    %c0_i32_1 = arith.constant 0 : i32
    return %arg1, %c0_i32, %c0_i32_0 : i32, i32, i32
  }
  func.func @transform_9(%arg0: i32, %arg1: i32) -> (i32, i32) {
    %c0_i32 = arith.constant 0 : i32
    %c0_i32_0 = arith.constant 0 : i32
    %c0_i32_1 = arith.constant 0 : i32
    return %c0_i32, %c0_i32_0 : i32, i32
  }
  func.func @transform_10(%arg0: i32, %arg1: i32) -> (i32, i32) {
    %c0_i32 = arith.constant 0 : i32
    %c0_i32_0 = arith.constant 0 : i32
    %c0_i32_1 = arith.constant 0 : i32
    return %c0_i32, %c0_i32_0 : i32, i32
  }
  func.func @transform_11(%arg0: i32, %arg1: i32) -> (i32, i32, i32) {
    %c0_i32 = arith.constant 0 : i32
    %c0_i32_0 = arith.constant 0 : i32
    %c0_i32_1 = arith.constant 0 : i32
    return %arg0, %c0_i32, %c0_i32_0 : i32, i32, i32
  }
}

</mosaic_0001>

<llo_original>
// kernel: pretrained_transformerxl_block_forward.1
$region0: #{pretrained_transformerxl_block_forward.1}
  #allocation0 [shape = 'u32[]', space=smem, size = 0x4, offset = 0x4, fixed_abs, tag = 'smem constant byte address 0x4 - core index']
  #allocation1 [shape = 'u32[144,128]{1,0:T(1,128)}', space=vmem, size = 0x12000, scoped, tag = 'internal scratch']
  #allocation2 [shape = 'f32[2,8,24]{2,1,0:T(8,128)}', space=vmem, size = 0x2000, scoped, tag = 'scratch operand']
  %s0 = inlined_call_operand.vmem [shape: f32[4,8,24], index: 0, kind: input, shape index: {}]
  %s1 = inlined_call_operand.vmem [shape: f32[8,24], index: 1, kind: input, shape index: {}]
  %s2 = inlined_call_operand.vmem [shape: bf16[2,12,24,6], index: 2, kind: input, shape index: {}]
  %s3 = inlined_call_operand.vmem [shape: f32[2,12,1,6], index: 3, kind: input, shape index: {}]
  %s4 = inlined_call_operand.vmem [shape: bf16[2,4,6,24], index: 4, kind: input, shape index: {}]
  %s5 = inlined_call_operand.vmem [shape: f32[2,6,24], index: 5, kind: input, shape index: {}]
  %s6 = inlined_call_operand.vmem [shape: bf16[2,24,48], index: 6, kind: input, shape index: {}]
  %s7 = inlined_call_operand.vmem [shape: f32[2,1,48], index: 7, kind: input, shape index: {}]
  %s8 = inlined_call_operand.vmem [shape: bf16[2,48,24], index: 8, kind: input, shape index: {}]
  %s9 = inlined_call_operand.vmem [shape: bf16[5,24], index: 9, kind: input, shape index: {}]
  %s10 = inlined_call_operand.vmem [shape: f32[5,1], index: 10, kind: input, shape index: {}]
  %s11 = inlined_call_operand.vmem [shape: f32[4,5,8], index: 11, kind: output, shape index: {}]
  %s12 = sld [smem:[#allocation0]]
  $region85: #{pretrained_transformerxl_block_forward.1} parent=0
    _
  %s14 = ssub.s32 1, %s12
  %s15 = scalar_select 0, %s14, %s12
  loop: start=0, step=1, limit=6
  $region2: #{pretrained_transformerxl_block_forward.1} parent=0 // loop_pre_header
    _
  $region3: #{pretrained_transformerxl_block_forward.1} parent=0 // loop_header
    %s17 = sphi 0, %s21
    %p18 = scmp.ge.s32.totalorder %s17, 6
    %s24 = sphi 0, %s36
    %s25 = sphi 0, %s32
    %s26 = sphi 0, %s24
    %s27 = sphi 0, %s25
    %s28 = sphi 0, %s26
    %s29 = sphi 0, %s27
    %s39 = sphi 0, %s41
    %s42 = sphi 0, %s39
    %s43 = sphi 0, %s42
    %s59 = sphi 0, %s43
    %s63 = sphi 0, %s63
    %s65 = sphi 0, %s63
    %s66 = sphi 0, %s65
    %s80 = sphi 0, %s66
    %s86 = sphi 0, %s88
    %s89 = sphi 0, %s86
    %s90 = sphi 0, %s89
    %s106 = sphi 0, %s90
    %s112 = sphi 0, %s114
    %s115 = sphi 0, %s112
    %s116 = sphi 0, %s115
    %s132 = sphi 0, %s116
    %s138 = sphi 0, %s140
    %s141 = sphi 0, %s138
    %s142 = sphi 0, %s141
    %s158 = sphi 0, %s142
    %s164 = sphi 0, %s166
    %s167 = sphi 0, %s164
    %s168 = sphi 0, %s167
    %s184 = sphi 0, %s168
    %s190 = sphi 0, %s192
    %s193 = sphi 0, %s190
    %s194 = sphi 0, %s193
    %s210 = sphi 0, %s194
    %s216 = sphi 0, %s218
    %s219 = sphi 0, %s216
    %s220 = sphi 0, %s219
    %s236 = sphi 0, %s220
    %s242 = sphi 0, %s244
    %s245 = sphi 0, %s242
    %s246 = sphi 0, %s245
    %s262 = sphi 0, %s246
    %s266 = sphi 0, %s266
    %s268 = sphi 0, %s266
    %s269 = sphi 0, %s268
    %s283 = sphi 0, %s269
    %s287 = sphi 0, %s287
    %s289 = sphi 0, %s287
    %s290 = sphi 0, %s289
    %s304 = sphi 0, %s290
    %s310 = sphi 0, %s312
    %s313 = sphi 0, %s310
    %s314 = sphi 0, %s313
    %s330 = sphi 0, %s314
  $region4: #{pretrained_transformerxl_block_forward.1} parent=0 // loop_header_branch
    %20 = sbr.rel (%p18) target = $region8
  $region5: #{pretrained_transformerxl_block_forward.1} parent=0 // loop_body
    %s22 = ssub.s32 %s17, 1
    %s23 = ssub.s32 %s17, 2
    %s30 = sadd.s32 1, %s25
    %p31 = scmp.ge.s32.totalorder %s30, 2
    %s32 = scalar_select %p31, 0, %s30
    %s33 = sadd.s32 1, %s24
    %s34 = scalar_select %p31, %s33, %s24
    %p35 = scmp.ge.s32.totalorder %s34, 2
    %s36 = scalar_select %p35, 0, %s34
    %s37 = ssub.s32 %s24, %s36
    %p38 = scmp.eq.s32.totalorder %s37, 0
    %s40 = sadd.s32 %s39, 1
    %s41 = scalar_select %p38, %s39, %s40
    %p44 = pneg %p38
    %p45 = scmp.eq.s32.totalorder %s17, 3
    %p46 = por %p44, %p45
    %p47 = scmp.ne.s32.totalorder %s39, %s42
    %p48 = scmp.eq.s32.totalorder %s17, 0
    %p49 = por %p47, %p48
    %p50 = scmp.ne.s32.totalorder %s39, %s42
    %p51 = scmp.eq.s32.totalorder %s22, 3
    %p52 = por %p50, %p51
    %p53 = scmp.ne.s32.totalorder %s42, %s43
    %p54 = scmp.eq.s32.totalorder %s22, 0
    %p55 = por %p53, %p54
    %p56 = scmp.ne.s32.totalorder %s42, %s43
    %p57 = scmp.eq.s32.totalorder %s23, 3
    %p58 = por %p56, %p57
    %p60 = scmp.ne.s32.totalorder %s43, %s59
    %p61 = scmp.eq.s32.totalorder %s23, 0
    %p62 = por %p60, %p61
    %s64 = sadd.s32 %s63, 1
    %p67 = scmp.eq.s32.totalorder %s17, 3
    %p68 = scmp.ne.s32.totalorder %s63, %s65
    %p69 = scmp.eq.s32.totalorder %s17, 0
    %p70 = por %p68, %p69
    %p71 = scmp.ne.s32.totalorder %s63, %s65
    %p72 = scmp.eq.s32.totalorder %s22, 3
    %p73 = por %p71, %p72
    %p74 = scmp.ne.s32.totalorder %s65, %s66
    %p75 = scmp.eq.s32.totalorder %s22, 0
    %p76 = por %p74, %p75
    %p77 = scmp.ne.s32.totalorder %s65, %s66
    %p78 = scmp.eq.s32.totalorder %s23, 3
    %p79 = por %p77, %p78
    %p81 = scmp.ne.s32.totalorder %s66, %s80
    %p82 = scmp.eq.s32.totalorder %s23, 0
    %p83 = por %p81, %p82
    %s84 = ssub.s32 %s25, %s32
    %p85 = scmp.eq.s32.totalorder %s84, 0
    %s87 = sadd.s32 %s86, 1
    %s88 = scalar_select %p85, %s86, %s87
    %p91 = pneg %p85
    %p92 = scmp.eq.s32.totalorder %s17, 3
    %p93 = por %p91, %p92
    %p94 = scmp.ne.s32.totalorder %s86, %s89
    %p95 = scmp.eq.s32.totalorder %s17, 0
    %p96 = por %p94, %p95
    %p97 = scmp.ne.s32.totalorder %s86, %s89
    %p98 = scmp.eq.s32.totalorder %s22, 3
    %p99 = por %p97, %p98
    %p100 = scmp.ne.s32.totalorder %s89, %s90
    %p101 = scmp.eq.s32.totalorder %s22, 0
    %p102 = por %p100, %p101
    %p103 = scmp.ne.s32.totalorder %s89, %s90
    %p104 = scmp.eq.s32.totalorder %s23, 3
    %p105 = por %p103, %p104
    %p107 = scmp.ne.s32.totalorder %s90, %s106
    %p108 = scmp.eq.s32.totalorder %s23, 0
    %p109 = por %p107, %p108
    %s110 = ssub.s32 %s25, %s32
    %p111 = scmp.eq.s32.totalorder %s110, 0
    %s113 = sadd.s32 %s112, 1
    %s114 = scalar_select %p111, %s112, %s113
    %p117 = pneg %p111
    %p118 = scmp.eq.s32.totalorder %s17, 3
    %p119 = por %p117, %p118
    %p120 = scmp.ne.s32.totalorder %s112, %s115
    %p121 = scmp.eq.s32.totalorder %s17, 0
    %p122 = por %p120, %p121
    %p123 = scmp.ne.s32.totalorder %s112, %s115
    %p124 = scmp.eq.s32.totalorder %s22, 3
    %p125 = por %p123, %p124
    %p126 = scmp.ne.s32.totalorder %s115, %s116
    %p127 = scmp.eq.s32.totalorder %s22, 0
    %p128 = por %p126, %p127
    %p129 = scmp.ne.s32.totalorder %s115, %s116
    %p130 = scmp.eq.s32.totalorder %s23, 3
    %p131 = por %p129, %p130
    %p133 = scmp.ne.s32.totalorder %s116, %s132
    %p134 = scmp.eq.s32.totalorder %s23, 0
    %p135 = por %p133, %p134
    %s136 = ssub.s32 %s25, %s32
    %p137 = scmp.eq.s32.totalorder %s136, 0
    %s139 = sadd.s32 %s138, 1
    %s140 = scalar_select %p137, %s138, %s139
    %p143 = pneg %p137
    %p144 = scmp.eq.s32.totalorder %s17, 3
    %p145 = por %p143, %p144
    %p146 = scmp.ne.s32.totalorder %s138, %s141
    %p147 = scmp.eq.s32.totalorder %s17, 0
    %p148 = por %p146, %p147
    %p149 = scmp.ne.s32.totalorder %s138, %s141
    %p150 = scmp.eq.s32.totalorder %s22, 3
    %p151 = por %p149, %p150
    %p152 = scmp.ne.s32.totalorder %s141, %s142
    %p153 = scmp.eq.s32.totalorder %s22, 0
    %p154 = por %p152, %p153
    %p155 = scmp.ne.s32.totalorder %s141, %s142
    %p156 = scmp.eq.s32.totalorder %s23, 3
    %p157 = por %p155, %p156
    %p159 = scmp.ne.s32.totalorder %s142, %s158
    %p160 = scmp.eq.s32.totalorder %s23, 0
    %p161 = por %p159, %p160
    %s162 = ssub.s32 %s25, %s32
    %p163 = scmp.eq.s32.totalorder %s162, 0
    %s165 = sadd.s32 %s164, 1
    %s166 = scalar_select %p163, %s164, %s165
    %p169 = pneg %p163
    %p170 = scmp.eq.s32.totalorder %s17, 3
    %p171 = por %p169, %p170
    %p172 = scmp.ne.s32.totalorder %s164, %s167
    %p173 = scmp.eq.s32.totalorder %s17, 0
    %p174 = por %p172, %p173
    %p175 = scmp.ne.s32.totalorder %s164, %s167
    %p176 = scmp.eq.s32.totalorder %s22, 3
    %p177 = por %p175, %p176
    %p178 = scmp.ne.s32.totalorder %s167, %s168
    %p179 = scmp.eq.s32.totalorder %s22, 0
    %p180 = por %p178, %p179
    %p181 = scmp.ne.s32.totalorder %s167, %s168
    %p182 = scmp.eq.s32.totalorder %s23, 3
    %p183 = por %p181, %p182
    %p185 = scmp.ne.s32.totalorder %s168, %s184
    %p186 = scmp.eq.s32.totalorder %s23, 0
    %p187 = por %p185, %p186
    %s188 = ssub.s32 %s25, %s32
    %p189 = scmp.eq.s32.totalorder %s188, 0
    %s191 = sadd.s32 %s190, 1
    %s192 = scalar_select %p189, %s190, %s191
    %p195 = pneg %p189
    %p196 = scmp.eq.s32.totalorder %s17, 3
    %p197 = por %p195, %p196
    %p198 = scmp.ne.s32.totalorder %s190, %s193
    %p199 = scmp.eq.s32.totalorder %s17, 0
    %p200 = por %p198, %p199
    %p201 = scmp.ne.s32.totalorder %s190, %s193
    %p202 = scmp.eq.s32.totalorder %s22, 3
    %p203 = por %p201, %p202
    %p204 = scmp.ne.s32.totalorder %s193, %s194
    %p205 = scmp.eq.s32.totalorder %s22, 0
    %p206 = por %p204, %p205
    %p207 = scmp.ne.s32.totalorder %s193, %s194
    %p208 = scmp.eq.s32.totalorder %s23, 3
    %p209 = por %p207, %p208
    %p211 = scmp.ne.s32.totalorder %s194, %s210
    %p212 = scmp.eq.s32.totalorder %s23, 0
    %p213 = por %p211, %p212
    %s214 = ssub.s32 %s25, %s32
    %p215 = scmp.eq.s32.totalorder %s214, 0
    %s217 = sadd.s32 %s216, 1
    %s218 = scalar_select %p215, %s216, %s217
    %p221 = pneg %p215
    %p222 = scmp.eq.s32.totalorder %s17, 3
    %p223 = por %p221, %p222
    %p224 = scmp.ne.s32.totalorder %s216, %s219
    %p225 = scmp.eq.s32.totalorder %s17, 0
    %p226 = por %p224, %p225
    %p227 = scmp.ne.s32.totalorder %s216, %s219
    %p228 = scmp.eq.s32.totalorder %s22, 3
    %p229 = por %p227, %p228
    %p230 = scmp.ne.s32.totalorder %s219, %s220
    %p231 = scmp.eq.s32.totalorder %s22, 0
    %p232 = por %p230, %p231
    %p233 = scmp.ne.s32.totalorder %s219, %s220
    %p234 = scmp.eq.s32.totalorder %s23, 3
    %p235 = por %p233, %p234
    %p237 = scmp.ne.s32.totalorder %s220, %s236
    %p238 = scmp.eq.s32.totalorder %s23, 0
    %p239 = por %p237, %p238
    %s240 = ssub.s32 %s25, %s32
    %p241 = scmp.eq.s32.totalorder %s240, 0
    %s243 = sadd.s32 %s242, 1
    %s244 = scalar_select %p241, %s242, %s243
    %p247 = pneg %p241
    %p248 = scmp.eq.s32.totalorder %s17, 3
    %p249 = por %p247, %p248
    %p250 = scmp.ne.s32.totalorder %s242, %s245
    %p251 = scmp.eq.s32.totalorder %s17, 0
    %p252 = por %p250, %p251
    %p253 = scmp.ne.s32.totalorder %s242, %s245
    %p254 = scmp.eq.s32.totalorder %s22, 3
    %p255 = por %p253, %p254
    %p256 = scmp.ne.s32.totalorder %s245, %s246
    %p257 = scmp.eq.s32.totalorder %s22, 0
    %p258 = por %p256, %p257
    %p259 = scmp.ne.s32.totalorder %s245, %s246
    %p260 = scmp.eq.s32.totalorder %s23, 3
    %p261 = por %p259, %p260
    %p263 = scmp.ne.s32.totalorder %s246, %s262
    %p264 = scmp.eq.s32.totalorder %s23, 0
    %p265 = por %p263, %p264
    %s267 = sadd.s32 %s266, 1
    %p270 = scmp.eq.s32.totalorder %s17, 3
    %p271 = scmp.ne.s32.totalorder %s266, %s268
    %p272 = scmp.eq.s32.totalorder %s17, 0
    %p273 = por %p271, %p272
    %p274 = scmp.ne.s32.totalorder %s266, %s268
    %p275 = scmp.eq.s32.totalorder %s22, 3
    %p276 = por %p274, %p275
    %p277 = scmp.ne.s32.totalorder %s268, %s269
    %p278 = scmp.eq.s32.totalorder %s22, 0
    %p279 = por %p277, %p278
    %p280 = scmp.ne.s32.totalorder %s268, %s269
    %p281 = scmp.eq.s32.totalorder %s23, 3
    %p282 = por %p280, %p281
    %p284 = scmp.ne.s32.totalorder %s269, %s283
    %p285 = scmp.eq.s32.totalorder %s23, 0
    %p286 = por %p284, %p285
    %s288 = sadd.s32 %s287, 1
    %p291 = scmp.eq.s32.totalorder %s17, 3
    %p292 = scmp.ne.s32.totalorder %s287, %s289
    %p293 = scmp.eq.s32.totalorder %s17, 0
    %p294 = por %p292, %p293
    %p295 = scmp.ne.s32.totalorder %s287, %s289
    %p296 = scmp.eq.s32.totalorder %s22, 3
    %p297 = por %p295, %p296
    %p298 = scmp.ne.s32.totalorder %s289, %s290
    %p299 = scmp.eq.s32.totalorder %s22, 0
    %p300 = por %p298, %p299
    %p301 = scmp.ne.s32.totalorder %s289, %s290
    %p302 = scmp.eq.s32.totalorder %s23, 3
    %p303 = por %p301, %p302
    %p305 = scmp.ne.s32.totalorder %s290, %s304
    %p306 = scmp.eq.s32.totalorder %s23, 0
    %p307 = por %p305, %p306
    %s308 = ssub.s32 %s24, %s36
    %p309 = scmp.eq.s32.totalorder %s308, 0
    %s311 = sadd.s32 %s310, 1
    %s312 = scalar_select %p309, %s310, %s311
    %p315 = pneg %p309
    %p316 = scmp.eq.s32.totalorder %s17, 3
    %p317 = por %p315, %p316
    %p318 = scmp.ne.s32.totalorder %s310, %s313
    %p319 = scmp.eq.s32.totalorder %s17, 0
    %p320 = por %p318, %p319
    %p321 = scmp.ne.s32.totalorder %s310, %s313
    %p322 = scmp.eq.s32.totalorder %s22, 3
    %p323 = por %p321, %p322
    %p324 = scmp.ne.s32.totalorder %s313, %s314
    %p325 = scmp.eq.s32.totalorder %s22, 0
    %p326 = por %p324, %p325
    %p327 = scmp.ne.s32.totalorder %s313, %s314
    %p328 = scmp.eq.s32.totalorder %s23, 3
    %p329 = por %p327, %p328
    %p331 = scmp.ne.s32.totalorder %s314, %s330
    %p332 = scmp.eq.s32.totalorder %s23, 0
    %p333 = por %p331, %p332
    %p334 = scmp.le.s32.totalorder 1, %s17
    %p335 = scmp.lt.s32.totalorder %s17, 5
    %p336 = pnand %p334, %p335
    %p337 = pneg %p336
    // Predicated region
    $region9: #{pretrained_transformerxl_block_forward.1} parent=5 // pred_check
      _
    $region10: #{pretrained_transformerxl_block_forward.1} parent=5 // pred_check_branch
      %339 = sbr.rel (%p336) target = $region12
    $region11: #{pretrained_transformerxl_block_forward.1} parent=5 // pred_region
      %s340 = ssub.s32 %s17, 1
      // Predicated region
      $region13: #{pretrained_transformerxl_block_forward.1} parent=11 // pred_check
        %p341 = pneg %p76
      $region14: #{pretrained_transformerxl_block_forward.1} parent=11 // pred_check_branch
        %343 = sbr.rel (%p341) target = $region16
      $region15: #{pretrained_transformerxl_block_forward.1} parent=11 // pred_region
        _
      $region16: #{pretrained_transformerxl_block_forward.1} parent=11 // pred_fallthru
        _
      // Predicated region
      $region17: #{pretrained_transformerxl_block_forward.1} parent=11 // pred_check
        %p344 = pneg %p279
      $region18: #{pretrained_transformerxl_block_forward.1} parent=11 // pred_check_branch
        %346 = sbr.rel (%p344) target = $region20
      $region19: #{pretrained_transformerxl_block_forward.1} parent=11 // pred_region
        _
      $region20: #{pretrained_transformerxl_block_forward.1} parent=11 // pred_fallthru
        _
      // Predicated region
      $region21: #{pretrained_transformerxl_block_forward.1} parent=11 // pred_check
        %p347 = pneg %p300
      $region22: #{pretrained_transformerxl_block_forward.1} parent=11 // pred_check_branch
        %349 = sbr.rel (%p347) target = $region24
      $region23: #{pretrained_transformerxl_block_forward.1} parent=11 // pred_region
        _
      $region24: #{pretrained_transformerxl_block_forward.1} parent=11 // pred_fallthru
        _
    $region12: #{pretrained_transformerxl_block_forward.1} parent=5 // pred_fallthru
      _
    %p350 = scmp.lt.s32.totalorder %s17, 4
    // Predicated region
    $region25: #{pretrained_transformerxl_block_forward.1} parent=5 // pred_check
      %p351 = pneg %p350
    $region26: #{pretrained_transformerxl_block_forward.1} parent=5 // pred_check_branch
      %353 = sbr.rel (%p351) target = $region28
    $region27: #{pretrained_transformerxl_block_forward.1} parent=5 // pred_region
      // Predicated region
      $region29: #{pretrained_transformerxl_block_forward.1} parent=27 // pred_check
        %p354 = pneg %p49
      $region30: #{pretrained_transformerxl_block_forward.1} parent=27 // pred_check_branch
        %356 = sbr.rel (%p354) target = $region32
      $region31: #{pretrained_transformerxl_block_forward.1} parent=27 // pred_region
        %s357 = smul.u32 2, %s24
        %p358 = scmp.lt.s32.totalorder %s357, 3
        %s359 = scalar_select %p358, %s357, 3
        %s360 = smul.addr %s359, 8
        %s361 = scalar_lea.vmem %s0, %s360
        %s362 = smul.u32 2, %s24
      $region32: #{pretrained_transformerxl_block_forward.1} parent=27 // pred_fallthru
        _
      // Predicated region
      $region33: #{pretrained_transformerxl_block_forward.1} parent=27 // pred_check
        %p363 = pneg %p96
      $region34: #{pretrained_transformerxl_block_forward.1} parent=27 // pred_check_branch
        %365 = sbr.rel (%p363) target = $region36
      $region35: #{pretrained_transformerxl_block_forward.1} parent=27 // pred_region
        %p366 = scmp.lt.s32.totalorder %s25, 1
        %s367 = scalar_select %p366, %s25, 1
        %s368 = smul.addr %s367, 36
        %s369 = smul.addr %s368, 4
        %s370 = scalar_lea.vmem %s2, %s369
      $region36: #{pretrained_transformerxl_block_forward.1} parent=27 // pred_fallthru
        _
      // Predicated region
      $region37: #{pretrained_transformerxl_block_forward.1} parent=27 // pred_check
        %p371 = pneg %p122
      $region38: #{pretrained_transformerxl_block_forward.1} parent=27 // pred_check_branch
        %373 = sbr.rel (%p371) target = $region40
      $region39: #{pretrained_transformerxl_block_forward.1} parent=27 // pred_region
        %p374 = scmp.lt.s32.totalorder %s25, 1
        %s375 = scalar_select %p374, %s25, 1
        %s376 = smul.addr %s375, 12
        %s377 = scalar_lea.vmem %s3, %s376
      $region40: #{pretrained_transformerxl_block_forward.1} parent=27 // pred_fallthru
        _
      // Predicated region
      $region41: #{pretrained_transformerxl_block_forward.1} parent=27 // pred_check
        %p378 = pneg %p148
      $region42: #{pretrained_transformerxl_block_forward.1} parent=27 // pred_check_branch
        %380 = sbr.rel (%p378) target = $region44
      $region43: #{pretrained_transformerxl_block_forward.1} parent=27 // pred_region
        %p381 = scmp.lt.s32.totalorder %s25, 1
        %s382 = scalar_select %p381, %s25, 1
        %s383 = smul.addr %s382, 4
        %s384 = smul.addr %s383, 4
        %s385 = scalar_lea.vmem %s4, %s384
      $region44: #{pretrained_transformerxl_block_forward.1} parent=27 // pred_fallthru
        _
      // Predicated region
      $region45: #{pretrained_transformerxl_block_forward.1} parent=27 // pred_check
        %p386 = pneg %p174
      $region46: #{pretrained_transformerxl_block_forward.1} parent=27 // pred_check_branch
        %388 = sbr.rel (%p386) target = $region48
      $region47: #{pretrained_transformerxl_block_forward.1} parent=27 // pred_region
        %p389 = scmp.lt.s32.totalorder %s25, 1
        %s390 = scalar_select %p389, %s25, 1
        %s391 = smul.addr %s390, 8
        %s392 = scalar_lea.vmem %s5, %s391
      $region48: #{pretrained_transformerxl_block_forward.1} parent=27 // pred_fallthru
        _
      // Predicated region
      $region49: #{pretrained_transformerxl_block_forward.1} parent=27 // pred_check
        %p393 = pneg %p200
      $region50: #{pretrained_transformerxl_block_forward.1} parent=27 // pred_check_branch
        %395 = sbr.rel (%p393) target = $region52
      $region51: #{pretrained_transformerxl_block_forward.1} parent=27 // pred_region
        %p396 = scmp.lt.s32.totalorder %s25, 1
        %s397 = scalar_select %p396, %s25, 1
        %s398 = smul.addr %s397, 3
        %s399 = smul.addr %s398, 4
        %s400 = scalar_lea.vmem %s6, %s399
      $region52: #{pretrained_transformerxl_block_forward.1} parent=27 // pred_fallthru
        _
      // Predicated region
      $region53: #{pretrained_transformerxl_block_forward.1} parent=27 // pred_check
        %p401 = pneg %p226
      $region54: #{pretrained_transformerxl_block_forward.1} parent=27 // pred_check_branch
        %403 = sbr.rel (%p401) target = $region56
      $region55: #{pretrained_transformerxl_block_forward.1} parent=27 // pred_region
        %p404 = scmp.lt.s32.totalorder %s25, 1
        %s405 = scalar_select %p404, %s25, 1
        %s406 = scalar_lea.vmem %s7, %s405
      $region56: #{pretrained_transformerxl_block_forward.1} parent=27 // pred_fallthru
        _
      // Predicated region
      $region57: #{pretrained_transformerxl_block_forward.1} parent=27 // pred_check
        %p407 = pneg %p252
      $region58: #{pretrained_transformerxl_block_forward.1} parent=27 // pred_check_branch
        %409 = sbr.rel (%p407) target = $region60
      $region59: #{pretrained_transformerxl_block_forward.1} parent=27 // pred_region
        %p410 = scmp.lt.s32.totalorder %s25, 1
        %s411 = scalar_select %p410, %s25, 1
        %s412 = smul.addr %s411, 6
        %s413 = smul.addr %s412, 4
        %s414 = scalar_lea.vmem %s8, %s413
      $region60: #{pretrained_transformerxl_block_forward.1} parent=27 // pred_fallthru
        _
    $region28: #{pretrained_transformerxl_block_forward.1} parent=5 // pred_fallthru
      _
    %p415 = scmp.le.s32.totalorder 1, %s17
    %p416 = scmp.lt.s32.totalorder %s17, 5
    %p417 = pnand %p415, %p416
    %p418 = pneg %p417
    // Predicated region
    $region61: #{pretrained_transformerxl_block_forward.1} parent=5 // pred_check
      _
    $region62: #{pretrained_transformerxl_block_forward.1} parent=5 // pred_check_branch
      %420 = sbr.rel (%p417) target = $region64
    $region63: #{pretrained_transformerxl_block_forward.1} parent=5 // pred_region
      %s421 = ssub.s32 %s17, 1
      %s422 = smul.u32 2, %s26
      %p423 = scmp.lt.s32.totalorder %s422, 3
      %s424 = scalar_select %p423, %s422, 3
      %s425 = smul.addr %s424, 8
      %s426 = scalar_lea.vmem %s0, %s425
      %p427 = pneg %p55
      %p428 = pneg %p52
      %p429 = pneg %p76
      %p430 = pneg %p73
      %p431 = scmp.lt.s32.totalorder %s27, 1
      %s432 = scalar_select %p431, %s27, 1
      %s433 = smul.addr %s432, 36
      %s434 = smul.addr %s433, 4
      %s435 = scalar_lea.vmem %s2, %s434
      %p436 = pneg %p102
      %p437 = pneg %p99
      %p438 = scmp.lt.s32.totalorder %s27, 1
      %s439 = scalar_select %p438, %s27, 1
      %s440 = smul.addr %s439, 12
      %s441 = scalar_lea.vmem %s3, %s440
      %p442 = pneg %p128
      %p443 = pneg %p125
      %p444 = scmp.lt.s32.totalorder %s27, 1
      %s445 = scalar_select %p444, %s27, 1
      %s446 = smul.addr %s445, 4
      %s447 = smul.addr %s446, 4
      %s448 = scalar_lea.vmem %s4, %s447
      %p449 = pneg %p154
      %p450 = pneg %p151
      %p451 = scmp.lt.s32.totalorder %s27, 1
      %s452 = scalar_select %p451, %s27, 1
      %s453 = smul.addr %s452, 8
      %s454 = scalar_lea.vmem %s5, %s453
      %p455 = pneg %p180
      %p456 = pneg %p177
      %p457 = scmp.lt.s32.totalorder %s27, 1
      %s458 = scalar_select %p457, %s27, 1
      %s459 = smul.addr %s458, 3
      %s460 = smul.addr %s459, 4
      %s461 = scalar_lea.vmem %s6, %s460
      %p462 = pneg %p206
      %p463 = pneg %p203
      %p464 = scmp.lt.s32.totalorder %s27, 1
      %s465 = scalar_select %p464, %s27, 1
      %s466 = scalar_lea.vmem %s7, %s465
      %p467 = pneg %p232
      %p468 = pneg %p229
      %p469 = scmp.lt.s32.totalorder %s27, 1
      %s470 = scalar_select %p469, %s27, 1
      %s471 = smul.addr %s470, 6
      %s472 = smul.addr %s471, 4
      %s473 = scalar_lea.vmem %s8, %s472
      %p474 = pneg %p258
      %p475 = pneg %p255
      %p476 = pneg %p279
      %p477 = pneg %p276
      %p478 = pneg %p300
      %p479 = pneg %p297
      %p480 = pneg %p326
      %p481 = pneg %p323
      %s482 = smul.u32 2, %s26
      %p483 = scmp.lt.s32.totalorder %s482, 3
      %s484 = scalar_select %p483, %s482, 3
      %s485 = smul.addr %s484, 8
      %s486 = scalar_lea.vmem %s11, %s485
      %s487 = smul.u32 2, %s26
      %p488 = scmp.lt.s32.totalorder %s487, 3
      %s489 = scalar_select %p488, %s487, 3
      %s490 = smul.addr %s489, 8
      %s491 = scalar_lea.vmem %s0, %s490
      %s492 = smul.u32 2, %s26
      %p493 = scmp.lt.s32.totalorder %s27, 1
      %s494 = scalar_select %p493, %s27, 1
      %s495 = smul.addr %s494, 36
      %s496 = smul.addr %s495, 4
      %s497 = scalar_lea.vmem %s2, %s496
      %p498 = scmp.lt.s32.totalorder %s27, 1
      %s499 = scalar_select %p498, %s27, 1
      %s500 = smul.addr %s499, 12
      %s501 = scalar_lea.vmem %s3, %s500
      %p502 = scmp.lt.s32.totalorder %s27, 1
      %s503 = scalar_select %p502, %s27, 1
      %s504 = smul.addr %s503, 4
      %s505 = smul.addr %s504, 4
      %s506 = scalar_lea.vmem %s4, %s505
      %p507 = scmp.lt.s32.totalorder %s27, 1
      %s508 = scalar_select %p507, %s27, 1
      %s509 = smul.addr %s508, 8
      %s510 = scalar_lea.vmem %s5, %s509
      %p511 = scmp.lt.s32.totalorder %s27, 1
      %s512 = scalar_select %p511, %s27, 1
      %s513 = smul.addr %s512, 3
      %s514 = smul.addr %s513, 4
      %s515 = scalar_lea.vmem %s6, %s514
      %p516 = scmp.lt.s32.totalorder %s27, 1
      %s517 = scalar_select %p516, %s27, 1
      %s518 = scalar_lea.vmem %s7, %s517
      %p519 = scmp.lt.s32.totalorder %s27, 1
      %s520 = scalar_select %p519, %s27, 1
      %s521 = smul.addr %s520, 6
      %s522 = smul.addr %s521, 4
      %s523 = scalar_lea.vmem %s8, %s522
      %s524 = smul.u32 2, %s26
      %p525 = scmp.lt.s32.totalorder %s524, 3
      %s526 = scalar_select %p525, %s524, 3
      %s527 = smul.addr %s526, 8
      %s528 = scalar_lea.vmem %s11, %s527
      %s529 = smul.u32 2, %s26
      %p531 = scmp.eq.s32.totalorder %s27, 0
      // Predicated region
      $region65: #{pretrained_transformerxl_block_forward.1} parent=63 // pred_check
        %p532 = pneg %p531
      $region66: #{pretrained_transformerxl_block_forward.1} parent=63 // pred_check_branch
        %534 = sbr.rel (%p532) target = $region68
      $region67: #{pretrained_transformerxl_block_forward.1} parent=63 // pred_region
        %v535 = vld [vmem:[%s491] sm:$0xff]
        %v536 = vld [vmem:[%s491 + $0x8] sm:$0xff]
        %v537 = vld [vmem:[%s1] sm:$0xff]
        %v538 = vadd.f32 %v535, %v537
        %v539 = vadd.f32 %v536, %v537
        %vm540 = vcmask 195584
        %541 = vst.msk [vmem:[#allocation2] sm:$0xff] %vm540, %v538
        %542 = vst.msk [vmem:[#allocation2 + $0x8] sm:$0xff] %vm540, %v539
      $region68: #{pretrained_transformerxl_block_forward.1} parent=63 // pred_fallthru
        _
      %v543 = vld [vmem:[#allocation2] sm:$0xff]
      %v544 = vld [vmem:[#allocation2 + $0x8] sm:$0xff]
      %v545 = vpack.c.bf16 %v544, %v543
      %v546 = vld [vmem:[%s510] sm:$0x3f]
      %v547 = vld [vmem:[%s497] sm:$0xf]
      %v548 = vld [vmem:[%s497 + $0x4] sm:$0xf]
      %v549 = vld [vmem:[%s497 + $0x8] sm:$0xf]
      %v550 = vld [vmem:[%s501] sm:$0x1]
      %v552 = vlaneseq
      %v553 = vshrl.u32 %v552, 7
      %v554 = vsub.s32 0, %v553
      %v555 = vrot.slane %v550, %v554
      %v560 = vunpack.c.l.b16 %v547
      %v561 = vunpack.c.l.b16 %v548
      %v562 = vunpack.c.l.b16 %v549
      %v563 = vpack.c.b16 %v561, %v560
      %v564 = vpack.c.b16 %v562, %v562
      %vm566 = vcmask 195584
      %v568 = vsel %vm566, %v545, 0
      %vm570 = vcmask 1043456
      %v572 = vsel %vm570, %v564, 0
      %574 = vmatprep.subr.bf16.mxu0 0
      %575 = vmatpush1.bf16.msra.mxu0 %v563
      %576 = vmatprep.subr.bf16.mxu0 0
      %577 = vmatpush1.bf16.msra.mxu0 %v572
      %578 = vmatprep.subr.bf16.mxu0 0
      %579 = vmatpush1.bf16.msra.mxu0 0
      %580 = vmatprep.subr.bf16.mxu0 0
      %581 = vmatpush1.bf16.msra.mxu0 0
      %582 = vmatprep.subr.bf16.mxu0 0
      %583 = vmatpush1.bf16.msra.mxu0 0
      %584 = vmatprep.subr.bf16.mxu0 0
      %585 = vmatpush1.bf16.msra.mxu0 0
      %586 = vmatprep.subr.bf16.mxu0 0
      %587 = vmatpush1.bf16.msra.mxu0 0
      %588 = vmatprep.subr.bf16.mxu0 0
      %589 = vmatpush1.bf16.msra.mxu0 0
      %590 = vmatprep.subr.bf16.mxu0 0
      %591 = vmatpush1.bf16.msra.mxu0 0
      %592 = vmatprep.subr.bf16.mxu0 0
      %593 = vmatpush1.bf16.msra.mxu0 0
      %594 = vmatprep.subr.bf16.mxu0 0
      %595 = vmatpush1.bf16.msra.mxu0 0
      %596 = vmatprep.subr.bf16.mxu0 0
      %597 = vmatpush1.bf16.msra.mxu0 0
      %598 = vmatprep.subr.bf16.mxu0 0
      %599 = vmatpush1.bf16.msra.mxu0 0
      %600 = vmatprep.subr.bf16.mxu0 0
      %601 = vmatpush1.bf16.msra.mxu0 0
      %602 = vmatprep.subr.bf16.mxu0 0
      %603 = vmatpush1.bf16.msra.mxu0 0
      %604 = vmatprep.subr.bf16.mxu0 0
      %605 = vmatpush1.bf16.msra.mxu0 0
      %606 = vmatprep.mubr.bf16.mxu0 0
      %607 = vmatmul.mubr.bf16.gmra.mrb[0].mxu0 %v568
      %v608 = vpop.f32.mrb[0].mxu0
      %v609 = vadd.f32 %v555, %v608
      %v610 = vpop.f32.mrb[0].mxu0
      %v611 = vpop.f32.mrb[0].mxu0
      %v612 = vadd.f32 %v555, %v611
      %v613 = vpop.f32.mrb[0].mxu0
      %614 = vdwg.mxu0
      %s615 = scalar_lea.vmem %s497, 48
      %v616 = vld [vmem:[%s615] sm:$0xf]
      %v617 = vld [vmem:[%s615 + $0x4] sm:$0xf]
      %v618 = vld [vmem:[%s615 + $0x8] sm:$0xf]
      %s619 = scalar_lea.vmem %s501, 4
      %v620 = vld [vmem:[%s619] sm:$0x1]
      %v622 = vlaneseq
      %v623 = vshrl.u32 %v622, 7
      %v624 = vsub.s32 0, %v623
      %v625 = vrot.slane %v620, %v624
      %v630 = vunpack.c.l.b16 %v616
      %v631 = vunpack.c.l.b16 %v617
      %v632 = vunpack.c.l.b16 %v618
      %v633 = vpack.c.b16 %v631, %v630
      %v634 = vpack.c.b16 %v632, %v632
      %v637 = vsel %vm570, %v634, 0
      %639 = vmatprep.subr.bf16.mxu0 0
      %640 = vmatpush1.bf16.msra.mxu0 %v633
      %641 = vmatprep.subr.bf16.mxu0 0
      %642 = vmatpush1.bf16.msra.mxu0 %v637
      %643 = vmatprep.subr.bf16.mxu0 0
      %644 = vmatpush1.bf16.msra.mxu0 0
      %645 = vmatprep.subr.bf16.mxu0 0
      %646 = vmatpush1.bf16.msra.mxu0 0
      %647 = vmatprep.subr.bf16.mxu0 0
      %648 = vmatpush1.bf16.msra.mxu0 0
      %649 = vmatprep.subr.bf16.mxu0 0
      %650 = vmatpush1.bf16.msra.mxu0 0
      %651 = vmatprep.subr.bf16.mxu0 0
      %652 = vmatpush1.bf16.msra.mxu0 0
      %653 = vmatprep.subr.bf16.mxu0 0
      %654 = vmatpush1.bf16.msra.mxu0 0
      %655 = vmatprep.subr.bf16.mxu0 0
      %656 = vmatpush1.bf16.msra.mxu0 0
      %657 = vmatprep.subr.bf16.mxu0 0
      %658 = vmatpush1.bf16.msra.mxu0 0
      %659 = vmatprep.subr.bf16.mxu0 0
      %660 = vmatpush1.bf16.msra.mxu0 0
      %661 = vmatprep.subr.bf16.mxu0 0
      %662 = vmatpush1.bf16.msra.mxu0 0
      %663 = vmatprep.subr.bf16.mxu0 0
      %664 = vmatpush1.bf16.msra.mxu0 0
      %665 = vmatprep.subr.bf16.mxu0 0
      %666 = vmatpush1.bf16.msra.mxu0 0
      %667 = vmatprep.subr.bf16.mxu0 0
      %668 = vmatpush1.bf16.msra.mxu0 0
      %669 = vmatprep.subr.bf16.mxu0 0
      %670 = vmatpush1.bf16.msra.mxu0 0
      %671 = vmatprep.mubr.bf16.mxu0 0
      %672 = vmatmul.mubr.bf16.gmra.mrb[0].mxu0 %v568
      %v673 = vpop.f32.mrb[0].mxu0
      %v674 = vadd.f32 %v625, %v673
      %v675 = vpop.f32.mrb[0].mxu0
      %v676 = vpop.f32.mrb[0].mxu0
      %v677 = vadd.f32 %v625, %v676
      %v678 = vpop.f32.mrb[0].mxu0
      %679 = vdwg.mxu0
      %s680 = scalar_lea.vmem %s497, 96
      %v681 = vld [vmem:[%s680] sm:$0xf]
      %v682 = vld [vmem:[%s680 + $0x4] sm:$0xf]
      %v683 = vld [vmem:[%s680 + $0x8] sm:$0xf]
      %s684 = scalar_lea.vmem %s501, 8
      %v685 = vld [vmem:[%s684] sm:$0x1]
      %v687 = vlaneseq
      %v688 = vshrl.u32 %v687, 7
      %v689 = vsub.s32 0, %v688
      %v690 = vrot.slane %v685, %v689
      %v695 = vunpack.c.l.b16 %v681
      %v696 = vunpack.c.l.b16 %v682
      %v697 = vunpack.c.l.b16 %v683
      %v698 = vpack.c.b16 %v696, %v695
      %v699 = vpack.c.b16 %v697, %v697
      %v702 = vsel %vm570, %v699, 0
      %704 = vmatprep.subr.bf16.mxu0 0
      %705 = vmatpush1.bf16.msra.mxu0 %v698
      %706 = vmatprep.subr.bf16.mxu0 0
      %707 = vmatpush1.bf16.msra.mxu0 %v702
      %708 = vmatprep.subr.bf16.mxu0 0
      %709 = vmatpush1.bf16.msra.mxu0 0
      %710 = vmatprep.subr.bf16.mxu0 0
      %711 = vmatpush1.bf16.msra.mxu0 0
      %712 = vmatprep.subr.bf16.mxu0 0
      %713 = vmatpush1.bf16.msra.mxu0 0
      %714 = vmatprep.subr.bf16.mxu0 0
      %715 = vmatpush1.bf16.msra.mxu0 0
      %716 = vmatprep.subr.bf16.mxu0 0
      %717 = vmatpush1.bf16.msra.mxu0 0
      %718 = vmatprep.subr.bf16.mxu0 0
      %719 = vmatpush1.bf16.msra.mxu0 0
      %720 = vmatprep.subr.bf16.mxu0 0
      %721 = vmatpush1.bf16.msra.mxu0 0
      %722 = vmatprep.subr.bf16.mxu0 0
      %723 = vmatpush1.bf16.msra.mxu0 0
      %724 = vmatprep.subr.bf16.mxu0 0
      %725 = vmatpush1.bf16.msra.mxu0 0
      %726 = vmatprep.subr.bf16.mxu0 0
      %727 = vmatpush1.bf16.msra.mxu0 0
      %728 = vmatprep.subr.bf16.mxu0 0
      %729 = vmatpush1.bf16.msra.mxu0 0
      %730 = vmatprep.subr.bf16.mxu0 0
      %731 = vmatpush1.bf16.msra.mxu0 0
      %732 = vmatprep.subr.bf16.mxu0 0
      %733 = vmatpush1.bf16.msra.mxu0 0
      %734 = vmatprep.subr.bf16.mxu0 0
      %735 = vmatpush1.bf16.msra.mxu0 0
      %736 = vmatprep.mubr.bf16.mxu0 0
      %737 = vmatmul.mubr.bf16.gmra.mrb[0].mxu0 %v568
      %v738 = vpop.f32.mrb[0].mxu0
      %v739 = vadd.f32 %v690, %v738
      %v740 = vpop.f32.mrb[0].mxu0
      %v741 = vpop.f32.mrb[0].mxu0
      %v742 = vadd.f32 %v690, %v741
      %v743 = vpop.f32.mrb[0].mxu0
      %744 = vdwg.mxu0
      %v745 = vpack.c.bf16 %v609, %v609
      %v746 = vpack.c.bf16 %v612, %v612
      %v747 = vpack.c.bf16 %v674, %v674
      %v748 = vpack.c.bf16 %v677, %v677
      %v749 = vpack.c.bf16 %v739, %v739
      %v750 = vpack.c.bf16 %v742, %v742
      %vm751 = vcmask 48128
      %v753 = vsel %vm751, %v745, 0
      %v756 = vsel %vm751, %v747, 0
      %758 = vmatprep.subr.bf16.mxu0 0
      %759 = vmatpush1.bf16.xpose.msra.mxu0 %v756
      %760 = vmatprep.subr.bf16.mxu0 0
      %761 = vmatpush1.bf16.xpose.msra.mxu0 0
      %762 = vmatprep.subr.bf16.mxu0 0
      %763 = vmatpush1.bf16.xpose.msra.mxu0 0
      %764 = vmatprep.subr.bf16.mxu0 0
      %765 = vmatpush1.bf16.xpose.msra.mxu0 0
      %766 = vmatprep.subr.bf16.mxu0 0
      %767 = vmatpush1.bf16.xpose.msra.mxu0 0
      %768 = vmatprep.subr.bf16.mxu0 0
      %769 = vmatpush1.bf16.xpose.msra.mxu0 0
      %770 = vmatprep.subr.bf16.mxu0 0
      %771 = vmatpush1.bf16.xpose.msra.mxu0 0
      %772 = vmatprep.subr.bf16.mxu0 0
      %773 = vmatpush1.bf16.xpose.msra.mxu0 0
      %774 = vmatprep.subr.bf16.mxu0 0
      %775 = vmatpush1.bf16.xpose.msra.mxu0 0
      %776 = vmatprep.subr.bf16.mxu0 0
      %777 = vmatpush1.bf16.xpose.msra.mxu0 0
      %778 = vmatprep.subr.bf16.mxu0 0
      %779 = vmatpush1.bf16.xpose.msra.mxu0 0
      %780 = vmatprep.subr.bf16.mxu0 0
      %781 = vmatpush1.bf16.xpose.msra.mxu0 0
      %782 = vmatprep.subr.bf16.mxu0 0
      %783 = vmatpush1.bf16.xpose.msra.mxu0 0
      %784 = vmatprep.subr.bf16.mxu0 0
      %785 = vmatpush1.bf16.xpose.msra.mxu0 0
      %786 = vmatprep.subr.bf16.mxu0 0
      %787 = vmatpush1.bf16.xpose.msra.mxu0 0
      %788 = vmatprep.subr.bf16.mxu0 0
      %789 = vmatpush1.bf16.xpose.msra.mxu0 0
      %790 = vmatprep.mubr.bf16.mxu0 0
      %791 = vmatmul.mubr.bf16.gmra.mrb[0].mxu0 %v753
      %v792 = vpop.f32.mrb[0].mxu0
      %v793 = vadd.f32 0.0, %v792
      %v794 = vpop.f32.mrb[0].mxu0
      %v795 = vpop.f32.mrb[0].mxu0
      %v796 = vpop.f32.mrb[0].mxu0
      %797 = vdwg.mxu0
      %v799 = vsel %vm751, %v746, 0
      %v802 = vsel %vm751, %v748, 0
      %804 = vmatprep.subr.bf16.mxu0 0
      %805 = vmatpush1.bf16.xpose.msra.mxu0 %v802
      %806 = vmatprep.subr.bf16.mxu0 0
      %807 = vmatpush1.bf16.xpose.msra.mxu0 0
      %808 = vmatprep.subr.bf16.mxu0 0
      %809 = vmatpush1.bf16.xpose.msra.mxu0 0
      %810 = vmatprep.subr.bf16.mxu0 0
      %811 = vmatpush1.bf16.xpose.msra.mxu0 0
      %812 = vmatprep.subr.bf16.mxu0 0
      %813 = vmatpush1.bf16.xpose.msra.mxu0 0
      %814 = vmatprep.subr.bf16.mxu0 0
      %815 = vmatpush1.bf16.xpose.msra.mxu0 0
      %816 = vmatprep.subr.bf16.mxu0 0
      %817 = vmatpush1.bf16.xpose.msra.mxu0 0
      %818 = vmatprep.subr.bf16.mxu0 0
      %819 = vmatpush1.bf16.xpose.msra.mxu0 0
      %820 = vmatprep.subr.bf16.mxu0 0
      %821 = vmatpush1.bf16.xpose.msra.mxu0 0
      %822 = vmatprep.subr.bf16.mxu0 0
      %823 = vmatpush1.bf16.xpose.msra.mxu0 0
      %824 = vmatprep.subr.bf16.mxu0 0
      %825 = vmatpush1.bf16.xpose.msra.mxu0 0
      %826 = vmatprep.subr.bf16.mxu0 0
      %827 = vmatpush1.bf16.xpose.msra.mxu0 0
      %828 = vmatprep.subr.bf16.mxu0 0
      %829 = vmatpush1.bf16.xpose.msra.mxu0 0
      %830 = vmatprep.subr.bf16.mxu0 0
      %831 = vmatpush1.bf16.xpose.msra.mxu0 0
      %832 = vmatprep.subr.bf16.mxu0 0
      %833 = vmatpush1.bf16.xpose.msra.mxu0 0
      %834 = vmatprep.subr.bf16.mxu0 0
      %835 = vmatpush1.bf16.xpose.msra.mxu0 0
      %836 = vmatprep.mubr.bf16.mxu0 0
      %837 = vmatmul.mubr.bf16.gmra.mrb[0].mxu0 %v799
      %v838 = vpop.f32.mrb[0].mxu0
      %v839 = vadd.f32 0.0, %v838
      %v840 = vpop.f32.mrb[0].mxu0
      %v841 = vpop.f32.mrb[0].mxu0
      %v842 = vpop.f32.mrb[0].mxu0
      %843 = vdwg.mxu0
      %vm844 = vcmask 64512
      %v845 = vsel %vm844, %v793, -inf
      %846 = vmax.xlane.f32.xlu0 %v845
      %v847 = vpop.xlane.xlu0 %846
      %v848 = vsel %vm844, %v839, -inf
      %849 = vmax.xlane.f32.xlu0 %v848
      %v850 = vpop.xlane.xlu0 %849
      %v851 = vsub.f32 %v793, %v847
      %v852 = vsub.f32 %v839, %v850
      %v853 = vmul.f32 %v851, 1.442695
      %v854 = vpow.pop %v853
      %v855 = vmul.f32 %v852, 1.442695
      %v856 = vpow.pop %v855
      %v857 = vsel %vm844, %v854, 0.0
      %858 = vadd.xlane.f32.xlu0 %v857
      %v859 = vpop.xlane.xlu0 %858
      %v860 = vsel %vm844, %v856, 0.0
      %861 = vadd.xlane.f32.xlu0 %v860
      %v862 = vpop.xlane.xlu0 %861
      %v863 = vrcp.pop %v859
      %v864 = vmul.f32 %v854, %v863
      %v865 = vrcp.pop %v862
      %v866 = vmul.f32 %v856, %v865
      %v867 = vpack.c.bf16 %v864, %v864
      %v868 = vpack.c.bf16 %v866, %v866
      %v870 = vsel %vm844, %v867, 0
      %v873 = vsel %vm570, %v749, 0
      %875 = vmatprep.subr.bf16.mxu0 0
      %876 = vmatpush1.bf16.msra.mxu0 %v873
      %877 = vmatprep.subr.bf16.mxu0 0
      %878 = vmatpush1.bf16.msra.mxu0 0
      %879 = vmatprep.subr.bf16.mxu0 0
      %880 = vmatpush1.bf16.msra.mxu0 0
      %881 = vmatprep.subr.bf16.mxu0 0
      %882 = vmatpush1.bf16.msra.mxu0 0
      %883 = vmatprep.subr.bf16.mxu0 0
      %884 = vmatpush1.bf16.msra.mxu0 0
      %885 = vmatprep.subr.bf16.mxu0 0
      %886 = vmatpush1.bf16.msra.mxu0 0
      %887 = vmatprep.subr.bf16.mxu0 0
      %888 = vmatpush1.bf16.msra.mxu0 0
      %889 = vmatprep.subr.bf16.mxu0 0
      %890 = vmatpush1.bf16.msra.mxu0 0
      %891 = vmatprep.subr.bf16.mxu0 0
      %892 = vmatpush1.bf16.msra.mxu0 0
      %893 = vmatprep.subr.bf16.mxu0 0
      %894 = vmatpush1.bf16.msra.mxu0 0
      %895 = vmatprep.subr.bf16.mxu0 0
      %896 = vmatpush1.bf16.msra.mxu0 0
      %897 = vmatprep.subr.bf16.mxu0 0
      %898 = vmatpush1.bf16.msra.mxu0 0
      %899 = vmatprep.subr.bf16.mxu0 0
      %900 = vmatpush1.bf16.msra.mxu0 0
      %901 = vmatprep.subr.bf16.mxu0 0
      %902 = vmatpush1.bf16.msra.mxu0 0
      %903 = vmatprep.subr.bf16.mxu0 0
      %904 = vmatpush1.bf16.msra.mxu0 0
      %905 = vmatprep.subr.bf16.mxu0 0
      %906 = vmatpush1.bf16.msra.mxu0 0
      %907 = vmatprep.mubr.bf16.mxu0 0
      %908 = vmatmul.mubr.bf16.gmra.mrb[0].mxu0 %v870
      %v909 = vpop.f32.mrb[0].mxu0
      %v910 = vadd.f32 0.0, %v909
      %v911 = vpop.f32.mrb[0].mxu0
      %v912 = vpop.f32.mrb[0].mxu0
      %v913 = vpop.f32.mrb[0].mxu0
      %914 = vdwg.mxu0
      %v916 = vsel %vm844, %v868, 0
      %v919 = vsel %vm570, %v750, 0
      %921 = vmatprep.subr.bf16.mxu0 0
      %922 = vmatpush1.bf16.msra.mxu0 %v919
      %923 = vmatprep.subr.bf16.mxu0 0
      %924 = vmatpush1.bf16.msra.mxu0 0
      %925 = vmatprep.subr.bf16.mxu0 0
      %926 = vmatpush1.bf16.msra.mxu0 0
      %927 = vmatprep.subr.bf16.mxu0 0
      %928 = vmatpush1.bf16.msra.mxu0 0
      %929 = vmatprep.subr.bf16.mxu0 0
      %930 = vmatpush1.bf16.msra.mxu0 0
      %931 = vmatprep.subr.bf16.mxu0 0
      %932 = vmatpush1.bf16.msra.mxu0 0
      %933 = vmatprep.subr.bf16.mxu0 0
      %934 = vmatpush1.bf16.msra.mxu0 0
      %935 = vmatprep.subr.bf16.mxu0 0
      %936 = vmatpush1.bf16.msra.mxu0 0
      %937 = vmatprep.subr.bf16.mxu0 0
      %938 = vmatpush1.bf16.msra.mxu0 0
      %939 = vmatprep.subr.bf16.mxu0 0
      %940 = vmatpush1.bf16.msra.mxu0 0
      %941 = vmatprep.subr.bf16.mxu0 0
      %942 = vmatpush1.bf16.msra.mxu0 0
      %943 = vmatprep.subr.bf16.mxu0 0
      %944 = vmatpush1.bf16.msra.mxu0 0
      %945 = vmatprep.subr.bf16.mxu0 0
      %946 = vmatpush1.bf16.msra.mxu0 0
      %947 = vmatprep.subr.bf16.mxu0 0
      %948 = vmatpush1.bf16.msra.mxu0 0
      %949 = vmatprep.subr.bf16.mxu0 0
      %950 = vmatpush1.bf16.msra.mxu0 0
      %951 = vmatprep.subr.bf16.mxu0 0
      %952 = vmatpush1.bf16.msra.mxu0 0
      %953 = vmatprep.mubr.bf16.mxu0 0
      %954 = vmatmul.mubr.bf16.gmra.mrb[0].mxu0 %v916
      %v955 = vpop.f32.mrb[0].mxu0
      %v956 = vadd.f32 0.0, %v955
      %v957 = vpop.f32.mrb[0].mxu0
      %v958 = vpop.f32.mrb[0].mxu0
      %v959 = vpop.f32.mrb[0].mxu0
      %960 = vdwg.mxu0
      %v961 = vpack.c.bf16 %v956, %v910
      %v962 = vld [vmem:[%s506] sm:$0x7]
      %s963 = scalar_lea.vmem %s497, 12
      %v964 = vld [vmem:[%s963] sm:$0xf]
      %v965 = vld [vmem:[%s963 + $0x4] sm:$0xf]
      %v966 = vld [vmem:[%s963 + $0x8] sm:$0xf]
      %s967 = scalar_lea.vmem %s501, 1
      %v968 = vld [vmem:[%s967] sm:$0x1]
      %v970 = vlaneseq
      %v971 = vshrl.u32 %v970, 7
      %v972 = vsub.s32 0, %v971
      %v973 = vrot.slane %v968, %v972
      %v978 = vunpack.c.l.b16 %v964
      %v979 = vunpack.c.l.b16 %v965
      %v980 = vunpack.c.l.b16 %v966
      %v981 = vpack.c.b16 %v979, %v978
      %v982 = vpack.c.b16 %v980, %v980
      %v985 = vsel %vm570, %v982, 0
      %987 = vmatprep.subr.bf16.mxu0 0
      %988 = vmatpush1.bf16.msra.mxu0 %v981
      %989 = vmatprep.subr.bf16.mxu0 0
      %990 = vmatpush1.bf16.msra.mxu0 %v985
      %991 = vmatprep.subr.bf16.mxu0 0
      %992 = vmatpush1.bf16.msra.mxu0 0
      %993 = vmatprep.subr.bf16.mxu0 0
      %994 = vmatpush1.bf16.msra.mxu0 0
      %995 = vmatprep.subr.bf16.mxu0 0
      %996 = vmatpush1.bf16.msra.mxu0 0
      %997 = vmatprep.subr.bf16.mxu0 0
      %998 = vmatpush1.bf16.msra.mxu0 0
      %999 = vmatprep.subr.bf16.mxu0 0
      %1000 = vmatpush1.bf16.msra.mxu0 0
      %1001 = vmatprep.subr.bf16.mxu0 0
      %1002 = vmatpush1.bf16.msra.mxu0 0
      %1003 = vmatprep.subr.bf16.mxu0 0
      %1004 = vmatpush1.bf16.msra.mxu0 0
      %1005 = vmatprep.subr.bf16.mxu0 0
      %1006 = vmatpush1.bf16.msra.mxu0 0
      %1007 = vmatprep.subr.bf16.mxu0 0
      %1008 = vmatpush1.bf16.msra.mxu0 0
      %1009 = vmatprep.subr.bf16.mxu0 0
      %1010 = vmatpush1.bf16.msra.mxu0 0
      %1011 = vmatprep.subr.bf16.mxu0 0
      %1012 = vmatpush1.bf16.msra.mxu0 0
      %1013 = vmatprep.subr.bf16.mxu0 0
      %1014 = vmatpush1.bf16.msra.mxu0 0
      %1015 = vmatprep.subr.bf16.mxu0 0
      %1016 = vmatpush1.bf16.msra.mxu0 0
      %1017 = vmatprep.subr.bf16.mxu0 0
      %1018 = vmatpush1.bf16.msra.mxu0 0
      %1019 = vmatprep.mubr.bf16.mxu0 0
      %1020 = vmatmul.mubr.bf16.gmra.mrb[0].mxu0 %v568
      %v1021 = vpop.f32.mrb[0].mxu0
      %v1022 = vadd.f32 %v973, %v1021
      %v1023 = vpop.f32.mrb[0].mxu0
      %v1024 = vpop.f32.mrb[0].mxu0
      %v1025 = vadd.f32 %v973, %v1024
      %v1026 = vpop.f32.mrb[0].mxu0
      %1027 = vdwg.mxu0
      %s1028 = scalar_lea.vmem %s497, 60
      %v1029 = vld [vmem:[%s1028] sm:$0xf]
      %v1030 = vld [vmem:[%s1028 + $0x4] sm:$0xf]
      %v1031 = vld [vmem:[%s1028 + $0x8] sm:$0xf]
      %s1032 = scalar_lea.vmem %s501, 5
      %v1033 = vld [vmem:[%s1032] sm:$0x1]
      %v1035 = vlaneseq
      %v1036 = vshrl.u32 %v1035, 7
      %v1037 = vsub.s32 0, %v1036
      %v1038 = vrot.slane %v1033, %v1037
      %v1043 = vunpack.c.l.b16 %v1029
      %v1044 = vunpack.c.l.b16 %v1030
      %v1045 = vunpack.c.l.b16 %v1031
      %v1046 = vpack.c.b16 %v1044, %v1043
      %v1047 = vpack.c.b16 %v1045, %v1045
      %v1050 = vsel %vm570, %v1047, 0
      %1052 = vmatprep.subr.bf16.mxu0 0
      %1053 = vmatpush1.bf16.msra.mxu0 %v1046
      %1054 = vmatprep.subr.bf16.mxu0 0
      %1055 = vmatpush1.bf16.msra.mxu0 %v1050
      %1056 = vmatprep.subr.bf16.mxu0 0
      %1057 = vmatpush1.bf16.msra.mxu0 0
      %1058 = vmatprep.subr.bf16.mxu0 0
      %1059 = vmatpush1.bf16.msra.mxu0 0
      %1060 = vmatprep.subr.bf16.mxu0 0
      %1061 = vmatpush1.bf16.msra.mxu0 0
      %1062 = vmatprep.subr.bf16.mxu0 0
      %1063 = vmatpush1.bf16.msra.mxu0 0
      %1064 = vmatprep.subr.bf16.mxu0 0
      %1065 = vmatpush1.bf16.msra.mxu0 0
      %1066 = vmatprep.subr.bf16.mxu0 0
      %1067 = vmatpush1.bf16.msra.mxu0 0
      %1068 = vmatprep.subr.bf16.mxu0 0
      %1069 = vmatpush1.bf16.msra.mxu0 0
      %1070 = vmatprep.subr.bf16.mxu0 0
      %1071 = vmatpush1.bf16.msra.mxu0 0
      %1072 = vmatprep.subr.bf16.mxu0 0
      %1073 = vmatpush1.bf16.msra.mxu0 0
      %1074 = vmatprep.subr.bf16.mxu0 0
      %1075 = vmatpush1.bf16.msra.mxu0 0
      %1076 = vmatprep.subr.bf16.mxu0 0
      %1077 = vmatpush1.bf16.msra.mxu0 0
      %1078 = vmatprep.subr.bf16.mxu0 0
      %1079 = vmatpush1.bf16.msra.mxu0 0
      %1080 = vmatprep.subr.bf16.mxu0 0
      %1081 = vmatpush1.bf16.msra.mxu0 0
      %1082 = vmatprep.subr.bf16.mxu0 0
      %1083 = vmatpush1.bf16.msra.mxu0 0
      %1084 = vmatprep.mubr.bf16.mxu0 0
      %1085 = vmatmul.mubr.bf16.gmra.mrb[0].mxu0 %v568
      %v1086 = vpop.f32.mrb[0].mxu0
      %v1087 = vadd.f32 %v1038, %v1086
      %v1088 = vpop.f32.mrb[0].mxu0
      %v1089 = vpop.f32.mrb[0].mxu0
      %v1090 = vadd.f32 %v1038, %v1089
      %v1091 = vpop.f32.mrb[0].mxu0
      %1092 = vdwg.mxu0
      %s1093 = scalar_lea.vmem %s497, 108
      %v1094 = vld [vmem:[%s1093] sm:$0xf]
      %v1095 = vld [vmem:[%s1093 + $0x4] sm:$0xf]
      %v1096 = vld [vmem:[%s1093 + $0x8] sm:$0xf]
      %s1097 = scalar_lea.vmem %s501, 9
      %v1098 = vld [vmem:[%s1097] sm:$0x1]
      %v1100 = vlaneseq
      %v1101 = vshrl.u32 %v1100, 7
      %v1102 = vsub.s32 0, %v1101
      %v1103 = vrot.slane %v1098, %v1102
      %v1108 = vunpack.c.l.b16 %v1094
      %v1109 = vunpack.c.l.b16 %v1095
      %v1110 = vunpack.c.l.b16 %v1096
      %v1111 = vpack.c.b16 %v1109, %v1108
      %v1112 = vpack.c.b16 %v1110, %v1110
      %v1115 = vsel %vm570, %v1112, 0
      %1117 = vmatprep.subr.bf16.mxu0 0
      %1118 = vmatpush1.bf16.msra.mxu0 %v1111
      %1119 = vmatprep.subr.bf16.mxu0 0
      %1120 = vmatpush1.bf16.msra.mxu0 %v1115
      %1121 = vmatprep.subr.bf16.mxu0 0
      %1122 = vmatpush1.bf16.msra.mxu0 0
      %1123 = vmatprep.subr.bf16.mxu0 0
      %1124 = vmatpush1.bf16.msra.mxu0 0
      %1125 = vmatprep.subr.bf16.mxu0 0
      %1126 = vmatpush1.bf16.msra.mxu0 0
      %1127 = vmatprep.subr.bf16.mxu0 0
      %1128 = vmatpush1.bf16.msra.mxu0 0
      %1129 = vmatprep.subr.bf16.mxu0 0
      %1130 = vmatpush1.bf16.msra.mxu0 0
      %1131 = vmatprep.subr.bf16.mxu0 0
      %1132 = vmatpush1.bf16.msra.mxu0 0
      %1133 = vmatprep.subr.bf16.mxu0 0
      %1134 = vmatpush1.bf16.msra.mxu0 0
      %1135 = vmatprep.subr.bf16.mxu0 0
      %1136 = vmatpush1.bf16.msra.mxu0 0
      %1137 = vmatprep.subr.bf16.mxu0 0
      %1138 = vmatpush1.bf16.msra.mxu0 0
      %1139 = vmatprep.subr.bf16.mxu0 0
      %1140 = vmatpush1.bf16.msra.mxu0 0
      %1141 = vmatprep.subr.bf16.mxu0 0
      %1142 = vmatpush1.bf16.msra.mxu0 0
      %1143 = vmatprep.subr.bf16.mxu0 0
      %1144 = vmatpush1.bf16.msra.mxu0 0
      %1145 = vmatprep.subr.bf16.mxu0 0
      %1146 = vmatpush1.bf16.msra.mxu0 0
      %1147 = vmatprep.subr.bf16.mxu0 0
      %1148 = vmatpush1.bf16.msra.mxu0 0
      %1149 = vmatprep.mubr.bf16.mxu0 0
      %1150 = vmatmul.mubr.bf16.gmra.mrb[0].mxu0 %v568
      %v1151 = vpop.f32.mrb[0].mxu0
      %v1152 = vadd.f32 %v1103, %v1151
      %v1153 = vpop.f32.mrb[0].mxu0
      %v1154 = vpop.f32.mrb[0].mxu0
      %v1155 = vadd.f32 %v1103, %v1154
      %v1156 = vpop.f32.mrb[0].mxu0
      %1157 = vdwg.mxu0
      %v1158 = vpack.c.bf16 %v1022, %v1022
      %v1159 = vpack.c.bf16 %v1025, %v1025
      %v1160 = vpack.c.bf16 %v1087, %v1087
      %v1161 = vpack.c.bf16 %v1090, %v1090
      %v1162 = vpack.c.bf16 %v1152, %v1152
      %v1163 = vpack.c.bf16 %v1155, %v1155
      %v1165 = vsel %vm751, %v1158, 0
      %v1168 = vsel %vm751, %v1160, 0
      %1170 = vmatprep.subr.bf16.mxu0 0
      %1171 = vmatpush1.bf16.xpose.msra.mxu0 %v1168
      %1172 = vmatprep.subr.bf16.mxu0 0
      %1173 = vmatpush1.bf16.xpose.msra.mxu0 0
      %1174 = vmatprep.subr.bf16.mxu0 0
      %1175 = vmatpush1.bf16.xpose.msra.mxu0 0
      %1176 = vmatprep.subr.bf16.mxu0 0
      %1177 = vmatpush1.bf16.xpose.msra.mxu0 0
      %1178 = vmatprep.subr.bf16.mxu0 0
      %1179 = vmatpush1.bf16.xpose.msra.mxu0 0
      %1180 = vmatprep.subr.bf16.mxu0 0
      %1181 = vmatpush1.bf16.xpose.msra.mxu0 0
      %1182 = vmatprep.subr.bf16.mxu0 0
      %1183 = vmatpush1.bf16.xpose.msra.mxu0 0
      %1184 = vmatprep.subr.bf16.mxu0 0
      %1185 = vmatpush1.bf16.xpose.msra.mxu0 0
      %1186 = vmatprep.subr.bf16.mxu0 0
      %1187 = vmatpush1.bf16.xpose.msra.mxu0 0
      %1188 = vmatprep.subr.bf16.mxu0 0
      %1189 = vmatpush1.bf16.xpose.msra.mxu0 0
      %1190 = vmatprep.subr.bf16.mxu0 0
      %1191 = vmatpush1.bf16.xpose.msra.mxu0 0
      %1192 = vmatprep.subr.bf16.mxu0 0
      %1193 = vmatpush1.bf16.xpose.msra.mxu0 0
      %1194 = vmatprep.subr.bf16.mxu0 0
      %1195 = vmatpush1.bf16.xpose.msra.mxu0 0
      %1196 = vmatprep.subr.bf16.mxu0 0
      %1197 = vmatpush1.bf16.xpose.msra.mxu0 0
      %1198 = vmatprep.subr.bf16.mxu0 0
      %1199 = vmatpush1.bf16.xpose.msra.mxu0 0
      %1200 = vmatprep.subr.bf16.mxu0 0
      %1201 = vmatpush1.bf16.xpose.msra.mxu0 0
      %1202 = vmatprep.mubr.bf16.mxu0 0
      %1203 = vmatmul.mubr.bf16.gmra.mrb[0].mxu0 %v1165
      %v1204 = vpop.f32.mrb[0].mxu0
      %v1205 = vadd.f32 0.0, %v1204
      %v1206 = vpop.f32.mrb[0].mxu0
      %v1207 = vpop.f32.mrb[0].mxu0
      %v1208 = vpop.f32.mrb[0].mxu0
      %1209 = vdwg.mxu0
      %v1211 = vsel %vm751, %v1159, 0
      %v1214 = vsel %vm751, %v1161, 0
      %1216 = vmatprep.subr.bf16.mxu0 0
      %1217 = vmatpush1.bf16.xpose.msra.mxu0 %v1214
      %1218 = vmatprep.subr.bf16.mxu0 0
      %1219 = vmatpush1.bf16.xpose.msra.mxu0 0
      %1220 = vmatprep.subr.bf16.mxu0 0
      %1221 = vmatpush1.bf16.xpose.msra.mxu0 0
      %1222 = vmatprep.subr.bf16.mxu0 0
      %1223 = vmatpush1.bf16.xpose.msra.mxu0 0
      %1224 = vmatprep.subr.bf16.mxu0 0
      %1225 = vmatpush1.bf16.xpose.msra.mxu0 0
      %1226 = vmatprep.subr.bf16.mxu0 0
      %1227 = vmatpush1.bf16.xpose.msra.mxu0 0
      %1228 = vmatprep.subr.bf16.mxu0 0
      %1229 = vmatpush1.bf16.xpose.msra.mxu0 0
      %1230 = vmatprep.subr.bf16.mxu0 0
      %1231 = vmatpush1.bf16.xpose.msra.mxu0 0
      %1232 = vmatprep.subr.bf16.mxu0 0
      %1233 = vmatpush1.bf16.xpose.msra.mxu0 0
      %1234 = vmatprep.subr.bf16.mxu0 0
      %1235 = vmatpush1.bf16.xpose.msra.mxu0 0
      %1236 = vmatprep.subr.bf16.mxu0 0
      %1237 = vmatpush1.bf16.xpose.msra.mxu0 0
      %1238 = vmatprep.subr.bf16.mxu0 0
      %1239 = vmatpush1.bf16.xpose.msra.mxu0 0
      %1240 = vmatprep.subr.bf16.mxu0 0
      %1241 = vmatpush1.bf16.xpose.msra.mxu0 0
      %1242 = vmatprep.subr.bf16.mxu0 0
      %1243 = vmatpush1.bf16.xpose.msra.mxu0 0
      %1244 = vmatprep.subr.bf16.mxu0 0
      %1245 = vmatpush1.bf16.xpose.msra.mxu0 0
      %1246 = vmatprep.subr.bf16.mxu0 0
      %1247 = vmatpush1.bf16.xpose.msra.mxu0 0
      %1248 = vmatprep.mubr.bf16.mxu0 0
      %1249 = vmatmul.mubr.bf16.gmra.mrb[0].mxu0 %v1211
      %v1250 = vpop.f32.mrb[0].mxu0
      %v1251 = vadd.f32 0.0, %v1250
      %v1252 = vpop.f32.mrb[0].mxu0
      %v1253 = vpop.f32.mrb[0].mxu0
      %v1254 = vpop.f32.mrb[0].mxu0
      %1255 = vdwg.mxu0
      %v1256 = vsel %vm844, %v1205, -inf
      %1257 = vmax.xlane.f32.xlu0 %v1256
      %v1258 = vpop.xlane.xlu0 %1257
      %v1259 = vsel %vm844, %v1251, -inf
      %1260 = vmax.xlane.f32.xlu0 %v1259
      %v1261 = vpop.xlane.xlu0 %1260
      %v1262 = vsub.f32 %v1205, %v1258
      %v1263 = vsub.f32 %v1251, %v1261
      %v1264 = vmul.f32 %v1262, 1.442695
      %v1265 = vpow.pop %v1264
      %v1266 = vmul.f32 %v1263, 1.442695
      %v1267 = vpow.pop %v1266
      %v1268 = vsel %vm844, %v1265, 0.0
      %1269 = vadd.xlane.f32.xlu0 %v1268
      %v1270 = vpop.xlane.xlu0 %1269
      %v1271 = vsel %vm844, %v1267, 0.0
      %1272 = vadd.xlane.f32.xlu0 %v1271
      %v1273 = vpop.xlane.xlu0 %1272
      %v1274 = vrcp.pop %v1270
      %v1275 = vmul.f32 %v1265, %v1274
      %v1276 = vrcp.pop %v1273
      %v1277 = vmul.f32 %v1267, %v1276
      %v1278 = vpack.c.bf16 %v1275, %v1275
      %v1279 = vpack.c.bf16 %v1277, %v1277
      %v1281 = vsel %vm844, %v1278, 0
      %v1284 = vsel %vm570, %v1162, 0
      %1286 = vmatprep.subr.bf16.mxu0 0
      %1287 = vmatpush1.bf16.msra.mxu0 %v1284
      %1288 = vmatprep.subr.bf16.mxu0 0
      %1289 = vmatpush1.bf16.msra.mxu0 0
      %1290 = vmatprep.subr.bf16.mxu0 0
      %1291 = vmatpush1.bf16.msra.mxu0 0
      %1292 = vmatprep.subr.bf16.mxu0 0
      %1293 = vmatpush1.bf16.msra.mxu0 0
      %1294 = vmatprep.subr.bf16.mxu0 0
      %1295 = vmatpush1.bf16.msra.mxu0 0
      %1296 = vmatprep.subr.bf16.mxu0 0
      %1297 = vmatpush1.bf16.msra.mxu0 0
      %1298 = vmatprep.subr.bf16.mxu0 0
      %1299 = vmatpush1.bf16.msra.mxu0 0
      %1300 = vmatprep.subr.bf16.mxu0 0
      %1301 = vmatpush1.bf16.msra.mxu0 0
      %1302 = vmatprep.subr.bf16.mxu0 0
      %1303 = vmatpush1.bf16.msra.mxu0 0
      %1304 = vmatprep.subr.bf16.mxu0 0
      %1305 = vmatpush1.bf16.msra.mxu0 0
      %1306 = vmatprep.subr.bf16.mxu0 0
      %1307 = vmatpush1.bf16.msra.mxu0 0
      %1308 = vmatprep.subr.bf16.mxu0 0
      %1309 = vmatpush1.bf16.msra.mxu0 0
      %1310 = vmatprep.subr.bf16.mxu0 0
      %1311 = vmatpush1.bf16.msra.mxu0 0
      %1312 = vmatprep.subr.bf16.mxu0 0
      %1313 = vmatpush1.bf16.msra.mxu0 0
      %1314 = vmatprep.subr.bf16.mxu0 0
      %1315 = vmatpush1.bf16.msra.mxu0 0
      %1316 = vmatprep.subr.bf16.mxu0 0
      %1317 = vmatpush1.bf16.msra.mxu0 0
      %1318 = vmatprep.mubr.bf16.mxu0 0
      %1319 = vmatmul.mubr.bf16.gmra.mrb[0].mxu0 %v1281
      %v1320 = vpop.f32.mrb[0].mxu0
      %v1321 = vadd.f32 0.0, %v1320
      %v1322 = vpop.f32.mrb[0].mxu0
      %v1323 = vpop.f32.mrb[0].mxu0
      %v1324 = vpop.f32.mrb[0].mxu0
      %1325 = vdwg.mxu0
      %v1327 = vsel %vm844, %v1279, 0
      %v1330 = vsel %vm570, %v1163, 0
      %1332 = vmatprep.subr.bf16.mxu0 0
      %1333 = vmatpush1.bf16.msra.mxu0 %v1330
      %1334 = vmatprep.subr.bf16.mxu0 0
      %1335 = vmatpush1.bf16.msra.mxu0 0
      %1336 = vmatprep.subr.bf16.mxu0 0
      %1337 = vmatpush1.bf16.msra.mxu0 0
      %1338 = vmatprep.subr.bf16.mxu0 0
      %1339 = vmatpush1.bf16.msra.mxu0 0
      %1340 = vmatprep.subr.bf16.mxu0 0
      %1341 = vmatpush1.bf16.msra.mxu0 0
      %1342 = vmatprep.subr.bf16.mxu0 0
      %1343 = vmatpush1.bf16.msra.mxu0 0
      %1344 = vmatprep.subr.bf16.mxu0 0
      %1345 = vmatpush1.bf16.msra.mxu0 0
      %1346 = vmatprep.subr.bf16.mxu0 0
      %1347 = vmatpush1.bf16.msra.mxu0 0
      %1348 = vmatprep.subr.bf16.mxu0 0
      %1349 = vmatpush1.bf16.msra.mxu0 0
      %1350 = vmatprep.subr.bf16.mxu0 0
      %1351 = vmatpush1.bf16.msra.mxu0 0
      %1352 = vmatprep.subr.bf16.mxu0 0
      %1353 = vmatpush1.bf16.msra.mxu0 0
      %1354 = vmatprep.subr.bf16.mxu0 0
      %1355 = vmatpush1.bf16.msra.mxu0 0
      %1356 = vmatprep.subr.bf16.mxu0 0
      %1357 = vmatpush1.bf16.msra.mxu0 0
      %1358 = vmatprep.subr.bf16.mxu0 0
      %1359 = vmatpush1.bf16.msra.mxu0 0
      %1360 = vmatprep.subr.bf16.mxu0 0
      %1361 = vmatpush1.bf16.msra.mxu0 0
      %1362 = vmatprep.subr.bf16.mxu0 0
      %1363 = vmatpush1.bf16.msra.mxu0 0
      %1364 = vmatprep.mubr.bf16.mxu0 0
      %1365 = vmatmul.mubr.bf16.gmra.mrb[0].mxu0 %v1327
      %v1366 = vpop.f32.mrb[0].mxu0
      %v1367 = vadd.f32 0.0, %v1366
      %v1368 = vpop.f32.mrb[0].mxu0
      %v1369 = vpop.f32.mrb[0].mxu0
      %v1370 = vpop.f32.mrb[0].mxu0
      %1371 = vdwg.mxu0
      %v1372 = vpack.c.bf16 %v1367, %v1321
      %s1373 = scalar_lea.vmem %s506, 4
      %v1374 = vld [vmem:[%s1373] sm:$0x7]
      %v1376 = vsel %vm751, %v1372, 0
      %vm1378 = vcmask 1042432
      %v1380 = vsel %vm1378, %v1374, 0
      %1382 = vmatprep.subr.bf16.mxu0 0
      %1383 = vmatpush1.bf16.msra.mxu0 %v1380
      %1384 = vmatprep.subr.bf16.mxu0 0
      %1385 = vmatpush1.bf16.msra.mxu0 0
      %1386 = vmatprep.subr.bf16.mxu0 0
      %1387 = vmatpush1.bf16.msra.mxu0 0
      %1388 = vmatprep.subr.bf16.mxu0 0
      %1389 = vmatpush1.bf16.msra.mxu0 0
      %1390 = vmatprep.subr.bf16.mxu0 0
      %1391 = vmatpush1.bf16.msra.mxu0 0
      %1392 = vmatprep.subr.bf16.mxu0 0
      %1393 = vmatpush1.bf16.msra.mxu0 0
      %1394 = vmatprep.subr.bf16.mxu0 0
      %1395 = vmatpush1.bf16.msra.mxu0 0
      %1396 = vmatprep.subr.bf16.mxu0 0
      %1397 = vmatpush1.bf16.msra.mxu0 0
      %1398 = vmatprep.subr.bf16.mxu0 0
      %1399 = vmatpush1.bf16.msra.mxu0 0
      %1400 = vmatprep.subr.bf16.mxu0 0
      %1401 = vmatpush1.bf16.msra.mxu0 0
      %1402 = vmatprep.subr.bf16.mxu0 0
      %1403 = vmatpush1.bf16.msra.mxu0 0
      %1404 = vmatprep.subr.bf16.mxu0 0
      %1405 = vmatpush1.bf16.msra.mxu0 0
      %1406 = vmatprep.subr.bf16.mxu0 0
      %1407 = vmatpush1.bf16.msra.mxu0 0
      %1408 = vmatprep.subr.bf16.mxu0 0
      %1409 = vmatpush1.bf16.msra.mxu0 0
      %1410 = vmatprep.subr.bf16.mxu0 0
      %1411 = vmatpush1.bf16.msra.mxu0 0
      %1412 = vmatprep.subr.bf16.mxu0 0
      %1413 = vmatpush1.bf16.msra.mxu0 0
      %1414 = vmatprep.mubr.bf16.mxu0 0
      %1415 = vmatmul.mubr.bf16.gmra.mrb[0].mxu0 %v1376
      %v1416 = vpop.f32.mrb[0].mxu0
      %v1417 = vadd.f32 0.0, %v1416
      %v1418 = vpop.f32.mrb[0].mxu0
      %v1419 = vpop.f32.mrb[0].mxu0
      %v1420 = vadd.f32 0.0, %v1419
      %v1421 = vpop.f32.mrb[0].mxu0
      %1422 = vdwg.mxu0
      %v1424 = vsel %vm751, %v961, 0
      %v1427 = vsel %vm1378, %v962, 0
      %1429 = vmatprep.subr.bf16.mxu0 0
      %1430 = vmatpush1.bf16.msra.mxu0 %v1427
      %1431 = vmatprep.subr.bf16.mxu0 0
      %1432 = vmatpush1.bf16.msra.mxu0 0
      %1433 = vmatprep.subr.bf16.mxu0 0
      %1434 = vmatpush1.bf16.msra.mxu0 0
      %1435 = vmatprep.subr.bf16.mxu0 0
      %1436 = vmatpush1.bf16.msra.mxu0 0
      %1437 = vmatprep.subr.bf16.mxu0 0
      %1438 = vmatpush1.bf16.msra.mxu0 0
      %1439 = vmatprep.subr.bf16.mxu0 0
      %1440 = vmatpush1.bf16.msra.mxu0 0
      %1441 = vmatprep.subr.bf16.mxu0 0
      %1442 = vmatpush1.bf16.msra.mxu0 0
      %1443 = vmatprep.subr.bf16.mxu0 0
      %1444 = vmatpush1.bf16.msra.mxu0 0
      %1445 = vmatprep.subr.bf16.mxu0 0
      %1446 = vmatpush1.bf16.msra.mxu0 0
      %1447 = vmatprep.subr.bf16.mxu0 0
      %1448 = vmatpush1.bf16.msra.mxu0 0
      %1449 = vmatprep.subr.bf16.mxu0 0
      %1450 = vmatpush1.bf16.msra.mxu0 0
      %1451 = vmatprep.subr.bf16.mxu0 0
      %1452 = vmatpush1.bf16.msra.mxu0 0
      %1453 = vmatprep.subr.bf16.mxu0 0
      %1454 = vmatpush1.bf16.msra.mxu0 0
      %1455 = vmatprep.subr.bf16.mxu0 0
      %1456 = vmatpush1.bf16.msra.mxu0 0
      %1457 = vmatprep.subr.bf16.mxu0 0
      %1458 = vmatpush1.bf16.msra.mxu0 0
      %1459 = vmatprep.subr.bf16.mxu0 0
      %1460 = vmatpush1.bf16.msra.mxu0 0
      %1461 = vmatprep.mubr.bf16.mxu0 0
      %1462 = vmatmul.mubr.bf16.gmra.mrb[0].mxu0 %v1424
      %v1463 = vpop.f32.mrb[0].mxu0
      %v1464 = vadd.f32 %v1417, %v1463
      %v1465 = vpop.f32.mrb[0].mxu0
      %v1466 = vpop.f32.mrb[0].mxu0
      %v1467 = vadd.f32 %v1420, %v1466
      %v1468 = vpop.f32.mrb[0].mxu0
      %1469 = vdwg.mxu0
      %s1470 = scalar_lea.vmem %s497, 24
      %v1471 = vld [vmem:[%s1470] sm:$0xf]
      %v1472 = vld [vmem:[%s1470 + $0x4] sm:$0xf]
      %v1473 = vld [vmem:[%s1470 + $0x8] sm:$0xf]
      %s1474 = scalar_lea.vmem %s501, 2
      %v1475 = vld [vmem:[%s1474] sm:$0x1]
      %v1477 = vlaneseq
      %v1478 = vshrl.u32 %v1477, 7
      %v1479 = vsub.s32 0, %v1478
      %v1480 = vrot.slane %v1475, %v1479
      %v1485 = vunpack.c.l.b16 %v1471
      %v1486 = vunpack.c.l.b16 %v1472
      %v1487 = vunpack.c.l.b16 %v1473
      %v1488 = vpack.c.b16 %v1486, %v1485
      %v1489 = vpack.c.b16 %v1487, %v1487
      %v1492 = vsel %vm570, %v1489, 0
      %1494 = vmatprep.subr.bf16.mxu0 0
      %1495 = vmatpush1.bf16.msra.mxu0 %v1488
      %1496 = vmatprep.subr.bf16.mxu0 0
      %1497 = vmatpush1.bf16.msra.mxu0 %v1492
      %1498 = vmatprep.subr.bf16.mxu0 0
      %1499 = vmatpush1.bf16.msra.mxu0 0
      %1500 = vmatprep.subr.bf16.mxu0 0
      %1501 = vmatpush1.bf16.msra.mxu0 0
      %1502 = vmatprep.subr.bf16.mxu0 0
      %1503 = vmatpush1.bf16.msra.mxu0 0
      %1504 = vmatprep.subr.bf16.mxu0 0
      %1505 = vmatpush1.bf16.msra.mxu0 0
      %1506 = vmatprep.subr.bf16.mxu0 0
      %1507 = vmatpush1.bf16.msra.mxu0 0
      %1508 = vmatprep.subr.bf16.mxu0 0
      %1509 = vmatpush1.bf16.msra.mxu0 0
      %1510 = vmatprep.subr.bf16.mxu0 0
      %1511 = vmatpush1.bf16.msra.mxu0 0
      %1512 = vmatprep.subr.bf16.mxu0 0
      %1513 = vmatpush1.bf16.msra.mxu0 0
      %1514 = vmatprep.subr.bf16.mxu0 0
      %1515 = vmatpush1.bf16.msra.mxu0 0
      %1516 = vmatprep.subr.bf16.mxu0 0
      %1517 = vmatpush1.bf16.msra.mxu0 0
      %1518 = vmatprep.subr.bf16.mxu0 0
      %1519 = vmatpush1.bf16.msra.mxu0 0
      %1520 = vmatprep.subr.bf16.mxu0 0
      %1521 = vmatpush1.bf16.msra.mxu0 0
      %1522 = vmatprep.subr.bf16.mxu0 0
      %1523 = vmatpush1.bf16.msra.mxu0 0
      %1524 = vmatprep.subr.bf16.mxu0 0
      %1525 = vmatpush1.bf16.msra.mxu0 0
      %1526 = vmatprep.mubr.bf16.mxu0 0
      %1527 = vmatmul.mubr.bf16.gmra.mrb[0].mxu0 %v568
      %v1528 = vpop.f32.mrb[0].mxu0
      %v1529 = vadd.f32 %v1480, %v1528
      %v1530 = vpop.f32.mrb[0].mxu0
      %v1531 = vpop.f32.mrb[0].mxu0
      %v1532 = vadd.f32 %v1480, %v1531
      %v1533 = vpop.f32.mrb[0].mxu0
      %1534 = vdwg.mxu0
      %s1535 = scalar_lea.vmem %s497, 72
      %v1536 = vld [vmem:[%s1535] sm:$0xf]
      %v1537 = vld [vmem:[%s1535 + $0x4] sm:$0xf]
      %v1538 = vld [vmem:[%s1535 + $0x8] sm:$0xf]
      %s1539 = scalar_lea.vmem %s501, 6
      %v1540 = vld [vmem:[%s1539] sm:$0x1]
      %v1542 = vlaneseq
      %v1543 = vshrl.u32 %v1542, 7
      %v1544 = vsub.s32 0, %v1543
      %v1545 = vrot.slane %v1540, %v1544
      %v1550 = vunpack.c.l.b16 %v1536
      %v1551 = vunpack.c.l.b16 %v1537
      %v1552 = vunpack.c.l.b16 %v1538
      %v1553 = vpack.c.b16 %v1551, %v1550
      %v1554 = vpack.c.b16 %v1552, %v1552
      %v1557 = vsel %vm570, %v1554, 0
      %1559 = vmatprep.subr.bf16.mxu0 0
      %1560 = vmatpush1.bf16.msra.mxu0 %v1553
      %1561 = vmatprep.subr.bf16.mxu0 0
      %1562 = vmatpush1.bf16.msra.mxu0 %v1557
      %1563 = vmatprep.subr.bf16.mxu0 0
      %1564 = vmatpush1.bf16.msra.mxu0 0
      %1565 = vmatprep.subr.bf16.mxu0 0
      %1566 = vmatpush1.bf16.msra.mxu0 0
      %1567 = vmatprep.subr.bf16.mxu0 0
      %1568 = vmatpush1.bf16.msra.mxu0 0
      %1569 = vmatprep.subr.bf16.mxu0 0
      %1570 = vmatpush1.bf16.msra.mxu0 0
      %1571 = vmatprep.subr.bf16.mxu0 0
      %1572 = vmatpush1.bf16.msra.mxu0 0
      %1573 = vmatprep.subr.bf16.mxu0 0
      %1574 = vmatpush1.bf16.msra.mxu0 0
      %1575 = vmatprep.subr.bf16.mxu0 0
      %1576 = vmatpush1.bf16.msra.mxu0 0
      %1577 = vmatprep.subr.bf16.mxu0 0
      %1578 = vmatpush1.bf16.msra.mxu0 0
      %1579 = vmatprep.subr.bf16.mxu0 0
      %1580 = vmatpush1.bf16.msra.mxu0 0
      %1581 = vmatprep.subr.bf16.mxu0 0
      %1582 = vmatpush1.bf16.msra.mxu0 0
      %1583 = vmatprep.subr.bf16.mxu0 0
      %1584 = vmatpush1.bf16.msra.mxu0 0
      %1585 = vmatprep.subr.bf16.mxu0 0
      %1586 = vmatpush1.bf16.msra.mxu0 0
      %1587 = vmatprep.subr.bf16.mxu0 0
      %1588 = vmatpush1.bf16.msra.mxu0 0
      %1589 = vmatprep.subr.bf16.mxu0 0
      %1590 = vmatpush1.bf16.msra.mxu0 0
      %1591 = vmatprep.mubr.bf16.mxu0 0
      %1592 = vmatmul.mubr.bf16.gmra.mrb[0].mxu0 %v568
      %v1593 = vpop.f32.mrb[0].mxu0
      %v1594 = vadd.f32 %v1545, %v1593
      %v1595 = vpop.f32.mrb[0].mxu0
      %v1596 = vpop.f32.mrb[0].mxu0
      %v1597 = vadd.f32 %v1545, %v1596
      %v1598 = vpop.f32.mrb[0].mxu0
      %1599 = vdwg.mxu0
      %s1600 = scalar_lea.vmem %s497, 120
      %v1601 = vld [vmem:[%s1600] sm:$0xf]
      %v1602 = vld [vmem:[%s1600 + $0x4] sm:$0xf]
      %v1603 = vld [vmem:[%s1600 + $0x8] sm:$0xf]
      %s1604 = scalar_lea.vmem %s501, 10
      %v1605 = vld [vmem:[%s1604] sm:$0x1]
      %v1607 = vlaneseq
      %v1608 = vshrl.u32 %v1607, 7
      %v1609 = vsub.s32 0, %v1608
      %v1610 = vrot.slane %v1605, %v1609
      %v1615 = vunpack.c.l.b16 %v1601
      %v1616 = vunpack.c.l.b16 %v1602
      %v1617 = vunpack.c.l.b16 %v1603
      %v1618 = vpack.c.b16 %v1616, %v1615
      %v1619 = vpack.c.b16 %v1617, %v1617
      %v1622 = vsel %vm570, %v1619, 0
      %1624 = vmatprep.subr.bf16.mxu0 0
      %1625 = vmatpush1.bf16.msra.mxu0 %v1618
      %1626 = vmatprep.subr.bf16.mxu0 0
      %1627 = vmatpush1.bf16.msra.mxu0 %v1622
      %1628 = vmatprep.subr.bf16.mxu0 0
      %1629 = vmatpush1.bf16.msra.mxu0 0
      %1630 = vmatprep.subr.bf16.mxu0 0
      %1631 = vmatpush1.bf16.msra.mxu0 0
      %1632 = vmatprep.subr.bf16.mxu0 0
      %1633 = vmatpush1.bf16.msra.mxu0 0
      %1634 = vmatprep.subr.bf16.mxu0 0
      %1635 = vmatpush1.bf16.msra.mxu0 0
      %1636 = vmatprep.subr.bf16.mxu0 0
      %1637 = vmatpush1.bf16.msra.mxu0 0
      %1638 = vmatprep.subr.bf16.mxu0 0
      %1639 = vmatpush1.bf16.msra.mxu0 0
      %1640 = vmatprep.subr.bf16.mxu0 0
      %1641 = vmatpush1.bf16.msra.mxu0 0
      %1642 = vmatprep.subr.bf16.mxu0 0
      %1643 = vmatpush1.bf16.msra.mxu0 0
      %1644 = vmatprep.subr.bf16.mxu0 0
      %1645 = vmatpush1.bf16.msra.mxu0 0
      %1646 = vmatprep.subr.bf16.mxu0 0
      %1647 = vmatpush1.bf16.msra.mxu0 0
      %1648 = vmatprep.subr.bf16.mxu0 0
      %1649 = vmatpush1.bf16.msra.mxu0 0
      %1650 = vmatprep.subr.bf16.mxu0 0
      %1651 = vmatpush1.bf16.msra.mxu0 0
      %1652 = vmatprep.subr.bf16.mxu0 0
      %1653 = vmatpush1.bf16.msra.mxu0 0
      %1654 = vmatprep.subr.bf16.mxu0 0
      %1655 = vmatpush1.bf16.msra.mxu0 0
      %1656 = vmatprep.mubr.bf16.mxu0 0
      %1657 = vmatmul.mubr.bf16.gmra.mrb[0].mxu0 %v568
      %v1658 = vpop.f32.mrb[0].mxu0
      %v1659 = vadd.f32 %v1610, %v1658
      %v1660 = vpop.f32.mrb[0].mxu0
      %v1661 = vpop.f32.mrb[0].mxu0
      %v1662 = vadd.f32 %v1610, %v1661
      %v1663 = vpop.f32.mrb[0].mxu0
      %1664 = vdwg.mxu0
      %v1665 = vpack.c.bf16 %v1529, %v1529
      %v1666 = vpack.c.bf16 %v1532, %v1532
      %v1667 = vpack.c.bf16 %v1594, %v1594
      %v1668 = vpack.c.bf16 %v1597, %v1597
      %v1669 = vpack.c.bf16 %v1659, %v1659
      %v1670 = vpack.c.bf16 %v1662, %v1662
      %v1672 = vsel %vm751, %v1665, 0
      %v1675 = vsel %vm751, %v1667, 0
      %1677 = vmatprep.subr.bf16.mxu0 0
      %1678 = vmatpush1.bf16.xpose.msra.mxu0 %v1675
      %1679 = vmatprep.subr.bf16.mxu0 0
      %1680 = vmatpush1.bf16.xpose.msra.mxu0 0
      %1681 = vmatprep.subr.bf16.mxu0 0
      %1682 = vmatpush1.bf16.xpose.msra.mxu0 0
      %1683 = vmatprep.subr.bf16.mxu0 0
      %1684 = vmatpush1.bf16.xpose.msra.mxu0 0
      %1685 = vmatprep.subr.bf16.mxu0 0
      %1686 = vmatpush1.bf16.xpose.msra.mxu0 0
      %1687 = vmatprep.subr.bf16.mxu0 0
      %1688 = vmatpush1.bf16.xpose.msra.mxu0 0
      %1689 = vmatprep.subr.bf16.mxu0 0
      %1690 = vmatpush1.bf16.xpose.msra.mxu0 0
      %1691 = vmatprep.subr.bf16.mxu0 0
      %1692 = vmatpush1.bf16.xpose.msra.mxu0 0
      %1693 = vmatprep.subr.bf16.mxu0 0
      %1694 = vmatpush1.bf16.xpose.msra.mxu0 0
      %1695 = vmatprep.subr.bf16.mxu0 0
      %1696 = vmatpush1.bf16.xpose.msra.mxu0 0
      %1697 = vmatprep.subr.bf16.mxu0 0
      %1698 = vmatpush1.bf16.xpose.msra.mxu0 0
      %1699 = vmatprep.subr.bf16.mxu0 0
      %1700 = vmatpush1.bf16.xpose.msra.mxu0 0
      %1701 = vmatprep.subr.bf16.mxu0 0
      %1702 = vmatpush1.bf16.xpose.msra.mxu0 0
      %1703 = vmatprep.subr.bf16.mxu0 0
      %1704 = vmatpush1.bf16.xpose.msra.mxu0 0
      %1705 = vmatprep.subr.bf16.mxu0 0
      %1706 = vmatpush1.bf16.xpose.msra.mxu0 0
      %1707 = vmatprep.subr.bf16.mxu0 0
      %1708 = vmatpush1.bf16.xpose.msra.mxu0 0
      %1709 = vmatprep.mubr.bf16.mxu0 0
      %1710 = vmatmul.mubr.bf16.gmra.mrb[0].mxu0 %v1672
      %v1711 = vpop.f32.mrb[0].mxu0
      %v1712 = vadd.f32 0.0, %v1711
      %v1713 = vpop.f32.mrb[0].mxu0
      %v1714 = vpop.f32.mrb[0].mxu0
      %v1715 = vpop.f32.mrb[0].mxu0
      %1716 = vdwg.mxu0
      %v1718 = vsel %vm751, %v1666, 0
      %v1721 = vsel %vm751, %v1668, 0
      %1723 = vmatprep.subr.bf16.mxu0 0
      %1724 = vmatpush1.bf16.xpose.msra.mxu0 %v1721
      %1725 = vmatprep.subr.bf16.mxu0 0
      %1726 = vmatpush1.bf16.xpose.msra.mxu0 0
      %1727 = vmatprep.subr.bf16.mxu0 0
      %1728 = vmatpush1.bf16.xpose.msra.mxu0 0
      %1729 = vmatprep.subr.bf16.mxu0 0
      %1730 = vmatpush1.bf16.xpose.msra.mxu0 0
      %1731 = vmatprep.subr.bf16.mxu0 0
      %1732 = vmatpush1.bf16.xpose.msra.mxu0 0
      %1733 = vmatprep.subr.bf16.mxu0 0
      %1734 = vmatpush1.bf16.xpose.msra.mxu0 0
      %1735 = vmatprep.subr.bf16.mxu0 0
      %1736 = vmatpush1.bf16.xpose.msra.mxu0 0
      %1737 = vmatprep.subr.bf16.mxu0 0
      %1738 = vmatpush1.bf16.xpose.msra.mxu0 0
      %1739 = vmatprep.subr.bf16.mxu0 0
      %1740 = vmatpush1.bf16.xpose.msra.mxu0 0
      %1741 = vmatprep.subr.bf16.mxu0 0
      %1742 = vmatpush1.bf16.xpose.msra.mxu0 0
      %1743 = vmatprep.subr.bf16.mxu0 0
      %1744 = vmatpush1.bf16.xpose.msra.mxu0 0
      %1745 = vmatprep.subr.bf16.mxu0 0
      %1746 = vmatpush1.bf16.xpose.msra.mxu0 0
      %1747 = vmatprep.subr.bf16.mxu0 0
      %1748 = vmatpush1.bf16.xpose.msra.mxu0 0
      %1749 = vmatprep.subr.bf16.mxu0 0
      %1750 = vmatpush1.bf16.xpose.msra.mxu0 0
      %1751 = vmatprep.subr.bf16.mxu0 0
      %1752 = vmatpush1.bf16.xpose.msra.mxu0 0
      %1753 = vmatprep.subr.bf16.mxu0 0
      %1754 = vmatpush1.bf16.xpose.msra.mxu0 0
      %1755 = vmatprep.mubr.bf16.mxu0 0
      %1756 = vmatmul.mubr.bf16.gmra.mrb[0].mxu0 %v1718
      %v1757 = vpop.f32.mrb[0].mxu0
      %v1758 = vadd.f32 0.0, %v1757
      %v1759 = vpop.f32.mrb[0].mxu0
      %v1760 = vpop.f32.mrb[0].mxu0
      %v1761 = vpop.f32.mrb[0].mxu0
      %1762 = vdwg.mxu0
      %v1763 = vsel %vm844, %v1712, -inf
      %1764 = vmax.xlane.f32.xlu0 %v1763
      %v1765 = vpop.xlane.xlu0 %1764
      %v1766 = vsel %vm844, %v1758, -inf
      %1767 = vmax.xlane.f32.xlu0 %v1766
      %v1768 = vpop.xlane.xlu0 %1767
      %v1769 = vsub.f32 %v1712, %v1765
      %v1770 = vsub.f32 %v1758, %v1768
      %v1771 = vmul.f32 %v1769, 1.442695
      %v1772 = vpow.pop %v1771
      %v1773 = vmul.f32 %v1770, 1.442695
      %v1774 = vpow.pop %v1773
      %v1775 = vsel %vm844, %v1772, 0.0
      %1776 = vadd.xlane.f32.xlu0 %v1775
      %v1777 = vpop.xlane.xlu0 %1776
      %v1778 = vsel %vm844, %v1774, 0.0
      %1779 = vadd.xlane.f32.xlu0 %v1778
      %v1780 = vpop.xlane.xlu0 %1779
      %v1781 = vrcp.pop %v1777
      %v1782 = vmul.f32 %v1772, %v1781
      %v1783 = vrcp.pop %v1780
      %v1784 = vmul.f32 %v1774, %v1783
      %v1785 = vpack.c.bf16 %v1782, %v1782
      %v1786 = vpack.c.bf16 %v1784, %v1784
      %v1788 = vsel %vm844, %v1785, 0
      %v1791 = vsel %vm570, %v1669, 0
      %1793 = vmatprep.subr.bf16.mxu0 0
      %1794 = vmatpush1.bf16.msra.mxu0 %v1791
      %1795 = vmatprep.subr.bf16.mxu0 0
      %1796 = vmatpush1.bf16.msra.mxu0 0
      %1797 = vmatprep.subr.bf16.mxu0 0
      %1798 = vmatpush1.bf16.msra.mxu0 0
      %1799 = vmatprep.subr.bf16.mxu0 0
      %1800 = vmatpush1.bf16.msra.mxu0 0
      %1801 = vmatprep.subr.bf16.mxu0 0
      %1802 = vmatpush1.bf16.msra.mxu0 0
      %1803 = vmatprep.subr.bf16.mxu0 0
      %1804 = vmatpush1.bf16.msra.mxu0 0
      %1805 = vmatprep.subr.bf16.mxu0 0
      %1806 = vmatpush1.bf16.msra.mxu0 0
      %1807 = vmatprep.subr.bf16.mxu0 0
      %1808 = vmatpush1.bf16.msra.mxu0 0
      %1809 = vmatprep.subr.bf16.mxu0 0
      %1810 = vmatpush1.bf16.msra.mxu0 0
      %1811 = vmatprep.subr.bf16.mxu0 0
      %1812 = vmatpush1.bf16.msra.mxu0 0
      %1813 = vmatprep.subr.bf16.mxu0 0
      %1814 = vmatpush1.bf16.msra.mxu0 0
      %1815 = vmatprep.subr.bf16.mxu0 0
      %1816 = vmatpush1.bf16.msra.mxu0 0
      %1817 = vmatprep.subr.bf16.mxu0 0
      %1818 = vmatpush1.bf16.msra.mxu0 0
      %1819 = vmatprep.subr.bf16.mxu0 0
      %1820 = vmatpush1.bf16.msra.mxu0 0
      %1821 = vmatprep.subr.bf16.mxu0 0
      %1822 = vmatpush1.bf16.msra.mxu0 0
      %1823 = vmatprep.subr.bf16.mxu0 0
      %1824 = vmatpush1.bf16.msra.mxu0 0
      %1825 = vmatprep.mubr.bf16.mxu0 0
      %1826 = vmatmul.mubr.bf16.gmra.mrb[0].mxu0 %v1788
      %v1827 = vpop.f32.mrb[0].mxu0
      %v1828 = vadd.f32 0.0, %v1827
      %v1829 = vpop.f32.mrb[0].mxu0
      %v1830 = vpop.f32.mrb[0].mxu0
      %v1831 = vpop.f32.mrb[0].mxu0
      %1832 = vdwg.mxu0
      %v1834 = vsel %vm844, %v1786, 0
      %v1837 = vsel %vm570, %v1670, 0
      %1839 = vmatprep.subr.bf16.mxu0 0
      %1840 = vmatpush1.bf16.msra.mxu0 %v1837
      %1841 = vmatprep.subr.bf16.mxu0 0
      %1842 = vmatpush1.bf16.msra.mxu0 0
      %1843 = vmatprep.subr.bf16.mxu0 0
      %1844 = vmatpush1.bf16.msra.mxu0 0
      %1845 = vmatprep.subr.bf16.mxu0 0
      %1846 = vmatpush1.bf16.msra.mxu0 0
      %1847 = vmatprep.subr.bf16.mxu0 0
      %1848 = vmatpush1.bf16.msra.mxu0 0
      %1849 = vmatprep.subr.bf16.mxu0 0
      %1850 = vmatpush1.bf16.msra.mxu0 0
      %1851 = vmatprep.subr.bf16.mxu0 0
      %1852 = vmatpush1.bf16.msra.mxu0 0
      %1853 = vmatprep.subr.bf16.mxu0 0
      %1854 = vmatpush1.bf16.msra.mxu0 0
      %1855 = vmatprep.subr.bf16.mxu0 0
      %1856 = vmatpush1.bf16.msra.mxu0 0
      %1857 = vmatprep.subr.bf16.mxu0 0
      %1858 = vmatpush1.bf16.msra.mxu0 0
      %1859 = vmatprep.subr.bf16.mxu0 0
      %1860 = vmatpush1.bf16.msra.mxu0 0
      %1861 = vmatprep.subr.bf16.mxu0 0
      %1862 = vmatpush1.bf16.msra.mxu0 0
      %1863 = vmatprep.subr.bf16.mxu0 0
      %1864 = vmatpush1.bf16.msra.mxu0 0
      %1865 = vmatprep.subr.bf16.mxu0 0
      %1866 = vmatpush1.bf16.msra.mxu0 0
      %1867 = vmatprep.subr.bf16.mxu0 0
      %1868 = vmatpush1.bf16.msra.mxu0 0
      %1869 = vmatprep.subr.bf16.mxu0 0
      %1870 = vmatpush1.bf16.msra.mxu0 0
      %1871 = vmatprep.mubr.bf16.mxu0 0
      %1872 = vmatmul.mubr.bf16.gmra.mrb[0].mxu0 %v1834
      %v1873 = vpop.f32.mrb[0].mxu0
      %v1874 = vadd.f32 0.0, %v1873
      %v1875 = vpop.f32.mrb[0].mxu0
      %v1876 = vpop.f32.mrb[0].mxu0
      %v1877 = vpop.f32.mrb[0].mxu0
      %1878 = vdwg.mxu0
      %v1879 = vpack.c.bf16 %v1874, %v1828
      %s1880 = scalar_lea.vmem %s506, 8
      %v1881 = vld [vmem:[%s1880] sm:$0x7]
      %v1883 = vsel %vm751, %v1879, 0
      %v1886 = vsel %vm1378, %v1881, 0
      %1888 = vmatprep.subr.bf16.mxu0 0
      %1889 = vmatpush1.bf16.msra.mxu0 %v1886
      %1890 = vmatprep.subr.bf16.mxu0 0
      %1891 = vmatpush1.bf16.msra.mxu0 0
      %1892 = vmatprep.subr.bf16.mxu0 0
      %1893 = vmatpush1.bf16.msra.mxu0 0
      %1894 = vmatprep.subr.bf16.mxu0 0
      %1895 = vmatpush1.bf16.msra.mxu0 0
      %1896 = vmatprep.subr.bf16.mxu0 0
      %1897 = vmatpush1.bf16.msra.mxu0 0
      %1898 = vmatprep.subr.bf16.mxu0 0
      %1899 = vmatpush1.bf16.msra.mxu0 0
      %1900 = vmatprep.subr.bf16.mxu0 0
      %1901 = vmatpush1.bf16.msra.mxu0 0
      %1902 = vmatprep.subr.bf16.mxu0 0
      %1903 = vmatpush1.bf16.msra.mxu0 0
      %1904 = vmatprep.subr.bf16.mxu0 0
      %1905 = vmatpush1.bf16.msra.mxu0 0
      %1906 = vmatprep.subr.bf16.mxu0 0
      %1907 = vmatpush1.bf16.msra.mxu0 0
      %1908 = vmatprep.subr.bf16.mxu0 0
      %1909 = vmatpush1.bf16.msra.mxu0 0
      %1910 = vmatprep.subr.bf16.mxu0 0
      %1911 = vmatpush1.bf16.msra.mxu0 0
      %1912 = vmatprep.subr.bf16.mxu0 0
      %1913 = vmatpush1.bf16.msra.mxu0 0
      %1914 = vmatprep.subr.bf16.mxu0 0
      %1915 = vmatpush1.bf16.msra.mxu0 0
      %1916 = vmatprep.subr.bf16.mxu0 0
      %1917 = vmatpush1.bf16.msra.mxu0 0
      %1918 = vmatprep.subr.bf16.mxu0 0
      %1919 = vmatpush1.bf16.msra.mxu0 0
      %1920 = vmatprep.mubr.bf16.mxu0 0
      %1921 = vmatmul.mubr.bf16.gmra.mrb[0].mxu0 %v1883
      %v1922 = vpop.f32.mrb[0].mxu0
      %v1923 = vadd.f32 0.0, %v1922
      %v1924 = vpop.f32.mrb[0].mxu0
      %v1925 = vpop.f32.mrb[0].mxu0
      %v1926 = vadd.f32 0.0, %v1925
      %v1927 = vpop.f32.mrb[0].mxu0
      %1928 = vdwg.mxu0
      %v1929 = vadd.f32 %v1464, %v1923
      %v1930 = vadd.f32 %v1467, %v1926
      %s1931 = scalar_lea.vmem %s497, 36
      %v1932 = vld [vmem:[%s1931] sm:$0xf]
      %v1933 = vld [vmem:[%s1931 + $0x4] sm:$0xf]
      %v1934 = vld [vmem:[%s1931 + $0x8] sm:$0xf]
      %s1935 = scalar_lea.vmem %s501, 3
      %v1936 = vld [vmem:[%s1935] sm:$0x1]
      %v1938 = vlaneseq
      %v1939 = vshrl.u32 %v1938, 7
      %v1940 = vsub.s32 0, %v1939
      %v1941 = vrot.slane %v1936, %v1940
      %v1946 = vunpack.c.l.b16 %v1932
      %v1947 = vunpack.c.l.b16 %v1933
      %v1948 = vunpack.c.l.b16 %v1934
      %v1949 = vpack.c.b16 %v1947, %v1946
      %v1950 = vpack.c.b16 %v1948, %v1948
      %v1953 = vsel %vm570, %v1950, 0
      %1955 = vmatprep.subr.bf16.mxu0 0
      %1956 = vmatpush1.bf16.msra.mxu0 %v1949
      %1957 = vmatprep.subr.bf16.mxu0 0
      %1958 = vmatpush1.bf16.msra.mxu0 %v1953
      %1959 = vmatprep.subr.bf16.mxu0 0
      %1960 = vmatpush1.bf16.msra.mxu0 0
      %1961 = vmatprep.subr.bf16.mxu0 0
      %1962 = vmatpush1.bf16.msra.mxu0 0
      %1963 = vmatprep.subr.bf16.mxu0 0
      %1964 = vmatpush1.bf16.msra.mxu0 0
      %1965 = vmatprep.subr.bf16.mxu0 0
      %1966 = vmatpush1.bf16.msra.mxu0 0
      %1967 = vmatprep.subr.bf16.mxu0 0
      %1968 = vmatpush1.bf16.msra.mxu0 0
      %1969 = vmatprep.subr.bf16.mxu0 0
      %1970 = vmatpush1.bf16.msra.mxu0 0
      %1971 = vmatprep.subr.bf16.mxu0 0
      %1972 = vmatpush1.bf16.msra.mxu0 0
      %1973 = vmatprep.subr.bf16.mxu0 0
      %1974 = vmatpush1.bf16.msra.mxu0 0
      %1975 = vmatprep.subr.bf16.mxu0 0
      %1976 = vmatpush1.bf16.msra.mxu0 0
      %1977 = vmatprep.subr.bf16.mxu0 0
      %1978 = vmatpush1.bf16.msra.mxu0 0
      %1979 = vmatprep.subr.bf16.mxu0 0
      %1980 = vmatpush1.bf16.msra.mxu0 0
      %1981 = vmatprep.subr.bf16.mxu0 0
      %1982 = vmatpush1.bf16.msra.mxu0 0
      %1983 = vmatprep.subr.bf16.mxu0 0
      %1984 = vmatpush1.bf16.msra.mxu0 0
      %1985 = vmatprep.subr.bf16.mxu0 0
      %1986 = vmatpush1.bf16.msra.mxu0 0
      %1987 = vmatprep.mubr.bf16.mxu0 0
      %1988 = vmatmul.mubr.bf16.gmra.mrb[0].mxu0 %v568
      %v1989 = vpop.f32.mrb[0].mxu0
      %v1990 = vadd.f32 %v1941, %v1989
      %v1991 = vpop.f32.mrb[0].mxu0
      %v1992 = vpop.f32.mrb[0].mxu0
      %v1993 = vadd.f32 %v1941, %v1992
      %v1994 = vpop.f32.mrb[0].mxu0
      %1995 = vdwg.mxu0
      %s1996 = scalar_lea.vmem %s497, 84
      %v1997 = vld [vmem:[%s1996] sm:$0xf]
      %v1998 = vld [vmem:[%s1996 + $0x4] sm:$0xf]
      %v1999 = vld [vmem:[%s1996 + $0x8] sm:$0xf]
      %s2000 = scalar_lea.vmem %s501, 7
      %v2001 = vld [vmem:[%s2000] sm:$0x1]
      %v2003 = vlaneseq
      %v2004 = vshrl.u32 %v2003, 7
      %v2005 = vsub.s32 0, %v2004
      %v2006 = vrot.slane %v2001, %v2005
      %v2011 = vunpack.c.l.b16 %v1997
      %v2012 = vunpack.c.l.b16 %v1998
      %v2013 = vunpack.c.l.b16 %v1999
      %v2014 = vpack.c.b16 %v2012, %v2011
      %v2015 = vpack.c.b16 %v2013, %v2013
      %v2018 = vsel %vm570, %v2015, 0
      %2020 = vmatprep.subr.bf16.mxu0 0
      %2021 = vmatpush1.bf16.msra.mxu0 %v2014
      %2022 = vmatprep.subr.bf16.mxu0 0
      %2023 = vmatpush1.bf16.msra.mxu0 %v2018
      %2024 = vmatprep.subr.bf16.mxu0 0
      %2025 = vmatpush1.bf16.msra.mxu0 0
      %2026 = vmatprep.subr.bf16.mxu0 0
      %2027 = vmatpush1.bf16.msra.mxu0 0
      %2028 = vmatprep.subr.bf16.mxu0 0
      %2029 = vmatpush1.bf16.msra.mxu0 0
      %2030 = vmatprep.subr.bf16.mxu0 0
      %2031 = vmatpush1.bf16.msra.mxu0 0
      %2032 = vmatprep.subr.bf16.mxu0 0
      %2033 = vmatpush1.bf16.msra.mxu0 0
      %2034 = vmatprep.subr.bf16.mxu0 0
      %2035 = vmatpush1.bf16.msra.mxu0 0
      %2036 = vmatprep.subr.bf16.mxu0 0
      %2037 = vmatpush1.bf16.msra.mxu0 0
      %2038 = vmatprep.subr.bf16.mxu0 0
      %2039 = vmatpush1.bf16.msra.mxu0 0
      %2040 = vmatprep.subr.bf16.mxu0 0
      %2041 = vmatpush1.bf16.msra.mxu0 0
      %2042 = vmatprep.subr.bf16.mxu0 0
      %2043 = vmatpush1.bf16.msra.mxu0 0
      %2044 = vmatprep.subr.bf16.mxu0 0
      %2045 = vmatpush1.bf16.msra.mxu0 0
      %2046 = vmatprep.subr.bf16.mxu0 0
      %2047 = vmatpush1.bf16.msra.mxu0 0
      %2048 = vmatprep.subr.bf16.mxu0 0
      %2049 = vmatpush1.bf16.msra.mxu0 0
      %2050 = vmatprep.subr.bf16.mxu0 0
      %2051 = vmatpush1.bf16.msra.mxu0 0
      %2052 = vmatprep.mubr.bf16.mxu0 0
      %2053 = vmatmul.mubr.bf16.gmra.mrb[0].mxu0 %v568
      %v2054 = vpop.f32.mrb[0].mxu0
      %v2055 = vadd.f32 %v2006, %v2054
      %v2056 = vpop.f32.mrb[0].mxu0
      %v2057 = vpop.f32.mrb[0].mxu0
      %v2058 = vadd.f32 %v2006, %v2057
      %v2059 = vpop.f32.mrb[0].mxu0
      %2060 = vdwg.mxu0
      %s2061 = scalar_lea.vmem %s497, 132
      %v2062 = vld [vmem:[%s2061] sm:$0xf]
      %v2063 = vld [vmem:[%s2061 + $0x4] sm:$0xf]
      %v2064 = vld [vmem:[%s2061 + $0x8] sm:$0xf]
      %s2065 = scalar_lea.vmem %s501, 11
      %v2066 = vld [vmem:[%s2065] sm:$0x1]
      %v2068 = vlaneseq
      %v2069 = vshrl.u32 %v2068, 7
      %v2070 = vsub.s32 0, %v2069
      %v2071 = vrot.slane %v2066, %v2070
      %v2076 = vunpack.c.l.b16 %v2062
      %v2077 = vunpack.c.l.b16 %v2063
      %v2078 = vunpack.c.l.b16 %v2064
      %v2079 = vpack.c.b16 %v2077, %v2076
      %v2080 = vpack.c.b16 %v2078, %v2078
      %v2083 = vsel %vm570, %v2080, 0
      %2085 = vmatprep.subr.bf16.mxu0 0
      %2086 = vmatpush1.bf16.msra.mxu0 %v2079
      %2087 = vmatprep.subr.bf16.mxu0 0
      %2088 = vmatpush1.bf16.msra.mxu0 %v2083
      %2089 = vmatprep.subr.bf16.mxu0 0
      %2090 = vmatpush1.bf16.msra.mxu0 0
      %2091 = vmatprep.subr.bf16.mxu0 0
      %2092 = vmatpush1.bf16.msra.mxu0 0
      %2093 = vmatprep.subr.bf16.mxu0 0
      %2094 = vmatpush1.bf16.msra.mxu0 0
      %2095 = vmatprep.subr.bf16.mxu0 0
      %2096 = vmatpush1.bf16.msra.mxu0 0
      %2097 = vmatprep.subr.bf16.mxu0 0
      %2098 = vmatpush1.bf16.msra.mxu0 0
      %2099 = vmatprep.subr.bf16.mxu0 0
      %2100 = vmatpush1.bf16.msra.mxu0 0
      %2101 = vmatprep.subr.bf16.mxu0 0
      %2102 = vmatpush1.bf16.msra.mxu0 0
      %2103 = vmatprep.subr.bf16.mxu0 0
      %2104 = vmatpush1.bf16.msra.mxu0 0
      %2105 = vmatprep.subr.bf16.mxu0 0
      %2106 = vmatpush1.bf16.msra.mxu0 0
      %2107 = vmatprep.subr.bf16.mxu0 0
      %2108 = vmatpush1.bf16.msra.mxu0 0
      %2109 = vmatprep.subr.bf16.mxu0 0
      %2110 = vmatpush1.bf16.msra.mxu0 0
      %2111 = vmatprep.subr.bf16.mxu0 0
      %2112 = vmatpush1.bf16.msra.mxu0 0
      %2113 = vmatprep.subr.bf16.mxu0 0
      %2114 = vmatpush1.bf16.msra.mxu0 0
      %2115 = vmatprep.subr.bf16.mxu0 0
      %2116 = vmatpush1.bf16.msra.mxu0 0
      %2117 = vmatprep.mubr.bf16.mxu0 0
      %2118 = vmatmul.mubr.bf16.gmra.mrb[0].mxu0 %v568
      %v2119 = vpop.f32.mrb[0].mxu0
      %v2120 = vadd.f32 %v2071, %v2119
      %v2121 = vpop.f32.mrb[0].mxu0
      %v2122 = vpop.f32.mrb[0].mxu0
      %v2123 = vadd.f32 %v2071, %v2122
      %v2124 = vpop.f32.mrb[0].mxu0
      %2125 = vdwg.mxu0
      %v2126 = vpack.c.bf16 %v1990, %v1990
      %v2127 = vpack.c.bf16 %v1993, %v1993
      %v2128 = vpack.c.bf16 %v2055, %v2055
      %v2129 = vpack.c.bf16 %v2058, %v2058
      %v2130 = vpack.c.bf16 %v2120, %v2120
      %v2131 = vpack.c.bf16 %v2123, %v2123
      %v2133 = vsel %vm751, %v2126, 0
      %v2136 = vsel %vm751, %v2128, 0
      %2138 = vmatprep.subr.bf16.mxu0 0
      %2139 = vmatpush1.bf16.xpose.msra.mxu0 %v2136
      %2140 = vmatprep.subr.bf16.mxu0 0
      %2141 = vmatpush1.bf16.xpose.msra.mxu0 0
      %2142 = vmatprep.subr.bf16.mxu0 0
      %2143 = vmatpush1.bf16.xpose.msra.mxu0 0
      %2144 = vmatprep.subr.bf16.mxu0 0
      %2145 = vmatpush1.bf16.xpose.msra.mxu0 0
      %2146 = vmatprep.subr.bf16.mxu0 0
      %2147 = vmatpush1.bf16.xpose.msra.mxu0 0
      %2148 = vmatprep.subr.bf16.mxu0 0
      %2149 = vmatpush1.bf16.xpose.msra.mxu0 0
      %2150 = vmatprep.subr.bf16.mxu0 0
      %2151 = vmatpush1.bf16.xpose.msra.mxu0 0
      %2152 = vmatprep.subr.bf16.mxu0 0
      %2153 = vmatpush1.bf16.xpose.msra.mxu0 0
      %2154 = vmatprep.subr.bf16.mxu0 0
      %2155 = vmatpush1.bf16.xpose.msra.mxu0 0
      %2156 = vmatprep.subr.bf16.mxu0 0
      %2157 = vmatpush1.bf16.xpose.msra.mxu0 0
      %2158 = vmatprep.subr.bf16.mxu0 0
      %2159 = vmatpush1.bf16.xpose.msra.mxu0 0
      %2160 = vmatprep.subr.bf16.mxu0 0
      %2161 = vmatpush1.bf16.xpose.msra.mxu0 0
      %2162 = vmatprep.subr.bf16.mxu0 0
      %2163 = vmatpush1.bf16.xpose.msra.mxu0 0
      %2164 = vmatprep.subr.bf16.mxu0 0
      %2165 = vmatpush1.bf16.xpose.msra.mxu0 0
      %2166 = vmatprep.subr.bf16.mxu0 0
      %2167 = vmatpush1.bf16.xpose.msra.mxu0 0
      %2168 = vmatprep.subr.bf16.mxu0 0
      %2169 = vmatpush1.bf16.xpose.msra.mxu0 0
      %2170 = vmatprep.mubr.bf16.mxu0 0
      %2171 = vmatmul.mubr.bf16.gmra.mrb[0].mxu0 %v2133
      %v2172 = vpop.f32.mrb[0].mxu0
      %v2173 = vadd.f32 0.0, %v2172
      %v2174 = vpop.f32.mrb[0].mxu0
      %v2175 = vpop.f32.mrb[0].mxu0
      %v2176 = vpop.f32.mrb[0].mxu0
      %2177 = vdwg.mxu0
      %v2179 = vsel %vm751, %v2127, 0
      %v2182 = vsel %vm751, %v2129, 0
      %2184 = vmatprep.subr.bf16.mxu0 0
      %2185 = vmatpush1.bf16.xpose.msra.mxu0 %v2182
      %2186 = vmatprep.subr.bf16.mxu0 0
      %2187 = vmatpush1.bf16.xpose.msra.mxu0 0
      %2188 = vmatprep.subr.bf16.mxu0 0
      %2189 = vmatpush1.bf16.xpose.msra.mxu0 0
      %2190 = vmatprep.subr.bf16.mxu0 0
      %2191 = vmatpush1.bf16.xpose.msra.mxu0 0
      %2192 = vmatprep.subr.bf16.mxu0 0
      %2193 = vmatpush1.bf16.xpose.msra.mxu0 0
      %2194 = vmatprep.subr.bf16.mxu0 0
      %2195 = vmatpush1.bf16.xpose.msra.mxu0 0
      %2196 = vmatprep.subr.bf16.mxu0 0
      %2197 = vmatpush1.bf16.xpose.msra.mxu0 0
      %2198 = vmatprep.subr.bf16.mxu0 0
      %2199 = vmatpush1.bf16.xpose.msra.mxu0 0
      %2200 = vmatprep.subr.bf16.mxu0 0
      %2201 = vmatpush1.bf16.xpose.msra.mxu0 0
      %2202 = vmatprep.subr.bf16.mxu0 0
      %2203 = vmatpush1.bf16.xpose.msra.mxu0 0
      %2204 = vmatprep.subr.bf16.mxu0 0
      %2205 = vmatpush1.bf16.xpose.msra.mxu0 0
      %2206 = vmatprep.subr.bf16.mxu0 0
      %2207 = vmatpush1.bf16.xpose.msra.mxu0 0
      %2208 = vmatprep.subr.bf16.mxu0 0
      %2209 = vmatpush1.bf16.xpose.msra.mxu0 0
      %2210 = vmatprep.subr.bf16.mxu0 0
      %2211 = vmatpush1.bf16.xpose.msra.mxu0 0
      %2212 = vmatprep.subr.bf16.mxu0 0
      %2213 = vmatpush1.bf16.xpose.msra.mxu0 0
      %2214 = vmatprep.subr.bf16.mxu0 0
      %2215 = vmatpush1.bf16.xpose.msra.mxu0 0
      %2216 = vmatprep.mubr.bf16.mxu0 0
      %2217 = vmatmul.mubr.bf16.gmra.mrb[0].mxu0 %v2179
      %v2218 = vpop.f32.mrb[0].mxu0
      %v2219 = vadd.f32 0.0, %v2218
      %v2220 = vpop.f32.mrb[0].mxu0
      %v2221 = vpop.f32.mrb[0].mxu0
      %v2222 = vpop.f32.mrb[0].mxu0
      %2223 = vdwg.mxu0
      %v2224 = vsel %vm844, %v2173, -inf
      %2225 = vmax.xlane.f32.xlu0 %v2224
      %v2226 = vpop.xlane.xlu0 %2225
      %v2227 = vsel %vm844, %v2219, -inf
      %2228 = vmax.xlane.f32.xlu0 %v2227
      %v2229 = vpop.xlane.xlu0 %2228
      %v2230 = vsub.f32 %v2173, %v2226
      %v2231 = vsub.f32 %v2219, %v2229
      %v2232 = vmul.f32 %v2230, 1.442695
      %v2233 = vpow.pop %v2232
      %v2234 = vmul.f32 %v2231, 1.442695
      %v2235 = vpow.pop %v2234
      %v2236 = vsel %vm844, %v2233, 0.0
      %2237 = vadd.xlane.f32.xlu0 %v2236
      %v2238 = vpop.xlane.xlu0 %2237
      %v2239 = vsel %vm844, %v2235, 0.0
      %2240 = vadd.xlane.f32.xlu0 %v2239
      %v2241 = vpop.xlane.xlu0 %2240
      %v2242 = vrcp.pop %v2238
      %v2243 = vmul.f32 %v2233, %v2242
      %v2244 = vrcp.pop %v2241
      %v2245 = vmul.f32 %v2235, %v2244
      %v2246 = vpack.c.bf16 %v2243, %v2243
      %v2247 = vpack.c.bf16 %v2245, %v2245
      %v2249 = vsel %vm844, %v2246, 0
      %v2252 = vsel %vm570, %v2130, 0
      %2254 = vmatprep.subr.bf16.mxu0 0
      %2255 = vmatpush1.bf16.msra.mxu0 %v2252
      %2256 = vmatprep.subr.bf16.mxu0 0
      %2257 = vmatpush1.bf16.msra.mxu0 0
      %2258 = vmatprep.subr.bf16.mxu0 0
      %2259 = vmatpush1.bf16.msra.mxu0 0
      %2260 = vmatprep.subr.bf16.mxu0 0
      %2261 = vmatpush1.bf16.msra.mxu0 0
      %2262 = vmatprep.subr.bf16.mxu0 0
      %2263 = vmatpush1.bf16.msra.mxu0 0
      %2264 = vmatprep.subr.bf16.mxu0 0
      %2265 = vmatpush1.bf16.msra.mxu0 0
      %2266 = vmatprep.subr.bf16.mxu0 0
      %2267 = vmatpush1.bf16.msra.mxu0 0
      %2268 = vmatprep.subr.bf16.mxu0 0
      %2269 = vmatpush1.bf16.msra.mxu0 0
      %2270 = vmatprep.subr.bf16.mxu0 0
      %2271 = vmatpush1.bf16.msra.mxu0 0
      %2272 = vmatprep.subr.bf16.mxu0 0
      %2273 = vmatpush1.bf16.msra.mxu0 0
      %2274 = vmatprep.subr.bf16.mxu0 0
      %2275 = vmatpush1.bf16.msra.mxu0 0
      %2276 = vmatprep.subr.bf16.mxu0 0
      %2277 = vmatpush1.bf16.msra.mxu0 0
      %2278 = vmatprep.subr.bf16.mxu0 0
      %2279 = vmatpush1.bf16.msra.mxu0 0
      %2280 = vmatprep.subr.bf16.mxu0 0
      %2281 = vmatpush1.bf16.msra.mxu0 0
      %2282 = vmatprep.subr.bf16.mxu0 0
      %2283 = vmatpush1.bf16.msra.mxu0 0
      %2284 = vmatprep.subr.bf16.mxu0 0
      %2285 = vmatpush1.bf16.msra.mxu0 0
      %2286 = vmatprep.mubr.bf16.mxu0 0
      %2287 = vmatmul.mubr.bf16.gmra.mrb[0].mxu0 %v2249
      %v2288 = vpop.f32.mrb[0].mxu0
      %v2289 = vadd.f32 0.0, %v2288
      %v2290 = vpop.f32.mrb[0].mxu0
      %v2291 = vpop.f32.mrb[0].mxu0
      %v2292 = vpop.f32.mrb[0].mxu0
      %2293 = vdwg.mxu0
      %v2295 = vsel %vm844, %v2247, 0
      %v2298 = vsel %vm570, %v2131, 0
      %2300 = vmatprep.subr.bf16.mxu0 0
      %2301 = vmatpush1.bf16.msra.mxu0 %v2298
      %2302 = vmatprep.subr.bf16.mxu0 0
      %2303 = vmatpush1.bf16.msra.mxu0 0
      %2304 = vmatprep.subr.bf16.mxu0 0
      %2305 = vmatpush1.bf16.msra.mxu0 0
      %2306 = vmatprep.subr.bf16.mxu0 0
      %2307 = vmatpush1.bf16.msra.mxu0 0
      %2308 = vmatprep.subr.bf16.mxu0 0
      %2309 = vmatpush1.bf16.msra.mxu0 0
      %2310 = vmatprep.subr.bf16.mxu0 0
      %2311 = vmatpush1.bf16.msra.mxu0 0
      %2312 = vmatprep.subr.bf16.mxu0 0
      %2313 = vmatpush1.bf16.msra.mxu0 0
      %2314 = vmatprep.subr.bf16.mxu0 0
      %2315 = vmatpush1.bf16.msra.mxu0 0
      %2316 = vmatprep.subr.bf16.mxu0 0
      %2317 = vmatpush1.bf16.msra.mxu0 0
      %2318 = vmatprep.subr.bf16.mxu0 0
      %2319 = vmatpush1.bf16.msra.mxu0 0
      %2320 = vmatprep.subr.bf16.mxu0 0
      %2321 = vmatpush1.bf16.msra.mxu0 0
      %2322 = vmatprep.subr.bf16.mxu0 0
      %2323 = vmatpush1.bf16.msra.mxu0 0
      %2324 = vmatprep.subr.bf16.mxu0 0
      %2325 = vmatpush1.bf16.msra.mxu0 0
      %2326 = vmatprep.subr.bf16.mxu0 0
      %2327 = vmatpush1.bf16.msra.mxu0 0
      %2328 = vmatprep.subr.bf16.mxu0 0
      %2329 = vmatpush1.bf16.msra.mxu0 0
      %2330 = vmatprep.subr.bf16.mxu0 0
      %2331 = vmatpush1.bf16.msra.mxu0 0
      %2332 = vmatprep.mubr.bf16.mxu0 0
      %2333 = vmatmul.mubr.bf16.gmra.mrb[0].mxu0 %v2295
      %v2334 = vpop.f32.mrb[0].mxu0
      %v2335 = vadd.f32 0.0, %v2334
      %v2336 = vpop.f32.mrb[0].mxu0
      %v2337 = vpop.f32.mrb[0].mxu0
      %v2338 = vpop.f32.mrb[0].mxu0
      %2339 = vdwg.mxu0
      %v2340 = vpack.c.bf16 %v2335, %v2289
      %s2341 = scalar_lea.vmem %s506, 12
      %v2342 = vld [vmem:[%s2341] sm:$0x7]
      %v2344 = vsel %vm751, %v2340, 0
      %v2347 = vsel %vm1378, %v2342, 0
      %2349 = vmatprep.subr.bf16.mxu0 0
      %2350 = vmatpush1.bf16.msra.mxu0 %v2347
      %2351 = vmatprep.subr.bf16.mxu0 0
      %2352 = vmatpush1.bf16.msra.mxu0 0
      %2353 = vmatprep.subr.bf16.mxu0 0
      %2354 = vmatpush1.bf16.msra.mxu0 0
      %2355 = vmatprep.subr.bf16.mxu0 0
      %2356 = vmatpush1.bf16.msra.mxu0 0
      %2357 = vmatprep.subr.bf16.mxu0 0
      %2358 = vmatpush1.bf16.msra.mxu0 0
      %2359 = vmatprep.subr.bf16.mxu0 0
      %2360 = vmatpush1.bf16.msra.mxu0 0
      %2361 = vmatprep.subr.bf16.mxu0 0
      %2362 = vmatpush1.bf16.msra.mxu0 0
      %2363 = vmatprep.subr.bf16.mxu0 0
      %2364 = vmatpush1.bf16.msra.mxu0 0
      %2365 = vmatprep.subr.bf16.mxu0 0
      %2366 = vmatpush1.bf16.msra.mxu0 0
      %2367 = vmatprep.subr.bf16.mxu0 0
      %2368 = vmatpush1.bf16.msra.mxu0 0
      %2369 = vmatprep.subr.bf16.mxu0 0
      %2370 = vmatpush1.bf16.msra.mxu0 0
      %2371 = vmatprep.subr.bf16.mxu0 0
      %2372 = vmatpush1.bf16.msra.mxu0 0
      %2373 = vmatprep.subr.bf16.mxu0 0
      %2374 = vmatpush1.bf16.msra.mxu0 0
      %2375 = vmatprep.subr.bf16.mxu0 0
      %2376 = vmatpush1.bf16.msra.mxu0 0
      %2377 = vmatprep.subr.bf16.mxu0 0
      %2378 = vmatpush1.bf16.msra.mxu0 0
      %2379 = vmatprep.subr.bf16.mxu0 0
      %2380 = vmatpush1.bf16.msra.mxu0 0
      %2381 = vmatprep.mubr.bf16.mxu0 0
      %2382 = vmatmul.mubr.bf16.gmra.mrb[0].mxu0 %v2344
      %v2383 = vpop.f32.mrb[0].mxu0
      %v2384 = vadd.f32 0.0, %v2383
      %v2385 = vpop.f32.mrb[0].mxu0
      %v2386 = vpop.f32.mrb[0].mxu0
      %v2387 = vadd.f32 0.0, %v2386
      %v2388 = vpop.f32.mrb[0].mxu0
      %2389 = vdwg.mxu0
      %v2390 = vadd.f32 %v1929, %v2384
      %v2391 = vadd.f32 %v1930, %v2387
      %v2392 = vlaneseq
      %v2393 = vshrl.u32 %v2392, 7
      %v2394 = vsub.s32 0, %v2393
      %v2395 = vrot.slane %v546, %v2394
      %v2396 = vadd.f32 %v2390, %v2395
      %v2397 = vadd.f32 %v2391, %v2395
      %v2398 = vadd.f32 %v543, %v2396
      %v2399 = vadd.f32 %v544, %v2397
      %v2400 = vsel %vm566, %v2398, 0.0
      %2401 = vadd.xlane.f32.xlu0 %v2400
      %v2402 = vpop.xlane.xlu0 %2401
      %v2403 = vsel %vm566, %v2399, 0.0
      %2404 = vadd.xlane.f32.xlu0 %v2403
      %v2405 = vpop.xlane.xlu0 %2404
      %v2406 = vrcp.pop 24.0
      %v2407 = vmul.f32 %v2402, %v2406
      %v2408 = vmul.f32 %v2405, %v2406
      %v2409 = vsub.f32 %v2398, %v2407
      %v2410 = vsub.f32 %v2399, %v2408
      %v2411 = vmul.f32 %v2409, %v2409
      %v2412 = vmul.f32 %v2410, %v2410
      %v2413 = vsel %vm566, %v2411, 0.0
      %2414 = vadd.xlane.f32.xlu0 %v2413
      %v2415 = vpop.xlane.xlu0 %2414
      %v2416 = vsel %vm566, %v2412, 0.0
      %2417 = vadd.xlane.f32.xlu0 %v2416
      %v2418 = vpop.xlane.xlu0 %2417
      %v2419 = vmul.f32 %v2415, %v2406
      %v2420 = vmul.f32 %v2418, %v2406
      %v2421 = vadd.f32 %v2419, 1e-05
      %v2422 = vadd.f32 %v2420, 1e-05
      %v2423 = vrsqrt.pop %v2421
      %v2424 = vrsqrt.pop %v2422
      %v2425 = vmul.f32 %v2409, %v2423
      %v2426 = vmul.f32 %v2410, %v2424
      %v2427 = vlaneseq
      %v2428 = vshrl.u32 %v2427, 7
      %v2429 = vsub.s32 1, %v2428
      %v2430 = vrot.slane %v546, %v2429
      %v2431 = vmul.f32 %v2425, %v2430
      %v2432 = vmul.f32 %v2426, %v2430
      %v2433 = vlaneseq
      %v2434 = vshrl.u32 %v2433, 7
      %v2435 = vsub.s32 2, %v2434
      %v2436 = vrot.slane %v546, %v2435
      %v2437 = vadd.f32 %v2431, %v2436
      %v2438 = vadd.f32 %v2432, %v2436
      %v2439 = vpack.c.bf16 %v2438, %v2437
      %v2440 = vld [vmem:[%s515] sm:$0xf]
      %v2441 = vld [vmem:[%s515 + $0x4] sm:$0xf]
      %v2442 = vld [vmem:[%s515 + $0x8] sm:$0xf]
      %v2443 = vld [vmem:[%s518] sm:$0x1]
      %v2445 = vlaneseq
      %v2446 = vshrl.u32 %v2445, 7
      %v2447 = vsub.s32 0, %v2446
      %v2448 = vrot.slane %v2443, %v2447
      %v2453 = vunpack.c.l.b16 %v2440
      %v2454 = vunpack.c.l.b16 %v2441
      %v2455 = vunpack.c.l.b16 %v2442
      %v2456 = vpack.c.b16 %v2454, %v2453
      %v2457 = vpack.c.b16 %v2455, %v2455
      %v2460 = vsel %vm566, %v2439, 0
      %v2463 = vsel %vm570, %v2457, 0
      %2465 = vmatprep.subr.bf16.mxu0 0
      %2466 = vmatpush1.bf16.msra.mxu0 %v2456
      %2467 = vmatprep.subr.bf16.mxu0 0
      %2468 = vmatpush1.bf16.msra.mxu0 %v2463
      %2469 = vmatprep.subr.bf16.mxu0 0
      %2470 = vmatpush1.bf16.msra.mxu0 0
      %2471 = vmatprep.subr.bf16.mxu0 0
      %2472 = vmatpush1.bf16.msra.mxu0 0
      %2473 = vmatprep.subr.bf16.mxu0 0
      %2474 = vmatpush1.bf16.msra.mxu0 0
      %2475 = vmatprep.subr.bf16.mxu0 0
      %2476 = vmatpush1.bf16.msra.mxu0 0
      %2477 = vmatprep.subr.bf16.mxu0 0
      %2478 = vmatpush1.bf16.msra.mxu0 0
      %2479 = vmatprep.subr.bf16.mxu0 0
      %2480 = vmatpush1.bf16.msra.mxu0 0
      %2481 = vmatprep.subr.bf16.mxu0 0
      %2482 = vmatpush1.bf16.msra.mxu0 0
      %2483 = vmatprep.subr.bf16.mxu0 0
      %2484 = vmatpush1.bf16.msra.mxu0 0
      %2485 = vmatprep.subr.bf16.mxu0 0
      %2486 = vmatpush1.bf16.msra.mxu0 0
      %2487 = vmatprep.subr.bf16.mxu0 0
      %2488 = vmatpush1.bf16.msra.mxu0 0
      %2489 = vmatprep.subr.bf16.mxu0 0
      %2490 = vmatpush1.bf16.msra.mxu0 0
      %2491 = vmatprep.subr.bf16.mxu0 0
      %2492 = vmatpush1.bf16.msra.mxu0 0
      %2493 = vmatprep.subr.bf16.mxu0 0
      %2494 = vmatpush1.bf16.msra.mxu0 0
      %2495 = vmatprep.subr.bf16.mxu0 0
      %2496 = vmatpush1.bf16.msra.mxu0 0
      %2497 = vmatprep.mubr.bf16.mxu0 0
      %2498 = vmatmul.mubr.bf16.gmra.mrb[0].mxu0 %v2460
      %v2499 = vpop.f32.mrb[0].mxu0
      %v2500 = vadd.f32 %v2448, %v2499
      %v2501 = vpop.f32.mrb[0].mxu0
      %v2502 = vpop.f32.mrb[0].mxu0
      %v2503 = vadd.f32 %v2448, %v2502
      %v2504 = vpop.f32.mrb[0].mxu0
      %2505 = vdwg.mxu0
      %v2506 = vmax.f32 %v2500, 0.0
      %v2507 = vmax.f32 %v2503, 0.0
      %v2508 = vpack.c.bf16 %v2507, %v2506
      %v2509 = vld [vmem:[%s523] sm:$0xf]
      %v2510 = vld [vmem:[%s523 + $0x4] sm:$0xf]
      %v2511 = vld [vmem:[%s523 + $0x8] sm:$0xf]
      %v2512 = vld [vmem:[%s523 + $0xc] sm:$0xf]
      %v2513 = vld [vmem:[%s523 + $0x10] sm:$0xf]
      %v2514 = vld [vmem:[%s523 + $0x14] sm:$0xf]
      %v2515 = vlaneseq
      %v2516 = vshrl.u32 %v2515, 7
      %v2517 = vsub.s32 3, %v2516
      %v2518 = vrot.slane %v546, %v2517
      %v2525 = vunpack.c.l.b16 %v2509
      %v2526 = vunpack.c.l.b16 %v2510
      %v2527 = vunpack.c.l.b16 %v2511
      %v2528 = vunpack.c.l.b16 %v2512
      %v2529 = vunpack.c.l.b16 %v2513
      %v2530 = vunpack.c.l.b16 %v2514
      %v2531 = vpack.c.b16 %v2526, %v2525
      %v2532 = vpack.c.b16 %v2528, %v2527
      %v2533 = vpack.c.b16 %v2530, %v2529
      %vm2537 = vcmask 392192
      %v2539 = vsel %vm2537, %v2508, 0
      %2541 = vmatprep.subr.bf16.mxu0 0
      %2542 = vmatpush1.bf16.msra.mxu0 %v2531
      %2543 = vmatprep.subr.bf16.mxu0 0
      %2544 = vmatpush1.bf16.msra.mxu0 %v2532
      %2545 = vmatprep.subr.bf16.mxu0 0
      %2546 = vmatpush1.bf16.msra.mxu0 %v2533
      %2547 = vmatprep.subr.bf16.mxu0 0
      %2548 = vmatpush1.bf16.msra.mxu0 0
      %2549 = vmatprep.subr.bf16.mxu0 0
      %2550 = vmatpush1.bf16.msra.mxu0 0
      %2551 = vmatprep.subr.bf16.mxu0 0
      %2552 = vmatpush1.bf16.msra.mxu0 0
      %2553 = vmatprep.subr.bf16.mxu0 0
      %2554 = vmatpush1.bf16.msra.mxu0 0
      %2555 = vmatprep.subr.bf16.mxu0 0
      %2556 = vmatpush1.bf16.msra.mxu0 0
      %2557 = vmatprep.subr.bf16.mxu0 0
      %2558 = vmatpush1.bf16.msra.mxu0 0
      %2559 = vmatprep.subr.bf16.mxu0 0
      %2560 = vmatpush1.bf16.msra.mxu0 0
      %2561 = vmatprep.subr.bf16.mxu0 0
      %2562 = vmatpush1.bf16.msra.mxu0 0
      %2563 = vmatprep.subr.bf16.mxu0 0
      %2564 = vmatpush1.bf16.msra.mxu0 0
      %2565 = vmatprep.subr.bf16.mxu0 0
      %2566 = vmatpush1.bf16.msra.mxu0 0
      %2567 = vmatprep.subr.bf16.mxu0 0
      %2568 = vmatpush1.bf16.msra.mxu0 0
      %2569 = vmatprep.subr.bf16.mxu0 0
      %2570 = vmatpush1.bf16.msra.mxu0 0
      %2571 = vmatprep.subr.bf16.mxu0 0
      %2572 = vmatpush1.bf16.msra.mxu0 0
      %2573 = vmatprep.mubr.bf16.mxu0 0
      %2574 = vmatmul.mubr.bf16.gmra.mrb[0].mxu0 %v2539
      %v2575 = vpop.f32.mrb[0].mxu0
      %v2576 = vadd.f32 %v2518, %v2575
      %v2577 = vpop.f32.mrb[0].mxu0
      %v2578 = vpop.f32.mrb[0].mxu0
      %v2579 = vadd.f32 %v2518, %v2578
      %v2580 = vpop.f32.mrb[0].mxu0
      %2581 = vdwg.mxu0
      %v2582 = vadd.f32 %v2437, %v2576
      %v2583 = vadd.f32 %v2438, %v2579
      %v2584 = vsel %vm566, %v2582, 0.0
      %2585 = vadd.xlane.f32.xlu0 %v2584
      %v2586 = vpop.xlane.xlu0 %2585
      %v2587 = vsel %vm566, %v2583, 0.0
      %2588 = vadd.xlane.f32.xlu0 %v2587
      %v2589 = vpop.xlane.xlu0 %2588
      %v2590 = vmul.f32 %v2586, %v2406
      %v2591 = vmul.f32 %v2589, %v2406
      %v2592 = vsub.f32 %v2582, %v2590
      %v2593 = vsub.f32 %v2583, %v2591
      %v2594 = vmul.f32 %v2592, %v2592
      %v2595 = vmul.f32 %v2593, %v2593
      %v2596 = vsel %vm566, %v2594, 0.0
      %2597 = vadd.xlane.f32.xlu0 %v2596
      %v2598 = vpop.xlane.xlu0 %2597
      %v2599 = vsel %vm566, %v2595, 0.0
      %2600 = vadd.xlane.f32.xlu0 %v2599
      %v2601 = vpop.xlane.xlu0 %2600
      %v2602 = vmul.f32 %v2598, %v2406
      %v2603 = vmul.f32 %v2601, %v2406
      %v2604 = vadd.f32 %v2602, 1e-05
      %v2605 = vadd.f32 %v2603, 1e-05
      %v2606 = vrsqrt.pop %v2604
      %v2607 = vrsqrt.pop %v2605
      %v2608 = vmul.f32 %v2592, %v2606
      %v2609 = vmul.f32 %v2593, %v2607
      %v2610 = vlaneseq
      %v2611 = vshrl.u32 %v2610, 7
      %v2612 = vsub.s32 4, %v2611
      %v2613 = vrot.slane %v546, %v2612
      %v2614 = vmul.f32 %v2608, %v2613
      %v2615 = vmul.f32 %v2609, %v2613
      %v2616 = vlaneseq
      %v2617 = vshrl.u32 %v2616, 7
      %v2618 = vsub.s32 5, %v2617
      %v2619 = vrot.slane %v546, %v2618
      %v2620 = vadd.f32 %v2614, %v2619
      %v2621 = vadd.f32 %v2615, %v2619
      %2622 = vst.msk [vmem:[#allocation2] sm:$0xff] %vm566, %v2620
      %2623 = vst.msk [vmem:[#allocation2 + $0x8] sm:$0xff] %vm566, %v2621
      %p2624 = scmp.eq.s32.totalorder %s27, 1
      // Predicated region
      $region69: #{pretrained_transformerxl_block_forward.1} parent=63 // pred_check
        %p2625 = pneg %p2624
      $region70: #{pretrained_transformerxl_block_forward.1} parent=63 // pred_check_branch
        %2627 = sbr.rel (%p2625) target = $region72
      $region71: #{pretrained_transformerxl_block_forward.1} parent=63 // pred_region
        %v2628 = vpack.c.bf16 %v2620, %v2620
        %v2629 = vpack.c.bf16 %v2621, %v2621
        %v2630 = vld [vmem:[%s9] sm:$0x7]
        %v2631 = vld [vmem:[%s10] sm:$0x1f]
        %2633 = vset.pattern.permute.xlu0 0
        %2634 = vperm.xlu0 %2633, %v2631
        %v2635 = vpop.permute.xlu0 %2634
        %v2638 = vsel %vm566, %v2630, 0
        %v2641 = vsel %vm566, %v2628, 0
        %2643 = vmatprep.subr.bf16.mxu0 0
        %2644 = vmatpush1.bf16.xpose.msra.mxu0 %v2641
        %2645 = vmatprep.subr.bf16.mxu0 0
        %2646 = vmatpush1.bf16.xpose.msra.mxu0 0
        %2647 = vmatprep.subr.bf16.mxu0 0
        %2648 = vmatpush1.bf16.xpose.msra.mxu0 0
        %2649 = vmatprep.subr.bf16.mxu0 0
        %2650 = vmatpush1.bf16.xpose.msra.mxu0 0
        %2651 = vmatprep.subr.bf16.mxu0 0
        %2652 = vmatpush1.bf16.xpose.msra.mxu0 0
        %2653 = vmatprep.subr.bf16.mxu0 0
        %2654 = vmatpush1.bf16.xpose.msra.mxu0 0
        %2655 = vmatprep.subr.bf16.mxu0 0
        %2656 = vmatpush1.bf16.xpose.msra.mxu0 0
        %2657 = vmatprep.subr.bf16.mxu0 0
        %2658 = vmatpush1.bf16.xpose.msra.mxu0 0
        %2659 = vmatprep.subr.bf16.mxu0 0
        %2660 = vmatpush1.bf16.xpose.msra.mxu0 0
        %2661 = vmatprep.subr.bf16.mxu0 0
        %2662 = vmatpush1.bf16.xpose.msra.mxu0 0
        %2663 = vmatprep.subr.bf16.mxu0 0
        %2664 = vmatpush1.bf16.xpose.msra.mxu0 0
        %2665 = vmatprep.subr.bf16.mxu0 0
        %2666 = vmatpush1.bf16.xpose.msra.mxu0 0
        %2667 = vmatprep.subr.bf16.mxu0 0
        %2668 = vmatpush1.bf16.xpose.msra.mxu0 0
        %2669 = vmatprep.subr.bf16.mxu0 0
        %2670 = vmatpush1.bf16.xpose.msra.mxu0 0
        %2671 = vmatprep.subr.bf16.mxu0 0
        %2672 = vmatpush1.bf16.xpose.msra.mxu0 0
        %2673 = vmatprep.subr.bf16.mxu0 0
        %2674 = vmatpush1.bf16.xpose.msra.mxu0 0
        %2675 = vmatprep.mubr.bf16.mxu0 0
        %2676 = vmatmul.mubr.bf16.gmra.mrb[0].mxu0 %v2638
        %v2677 = vpop.f32.mrb[0].mxu0
        %v2678 = vadd.f32 %v2635, %v2677
        %v2679 = vpop.f32.mrb[0].mxu0
        %v2680 = vpop.f32.mrb[0].mxu0
        %v2681 = vpop.f32.mrb[0].mxu0
        %2682 = vdwg.mxu0
        %vm2683 = vcmask 61440
        %2684 = vst.msk [vmem:[%s528] sm:$0x1f] %vm2683, %v2678
        %v2685 = vld [vmem:[%s9] sm:$0x7]
        %v2686 = vld [vmem:[%s10] sm:$0x1f]
        %2688 = vset.pattern.permute.xlu0 0
        %2689 = vperm.xlu0 %2688, %v2686
        %v2690 = vpop.permute.xlu0 %2689
        %v2693 = vsel %vm566, %v2685, 0
        %v2696 = vsel %vm566, %v2629, 0
        %2698 = vmatprep.subr.bf16.mxu0 0
        %2699 = vmatpush1.bf16.xpose.msra.mxu0 %v2696
        %2700 = vmatprep.subr.bf16.mxu0 0
        %2701 = vmatpush1.bf16.xpose.msra.mxu0 0
        %2702 = vmatprep.subr.bf16.mxu0 0
        %2703 = vmatpush1.bf16.xpose.msra.mxu0 0
        %2704 = vmatprep.subr.bf16.mxu0 0
        %2705 = vmatpush1.bf16.xpose.msra.mxu0 0
        %2706 = vmatprep.subr.bf16.mxu0 0
        %2707 = vmatpush1.bf16.xpose.msra.mxu0 0
        %2708 = vmatprep.subr.bf16.mxu0 0
        %2709 = vmatpush1.bf16.xpose.msra.mxu0 0
        %2710 = vmatprep.subr.bf16.mxu0 0
        %2711 = vmatpush1.bf16.xpose.msra.mxu0 0
        %2712 = vmatprep.subr.bf16.mxu0 0
        %2713 = vmatpush1.bf16.xpose.msra.mxu0 0
        %2714 = vmatprep.subr.bf16.mxu0 0
        %2715 = vmatpush1.bf16.xpose.msra.mxu0 0
        %2716 = vmatprep.subr.bf16.mxu0 0
        %2717 = vmatpush1.bf16.xpose.msra.mxu0 0
        %2718 = vmatprep.subr.bf16.mxu0 0
        %2719 = vmatpush1.bf16.xpose.msra.mxu0 0
        %2720 = vmatprep.subr.bf16.mxu0 0
        %2721 = vmatpush1.bf16.xpose.msra.mxu0 0
        %2722 = vmatprep.subr.bf16.mxu0 0
        %2723 = vmatpush1.bf16.xpose.msra.mxu0 0
        %2724 = vmatprep.subr.bf16.mxu0 0
        %2725 = vmatpush1.bf16.xpose.msra.mxu0 0
        %2726 = vmatprep.subr.bf16.mxu0 0
        %2727 = vmatpush1.bf16.xpose.msra.mxu0 0
        %2728 = vmatprep.subr.bf16.mxu0 0
        %2729 = vmatpush1.bf16.xpose.msra.mxu0 0
        %2730 = vmatprep.mubr.bf16.mxu0 0
        %2731 = vmatmul.mubr.bf16.gmra.mrb[0].mxu0 %v2693
        %v2732 = vpop.f32.mrb[0].mxu0
        %v2733 = vadd.f32 %v2690, %v2732
        %v2734 = vpop.f32.mrb[0].mxu0
        %v2735 = vpop.f32.mrb[0].mxu0
        %v2736 = vpop.f32.mrb[0].mxu0
        %2737 = vdwg.mxu0
        %s2738 = scalar_lea.vmem %s528, 8
        %2739 = vst.msk [vmem:[%s2738] sm:$0x1f] %vm2683, %v2733
      $region72: #{pretrained_transformerxl_block_forward.1} parent=63 // pred_fallthru
        _
      %s2740 = smul.u32 2, %s26
      %p2741 = scmp.lt.s32.totalorder %s2740, 3
      %s2742 = scalar_select %p2741, %s2740, 3
      %s2743 = smul.addr %s2742, 8
      %s2744 = scalar_lea.vmem %s11, %s2743
      // Predicated region
      $region73: #{pretrained_transformerxl_block_forward.1} parent=63 // pred_check
        %p2745 = pneg %p323
      $region74: #{pretrained_transformerxl_block_forward.1} parent=63 // pred_check_branch
        %2747 = sbr.rel (%p2745) target = $region76
      $region75: #{pretrained_transformerxl_block_forward.1} parent=63 // pred_region
        %s2748 = smul.u32 2, %s26
      $region76: #{pretrained_transformerxl_block_forward.1} parent=63 // pred_fallthru
        _
    $region64: #{pretrained_transformerxl_block_forward.1} parent=5 // pred_fallthru
      _
    %p2749 = scmp.le.s32.totalorder 2, %s17
    // Predicated region
    $region77: #{pretrained_transformerxl_block_forward.1} parent=5 // pred_check
      %p2750 = pneg %p2749
    $region78: #{pretrained_transformerxl_block_forward.1} parent=5 // pred_check_branch
      %2752 = sbr.rel (%p2750) target = $region80
    $region79: #{pretrained_transformerxl_block_forward.1} parent=5 // pred_region
      %s2753 = ssub.s32 %s17, 2
      // Predicated region
      $region81: #{pretrained_transformerxl_block_forward.1} parent=79 // pred_check
        %p2754 = pneg %p329
      $region82: #{pretrained_transformerxl_block_forward.1} parent=79 // pred_check_branch
        %2756 = sbr.rel (%p2754) target = $region84
      $region83: #{pretrained_transformerxl_block_forward.1} parent=79 // pred_region
        %s2757 = smul.u32 2, %s28
        %p2758 = scmp.lt.s32.totalorder %s2757, 3
        %s2759 = scalar_select %p2758, %s2757, 3
        %s2760 = smul.addr %s2759, 8
        %s2761 = scalar_lea.vmem %s11, %s2760
      $region84: #{pretrained_transformerxl_block_forward.1} parent=79 // pred_fallthru
        _
    $region80: #{pretrained_transformerxl_block_forward.1} parent=5 // pred_fallthru
      _
  $region6: #{pretrained_transformerxl_block_forward.1} parent=0 // loop_footer
    %s21 = sadd.s32 1, %s17
  $region7: #{pretrained_transformerxl_block_forward.1} parent=0 // loop_footer_branch
    %16 = sbr.rel target = $region3
  $region8: #{pretrained_transformerxl_block_forward.1} parent=0 // loop_exit
    _

</llo_original>
